<compile_context>
chip_gen: v7x
topology: tpu7x:2x2x1
jax: 0.10.0
libtpu: 0.0.40
codegen_flags: <defaults>
</compile_context>

<pallas_src>
import functools
import math

import jax
import jax.numpy as jnp
from jax.experimental import pallas as pl
from jax.experimental.pallas import tpu as pltpu

_VMEM = functools.partial(pl.BlockSpec, memory_space=pltpu.MemorySpace.VMEM)


# ------------------------------------------------------------------ kernel ---

def _sigmoid(x):
    return 1.0 / (1.0 + jnp.exp(-x))


def _layer_norm(v, g, b, eps=1e-5):
    # nn.LayerNorm semantics: biased variance, eps=1e-5, affine.
    mu = jnp.mean(v, axis=-1, keepdims=True)
    var = jnp.mean(jnp.square(v - mu), axis=-1, keepdims=True)
    return (v - mu) * jax.lax.rsqrt(var + eps) * g + b


def _lstm_attention_block_kernel(
        x_ref,                      # [N, D]      N = B*T
        wi_ref, bi_ref,             # [D, 8H], [1, 8H]   fwd||bwd W_ih^T, b_ih+b_hh
        whf_ref, whb_ref,           # [H, 4H] each        W_hh^T per direction
        pw_ref, pb_ref,             # [2H, D], [1, D]     lstm_projection
        ln1g_ref, ln1b_ref,         # [1, D] each
        wqkv_ref, bqkv_ref,         # [D, 3D], [1, 3D]    fused w_q|w_k|w_v
        wo_ref, bo_ref,             # [D, D], [1, D]
        ln2g_ref, ln2b_ref,         # [1, D] each
        w1_ref, b1_ref,             # [D, 4D], [1, 4D]
        w2_ref, b2_ref,             # [4D, D], [1, D]
        o_ref,                      # [N, D]
        lstm_sc,                    # VMEM scratch [B, T, 2H]
        *, B, T, D, H, nH):
    N = B * T
    dk = D // nH
    f32 = jnp.float32

    x2 = x_ref[...]                                                   # [N, D]

    # ---------------- BiLSTM: one lane-dense matmul for both directions' gates
    xg = jnp.dot(x2, wi_ref[...], preferred_element_type=f32) + bi_ref[...]
    xg3 = xg.reshape(B, T, 8 * H)                                     # [B, T, 8H]
    whf = whf_ref[...]
    whb = whb_ref[...]

    def cell(z, c):                 # PyTorch gate order: i, f, g, o
        i = _sigmoid(z[:, 0 * H:1 * H])
        f = _sigmoid(z[:, 1 * H:2 * H])
        g = jnp.tanh(z[:, 2 * H:3 * H])
        o = _sigmoid(z[:, 3 * H:4 * H])
        c_new = f * c + i * g
        return o * jnp.tanh(c_new), c_new

    hf = jnp.zeros((B, H), f32)
    cf = jnp.zeros((B, H), f32)
    hb = jnp.zeros((B, H), f32)
    cb = jnp.zeros((B, H), f32)
    # Serial recurrence (T static & small -> unrolled); fwd/bwd interleaved so
    # each step issues two independent dot+gate chains back to back.
    for t in range(T):
        tb = T - 1 - t
        zf = xg3[:, t, 0:4 * H] + jnp.dot(hf, whf, preferred_element_type=f32)
        zb = xg3[:, tb, 4 * H:8 * H] + jnp.dot(hb, whb, preferred_element_type=f32)
        hf, cf = cell(zf, cf)
        hb, cb = cell(zb, cb)
        lstm_sc[:, t:t + 1, 0:H] = hf[:, None, :]
        lstm_sc[:, tb:tb + 1, H:2 * H] = hb[:, None, :]

    lstm_out = lstm_sc[...].reshape(N, 2 * H)                         # [N, 2H]
    lstm_proj = (jnp.dot(lstm_out, pw_ref[...], preferred_element_type=f32)
                 + pb_ref[...])

    h1 = _layer_norm(x2 + lstm_proj, ln1g_ref[...], ln1b_ref[...])    # norm1

    # ---------------- Multi-head self-attention (fused QKV, no transposes)
    qkv = jnp.dot(h1, wqkv_ref[...], preferred_element_type=f32) + bqkv_ref[...]
    qkv3 = qkv.reshape(B, T, 3 * D)
    wo = wo_ref[...]
    scale = 1.0 / math.sqrt(dk)
    attn = jnp.zeros((N, D), f32)
    for hh in range(nH):
        q_h = qkv3[:, :, hh * dk:(hh + 1) * dk]
        k_h = qkv3[:, :, D + hh * dk:D + (hh + 1) * dk]
        v_h = qkv3[:, :, 2 * D + hh * dk:2 * D + (hh + 1) * dk]
        s = jnp.einsum('bqd,bkd->bqk', q_h, k_h,
                       preferred_element_type=f32) * scale            # [B, T, T]
        m = jnp.max(s, axis=-1, keepdims=True)
        p = jnp.exp(s - m)
        p = p * pl.reciprocal(jnp.sum(p, axis=-1, keepdims=True), approx=True)
        ctx_h = jnp.einsum('bqk,bkd->bqd', p, v_h,
                           preferred_element_type=f32)                # [B, T, dk]
        # Output projection per head-slice of w_o == concat(heads) @ w_o.
        attn = attn + jnp.dot(ctx_h.reshape(N, dk),
                              wo[hh * dk:(hh + 1) * dk, :],
                              preferred_element_type=f32)
    attn = attn + bo_ref[...]

    h2 = _layer_norm(h1 + attn, ln2g_ref[...], ln2b_ref[...])         # norm2

    # ---------------- Feed-forward (dropouts are identity at inference)
    ff = jnp.maximum(jnp.dot(h2, w1_ref[...], preferred_element_type=f32)
                     + b1_ref[...], 0.0)
    ff = jnp.dot(ff, w2_ref[...], preferred_element_type=f32) + b2_ref[...]

    o_ref[...] = h2 + ff                                              # residual


# ----------------------------------------------------------------- wrapper ---

def lstm_attention_block(params, x):
    """Fused Pallas forward of LSTMAttentionBlock (eval mode). x: [B, T, D]."""
    B, T, D = x.shape
    H = params['whf'].shape[0]
    nH = int(params['nH'])
    N = B * T
    dk = D // nH

    args = (x.reshape(N, D),
            params['wi'], params['bi'], params['whf'], params['whb'],
            params['pw'], params['pb'], params['ln1_g'], params['ln1_b'],
            params['wqkv'], params['bqkv'], params['wo'], params['bo'],
            params['ln2_g'], params['ln2_b'], params['w1'], params['b1'],
            params['w2'], params['b2'])

    flops = (2 * N * D * 8 * H              # fused LSTM input-gate projection
             + T * 2 * (2 * B * H * 4 * H)  # recurrent matmuls (both dirs)
             + 2 * N * 2 * H * D            # lstm projection
             + 2 * N * D * 3 * D            # fused QKV
             + nH * 4 * B * T * T * dk      # scores + context
             + 2 * N * D * D                # attention output projection
             + 2 * (2 * N * D * 4 * D))     # feed-forward
    transcendentals = 2 * T * 5 * B * H + nH * B * T * T + 4 * N
    bytes_accessed = sum(int(a.size) * 4 for a in args) + N * D * 4

    kernel = functools.partial(_lstm_attention_block_kernel,
                               B=B, T=T, D=D, H=H, nH=nH)
    out2 = pl.pallas_call(
        kernel,
        out_shape=jax.ShapeDtypeStruct((N, D), jnp.float32),
        in_specs=[_VMEM()] * len(args),
        out_specs=_VMEM(),
        scratch_shapes=[pltpu.VMEM((B, T, 2 * H), jnp.float32)],
        compiler_params=pltpu.CompilerParams(vmem_limit_bytes=32 * 1024 * 1024),
        cost_estimate=pl.CostEstimate(flops=flops,
                                      transcendentals=transcendentals,
                                      bytes_accessed=bytes_accessed),
    )(*args)
    return out2.reshape(B, T, D)


# ------------------------------------------------------------------ params ---

def _xavier(key, shape):
    fan_in, fan_out = shape
    lim = math.sqrt(6.0 / (fan_in + fan_out))
    return jax.random.uniform(key, shape, jnp.float32, -lim, lim)


def init_params(key, D, H, nH):
    """Deterministic synthetic parameters with the PyTorch module's shapes.
    LSTM biases b_ih + b_hh are folded into the input-gate bias (equivalent)."""
    ks = iter(jax.random.split(key, 16))

    def bias(n, scale=0.05):
        return jax.random.uniform(next(ks), (1, n), jnp.float32, -scale, scale)

    p = {'nH': nH}
    p['wi'] = _xavier(next(ks), (D, 8 * H))      # [W_ih_fwd^T | W_ih_bwd^T]
    p['bi'] = bias(8 * H)
    p['whf'] = _xavier(next(ks), (H, 4 * H))
    p['whb'] = _xavier(next(ks), (H, 4 * H))
    p['pw'] = _xavier(next(ks), (2 * H, D))
    p['pb'] = bias(D)
    p['ln1_g'] = jnp.ones((1, D), jnp.float32)
    p['ln1_b'] = jnp.zeros((1, D), jnp.float32)
    p['wqkv'] = _xavier(next(ks), (D, 3 * D))    # [w_q^T | w_k^T | w_v^T]
    p['bqkv'] = bias(3 * D)
    p['wo'] = _xavier(next(ks), (D, D))
    p['bo'] = bias(D)
    p['ln2_g'] = jnp.ones((1, D), jnp.float32)
    p['ln2_b'] = jnp.zeros((1, D), jnp.float32)
    p['w1'] = _xavier(next(ks), (D, 4 * D))
    p['b1'] = bias(4 * D)
    p['w2'] = _xavier(next(ks), (4 * D, D))
    p['b2'] = bias(D)
    return p


# --------------------------------------------------------------- reference ---

def reference_forward(params, x):
    """Pure-JAX (XLA) replica of LSTMAttentionBlock.forward for validation."""
    B, T, D = x.shape
    H = params['whf'].shape[0]
    nH = int(params['nH'])
    dk = D // nH
    hi = jax.lax.Precision.HIGHEST

    x2 = x.reshape(B * T, D)
    xg = jnp.dot(x2, params['wi'], precision=hi) + params['bi']
    xg3 = xg.reshape(B, T, 8 * H)

    def cell(z, c):
        i = jax.nn.sigmoid(z[:, 0:H])
        f = jax.nn.sigmoid(z[:, H:2 * H])
        g = jnp.tanh(z[:, 2 * H:3 * H])
        o = jax.nn.sigmoid(z[:, 3 * H:4 * H])
        c = f * c + i * g
        return o * jnp.tanh(c), c

    hf = jnp.zeros((B, H), jnp.float32); cf = jnp.zeros((B, H), jnp.float32)
    hb = jnp.zeros((B, H), jnp.float32); cb = jnp.zeros((B, H), jnp.float32)
    fwd = [None] * T
    bwd = [None] * T
    for t in range(T):
        hf, cf = cell(xg3[:, t, :4 * H] + jnp.dot(hf, params['whf'], precision=hi), cf)
        fwd[t] = hf
    for t in range(T - 1, -1, -1):
        hb, cb = cell(xg3[:, t, 4 * H:] + jnp.dot(hb, params['whb'], precision=hi), cb)
        bwd[t] = hb
    lstm_out = jnp.stack([jnp.concatenate([fwd[t], bwd[t]], axis=-1)
                          for t in range(T)], axis=1).reshape(B * T, 2 * H)
    lstm_proj = jnp.dot(lstm_out, params['pw'], precision=hi) + params['pb']

    def ln(v, g, b):
        mu = v.mean(-1, keepdims=True)
        var = jnp.square(v - mu).mean(-1, keepdims=True)
        return (v - mu) / jnp.sqrt(var + 1e-5) * g + b

    h1 = ln(x2 + lstm_proj, params['ln1_g'], params['ln1_b'])
    qkv = jnp.dot(h1, params['wqkv'], precision=hi) + params['bqkv']
    q = qkv[:, 0 * D:1 * D].reshape(B, T, nH, dk).transpose(0, 2, 1, 3)
    k = qkv[:, 1 * D:2 * D].reshape(B, T, nH, dk).transpose(0, 2, 1, 3)
    v = qkv[:, 2 * D:3 * D].reshape(B, T, nH, dk).transpose(0, 2, 1, 3)
    s = jnp.einsum('bhqd,bhkd->bhqk', q, k, precision=hi) / math.sqrt(dk)
    a = jax.nn.softmax(s, axis=-1)
    ctx = jnp.einsum('bhqk,bhkd->bhqd', a, v, precision=hi)
    ctx = ctx.transpose(0, 2, 1, 3).reshape(B * T, D)
    attn_out = jnp.dot(ctx, params['wo'], precision=hi) + params['bo']
    h2 = ln(h1 + attn_out, params['ln2_g'], params['ln2_b'])
    ff = jnp.maximum(jnp.dot(h2, params['w1'], precision=hi) + params['b1'], 0.0)
    ff = jnp.dot(ff, params['w2'], precision=hi) + params['b2']
    return (h2 + ff).reshape(B, T, D)


# -------------------------------------------------------------------- main ---

if __name__ == "__main__":
    key = jax.random.PRNGKey(0)
    B, T, D, nH, H = 2, 8, 32, 4, 16      # batch, seq, d_model, heads, lstm_hidden

    k_x, k_p = jax.random.split(key)
    x = jax.random.normal(k_x, (B, T, D), jnp.float32)
    params = init_params(k_p, D=D, H=H, nH=nH)

    out = jax.block_until_ready(lstm_attention_block(params, x))
    assert out.shape == (B, T, D)
    assert bool(jnp.isfinite(out).all()), "non-finite output"

    ref = jax.block_until_ready(reference_forward(params, x))
    max_err = float(jnp.max(jnp.abs(out - ref)))
    assert max_err < 1e-1, f"numerical mismatch vs reference: {max_err}"

    print("KERNEL_OK")
</pallas_src>

<mosaic_0001>
module attributes {stable_mosaic.version = 11 : i64} {
  func.func @_lstm_attention_block_kernel(%arg0: memref<16x32xf32, #tpu.memory_space<vmem>>, %arg1: memref<32x128xf32, #tpu.memory_space<vmem>>, %arg2: memref<1x128xf32, #tpu.memory_space<vmem>>, %arg3: memref<16x64xf32, #tpu.memory_space<vmem>>, %arg4: memref<16x64xf32, #tpu.memory_space<vmem>>, %arg5: memref<32x32xf32, #tpu.memory_space<vmem>>, %arg6: memref<1x32xf32, #tpu.memory_space<vmem>>, %arg7: memref<1x32xf32, #tpu.memory_space<vmem>>, %arg8: memref<1x32xf32, #tpu.memory_space<vmem>>, %arg9: memref<32x96xf32, #tpu.memory_space<vmem>>, %arg10: memref<1x96xf32, #tpu.memory_space<vmem>>, %arg11: memref<32x32xf32, #tpu.memory_space<vmem>>, %arg12: memref<1x32xf32, #tpu.memory_space<vmem>>, %arg13: memref<1x32xf32, #tpu.memory_space<vmem>>, %arg14: memref<1x32xf32, #tpu.memory_space<vmem>>, %arg15: memref<32x128xf32, #tpu.memory_space<vmem>>, %arg16: memref<1x128xf32, #tpu.memory_space<vmem>>, %arg17: memref<128x32xf32, #tpu.memory_space<vmem>>, %arg18: memref<1x32xf32, #tpu.memory_space<vmem>>, %arg19: memref<16x32xf32, #tpu.memory_space<vmem>>, %arg20: memref<2x8x32xf32, #tpu.memory_space<vmem>>) attributes {dimension_semantics = [], scalar_prefetch = 0 : i64, scratch_operands = 1 : i64, tpu.core_type = #tpu.core_type<tc>} {
    %c0 = arith.constant 0 : index
    %c0_0 = arith.constant 0 : index
    %0 = vector.load %arg0[%c0, %c0_0] : memref<16x32xf32, #tpu.memory_space<vmem>>, vector<16x32xf32>
    %c0_1 = arith.constant 0 : index
    %c0_2 = arith.constant 0 : index
    %1 = vector.load %arg1[%c0_1, %c0_2] : memref<32x128xf32, #tpu.memory_space<vmem>>, vector<32x128xf32>
    %cst = arith.constant dense<0.000000e+00> : vector<16x128xf32>
    %2 = tpu.matmul %0, %1, %cst {dimension_numbers = #tpu.dot_dimension_numbers<[1], [0], [0], [1], [0, 0, 1, 1], [], []>} : vector<16x32xf32>, vector<32x128xf32>, vector<16x128xf32> -> vector<16x128xf32>
    %c0_3 = arith.constant 0 : index
    %c0_4 = arith.constant 0 : index
    %3 = vector.load %arg2[%c0_3, %c0_4] : memref<1x128xf32, #tpu.memory_space<vmem>>, vector<1x128xf32>
    %4 = vector.broadcast %3 : vector<1x128xf32> to vector<16x128xf32>
    %5 = arith.addf %2, %4 : vector<16x128xf32>
    %6 = vector.shape_cast %5 : vector<16x128xf32> to vector<2x8x128xf32>
    %c0_5 = arith.constant 0 : index
    %c0_6 = arith.constant 0 : index
    %7 = vector.load %arg3[%c0_5, %c0_6] : memref<16x64xf32, #tpu.memory_space<vmem>>, vector<16x64xf32>
    %c0_7 = arith.constant 0 : index
    %c0_8 = arith.constant 0 : index
    %8 = vector.load %arg4[%c0_7, %c0_8] : memref<16x64xf32, #tpu.memory_space<vmem>>, vector<16x64xf32>
    %cst_9 = arith.constant 0.000000e+00 : f32
    %9 = vector.broadcast %cst_9 : f32 to vector<2x16xf32>
    %cst_10 = arith.constant 0.000000e+00 : f32
    %10 = vector.broadcast %cst_10 : f32 to vector<2x16xf32>
    %cst_11 = arith.constant 0.000000e+00 : f32
    %11 = vector.broadcast %cst_11 : f32 to vector<2x16xf32>
    %cst_12 = arith.constant 0.000000e+00 : f32
    %12 = vector.broadcast %cst_12 : f32 to vector<2x16xf32>
    %13 = vector.extract_strided_slice %6 {offsets = [0, 0, 0], sizes = [2, 1, 64], strides = [1, 1, 1]} : vector<2x8x128xf32> to vector<2x1x64xf32>
    %14 = vector.shape_cast %13 : vector<2x1x64xf32> to vector<2x64xf32>
    %cst_13 = arith.constant dense<0.000000e+00> : vector<2x64xf32>
    %15 = tpu.matmul %9, %7, %cst_13 {dimension_numbers = #tpu.dot_dimension_numbers<[1], [0], [0], [1], [0, 0, 1, 1], [], []>} : vector<2x16xf32>, vector<16x64xf32>, vector<2x64xf32> -> vector<2x64xf32>
    %16 = arith.addf %14, %15 : vector<2x64xf32>
    %17 = vector.extract_strided_slice %6 {offsets = [0, 7, 64], sizes = [2, 1, 64], strides = [1, 1, 1]} : vector<2x8x128xf32> to vector<2x1x64xf32>
    %18 = vector.shape_cast %17 : vector<2x1x64xf32> to vector<2x64xf32>
    %cst_14 = arith.constant dense<0.000000e+00> : vector<2x64xf32>
    %19 = tpu.matmul %11, %8, %cst_14 {dimension_numbers = #tpu.dot_dimension_numbers<[1], [0], [0], [1], [0, 0, 1, 1], [], []>} : vector<2x16xf32>, vector<16x64xf32>, vector<2x64xf32> -> vector<2x64xf32>
    %20 = arith.addf %18, %19 : vector<2x64xf32>
    %21 = vector.extract_strided_slice %16 {offsets = [0, 0], sizes = [2, 16], strides = [1, 1]} : vector<2x64xf32> to vector<2x16xf32>
    %cst_15 = arith.constant 0.000000e+00 : f32
    %22 = vector.broadcast %cst_15 : f32 to vector<2x16xf32>
    %23 = arith.subf %22, %21 : vector<2x16xf32>
    %24 = math.exp %23 : vector<2x16xf32>
    %cst_16 = arith.constant 1.000000e+00 : f32
    %25 = vector.broadcast %cst_16 : f32 to vector<2x16xf32>
    %26 = arith.addf %25, %24 : vector<2x16xf32>
    %cst_17 = arith.constant 1.000000e+00 : f32
    %27 = vector.broadcast %cst_17 : f32 to vector<2x16xf32>
    %28 = arith.divf %27, %26 : vector<2x16xf32>
    %29 = vector.extract_strided_slice %16 {offsets = [0, 16], sizes = [2, 16], strides = [1, 1]} : vector<2x64xf32> to vector<2x16xf32>
    %cst_18 = arith.constant 0.000000e+00 : f32
    %30 = vector.broadcast %cst_18 : f32 to vector<2x16xf32>
    %31 = arith.subf %30, %29 : vector<2x16xf32>
    %32 = math.exp %31 : vector<2x16xf32>
    %cst_19 = arith.constant 1.000000e+00 : f32
    %33 = vector.broadcast %cst_19 : f32 to vector<2x16xf32>
    %34 = arith.addf %33, %32 : vector<2x16xf32>
    %cst_20 = arith.constant 1.000000e+00 : f32
    %35 = vector.broadcast %cst_20 : f32 to vector<2x16xf32>
    %36 = arith.divf %35, %34 : vector<2x16xf32>
    %37 = vector.extract_strided_slice %16 {offsets = [0, 32], sizes = [2, 16], strides = [1, 1]} : vector<2x64xf32> to vector<2x16xf32>
    %38 = math.tanh %37 : vector<2x16xf32>
    %39 = vector.extract_strided_slice %16 {offsets = [0, 48], sizes = [2, 16], strides = [1, 1]} : vector<2x64xf32> to vector<2x16xf32>
    %cst_21 = arith.constant 0.000000e+00 : f32
    %40 = vector.broadcast %cst_21 : f32 to vector<2x16xf32>
    %41 = arith.subf %40, %39 : vector<2x16xf32>
    %42 = math.exp %41 : vector<2x16xf32>
    %cst_22 = arith.constant 1.000000e+00 : f32
    %43 = vector.broadcast %cst_22 : f32 to vector<2x16xf32>
    %44 = arith.addf %43, %42 : vector<2x16xf32>
    %cst_23 = arith.constant 1.000000e+00 : f32
    %45 = vector.broadcast %cst_23 : f32 to vector<2x16xf32>
    %46 = arith.divf %45, %44 : vector<2x16xf32>
    %47 = arith.mulf %36, %10 : vector<2x16xf32>
    %48 = arith.mulf %28, %38 : vector<2x16xf32>
    %49 = arith.addf %47, %48 : vector<2x16xf32>
    %50 = math.tanh %49 : vector<2x16xf32>
    %51 = arith.mulf %46, %50 : vector<2x16xf32>
    %52 = vector.extract_strided_slice %20 {offsets = [0, 0], sizes = [2, 16], strides = [1, 1]} : vector<2x64xf32> to vector<2x16xf32>
    %cst_24 = arith.constant 0.000000e+00 : f32
    %53 = vector.broadcast %cst_24 : f32 to vector<2x16xf32>
    %54 = arith.subf %53, %52 : vector<2x16xf32>
    %55 = math.exp %54 : vector<2x16xf32>
    %cst_25 = arith.constant 1.000000e+00 : f32
    %56 = vector.broadcast %cst_25 : f32 to vector<2x16xf32>
    %57 = arith.addf %56, %55 : vector<2x16xf32>
    %cst_26 = arith.constant 1.000000e+00 : f32
    %58 = vector.broadcast %cst_26 : f32 to vector<2x16xf32>
    %59 = arith.divf %58, %57 : vector<2x16xf32>
    %60 = vector.extract_strided_slice %20 {offsets = [0, 16], sizes = [2, 16], strides = [1, 1]} : vector<2x64xf32> to vector<2x16xf32>
    %cst_27 = arith.constant 0.000000e+00 : f32
    %61 = vector.broadcast %cst_27 : f32 to vector<2x16xf32>
    %62 = arith.subf %61, %60 : vector<2x16xf32>
    %63 = math.exp %62 : vector<2x16xf32>
    %cst_28 = arith.constant 1.000000e+00 : f32
    %64 = vector.broadcast %cst_28 : f32 to vector<2x16xf32>
    %65 = arith.addf %64, %63 : vector<2x16xf32>
    %cst_29 = arith.constant 1.000000e+00 : f32
    %66 = vector.broadcast %cst_29 : f32 to vector<2x16xf32>
    %67 = arith.divf %66, %65 : vector<2x16xf32>
    %68 = vector.extract_strided_slice %20 {offsets = [0, 32], sizes = [2, 16], strides = [1, 1]} : vector<2x64xf32> to vector<2x16xf32>
    %69 = math.tanh %68 : vector<2x16xf32>
    %70 = vector.extract_strided_slice %20 {offsets = [0, 48], sizes = [2, 16], strides = [1, 1]} : vector<2x64xf32> to vector<2x16xf32>
    %cst_30 = arith.constant 0.000000e+00 : f32
    %71 = vector.broadcast %cst_30 : f32 to vector<2x16xf32>
    %72 = arith.subf %71, %70 : vector<2x16xf32>
    %73 = math.exp %72 : vector<2x16xf32>
    %cst_31 = arith.constant 1.000000e+00 : f32
    %74 = vector.broadcast %cst_31 : f32 to vector<2x16xf32>
    %75 = arith.addf %74, %73 : vector<2x16xf32>
    %cst_32 = arith.constant 1.000000e+00 : f32
    %76 = vector.broadcast %cst_32 : f32 to vector<2x16xf32>
    %77 = arith.divf %76, %75 : vector<2x16xf32>
    %78 = arith.mulf %67, %12 : vector<2x16xf32>
    %79 = arith.mulf %59, %69 : vector<2x16xf32>
    %80 = arith.addf %78, %79 : vector<2x16xf32>
    %81 = math.tanh %80 : vector<2x16xf32>
    %82 = arith.mulf %77, %81 : vector<2x16xf32>
    %83 = vector.shape_cast %51 : vector<2x16xf32> to vector<2x1x16xf32>
    %c0_33 = arith.constant 0 : index
    %c0_34 = arith.constant 0 : index
    %c0_35 = arith.constant 0 : index
    %84 = vector.load %arg20[%c0_33, %c0_34, %c0_35] : memref<2x8x32xf32, #tpu.memory_space<vmem>>, vector<2x1x16xf32>
    tpu.vector_store %arg20[%c0_33, %c0_34, %c0_35], %83 {strides = array<i32>} : memref<2x8x32xf32, #tpu.memory_space<vmem>>, vector<2x1x16xf32>,
    %85 = vector.shape_cast %82 : vector<2x16xf32> to vector<2x1x16xf32>
    %c0_36 = arith.constant 0 : index
    %c7 = arith.constant 7 : index
    %c16 = arith.constant 16 : index
    %86 = vector.load %arg20[%c0_36, %c7, %c16] : memref<2x8x32xf32, #tpu.memory_space<vmem>>, vector<2x1x16xf32>
    tpu.vector_store %arg20[%c0_36, %c7, %c16], %85 {strides = array<i32>} : memref<2x8x32xf32, #tpu.memory_space<vmem>>, vector<2x1x16xf32>,
    %87 = vector.extract_strided_slice %6 {offsets = [0, 1, 0], sizes = [2, 1, 64], strides = [1, 1, 1]} : vector<2x8x128xf32> to vector<2x1x64xf32>
    %88 = vector.shape_cast %87 : vector<2x1x64xf32> to vector<2x64xf32>
    %cst_37 = arith.constant dense<0.000000e+00> : vector<2x64xf32>
    %89 = tpu.matmul %51, %7, %cst_37 {dimension_numbers = #tpu.dot_dimension_numbers<[1], [0], [0], [1], [0, 0, 1, 1], [], []>} : vector<2x16xf32>, vector<16x64xf32>, vector<2x64xf32> -> vector<2x64xf32>
    %90 = arith.addf %88, %89 : vector<2x64xf32>
    %91 = vector.extract_strided_slice %6 {offsets = [0, 6, 64], sizes = [2, 1, 64], strides = [1, 1, 1]} : vector<2x8x128xf32> to vector<2x1x64xf32>
    %92 = vector.shape_cast %91 : vector<2x1x64xf32> to vector<2x64xf32>
    %cst_38 = arith.constant dense<0.000000e+00> : vector<2x64xf32>
    %93 = tpu.matmul %82, %8, %cst_38 {dimension_numbers = #tpu.dot_dimension_numbers<[1], [0], [0], [1], [0, 0, 1, 1], [], []>} : vector<2x16xf32>, vector<16x64xf32>, vector<2x64xf32> -> vector<2x64xf32>
    %94 = arith.addf %92, %93 : vector<2x64xf32>
    %95 = vector.extract_strided_slice %90 {offsets = [0, 0], sizes = [2, 16], strides = [1, 1]} : vector<2x64xf32> to vector<2x16xf32>
    %cst_39 = arith.constant 0.000000e+00 : f32
    %96 = vector.broadcast %cst_39 : f32 to vector<2x16xf32>
    %97 = arith.subf %96, %95 : vector<2x16xf32>
    %98 = math.exp %97 : vector<2x16xf32>
    %cst_40 = arith.constant 1.000000e+00 : f32
    %99 = vector.broadcast %cst_40 : f32 to vector<2x16xf32>
    %100 = arith.addf %99, %98 : vector<2x16xf32>
    %cst_41 = arith.constant 1.000000e+00 : f32
    %101 = vector.broadcast %cst_41 : f32 to vector<2x16xf32>
    %102 = arith.divf %101, %100 : vector<2x16xf32>
    %103 = vector.extract_strided_slice %90 {offsets = [0, 16], sizes = [2, 16], strides = [1, 1]} : vector<2x64xf32> to vector<2x16xf32>
    %cst_42 = arith.constant 0.000000e+00 : f32
    %104 = vector.broadcast %cst_42 : f32 to vector<2x16xf32>
    %105 = arith.subf %104, %103 : vector<2x16xf32>
    %106 = math.exp %105 : vector<2x16xf32>
    %cst_43 = arith.constant 1.000000e+00 : f32
    %107 = vector.broadcast %cst_43 : f32 to vector<2x16xf32>
    %108 = arith.addf %107, %106 : vector<2x16xf32>
    %cst_44 = arith.constant 1.000000e+00 : f32
    %109 = vector.broadcast %cst_44 : f32 to vector<2x16xf32>
    %110 = arith.divf %109, %108 : vector<2x16xf32>
    %111 = vector.extract_strided_slice %90 {offsets = [0, 32], sizes = [2, 16], strides = [1, 1]} : vector<2x64xf32> to vector<2x16xf32>
    %112 = math.tanh %111 : vector<2x16xf32>
    %113 = vector.extract_strided_slice %90 {offsets = [0, 48], sizes = [2, 16], strides = [1, 1]} : vector<2x64xf32> to vector<2x16xf32>
    %cst_45 = arith.constant 0.000000e+00 : f32
    %114 = vector.broadcast %cst_45 : f32 to vector<2x16xf32>
    %115 = arith.subf %114, %113 : vector<2x16xf32>
    %116 = math.exp %115 : vector<2x16xf32>
    %cst_46 = arith.constant 1.000000e+00 : f32
    %117 = vector.broadcast %cst_46 : f32 to vector<2x16xf32>
    %118 = arith.addf %117, %116 : vector<2x16xf32>
    %cst_47 = arith.constant 1.000000e+00 : f32
    %119 = vector.broadcast %cst_47 : f32 to vector<2x16xf32>
    %120 = arith.divf %119, %118 : vector<2x16xf32>
    %121 = arith.mulf %110, %49 : vector<2x16xf32>
    %122 = arith.mulf %102, %112 : vector<2x16xf32>
    %123 = arith.addf %121, %122 : vector<2x16xf32>
    %124 = math.tanh %123 : vector<2x16xf32>
    %125 = arith.mulf %120, %124 : vector<2x16xf32>
    %126 = vector.extract_strided_slice %94 {offsets = [0, 0], sizes = [2, 16], strides = [1, 1]} : vector<2x64xf32> to vector<2x16xf32>
    %cst_48 = arith.constant 0.000000e+00 : f32
    %127 = vector.broadcast %cst_48 : f32 to vector<2x16xf32>
    %128 = arith.subf %127, %126 : vector<2x16xf32>
    %129 = math.exp %128 : vector<2x16xf32>
    %cst_49 = arith.constant 1.000000e+00 : f32
    %130 = vector.broadcast %cst_49 : f32 to vector<2x16xf32>
    %131 = arith.addf %130, %129 : vector<2x16xf32>
    %cst_50 = arith.constant 1.000000e+00 : f32
    %132 = vector.broadcast %cst_50 : f32 to vector<2x16xf32>
    %133 = arith.divf %132, %131 : vector<2x16xf32>
    %134 = vector.extract_strided_slice %94 {offsets = [0, 16], sizes = [2, 16], strides = [1, 1]} : vector<2x64xf32> to vector<2x16xf32>
    %cst_51 = arith.constant 0.000000e+00 : f32
    %135 = vector.broadcast %cst_51 : f32 to vector<2x16xf32>
    %136 = arith.subf %135, %134 : vector<2x16xf32>
    %137 = math.exp %136 : vector<2x16xf32>
    %cst_52 = arith.constant 1.000000e+00 : f32
    %138 = vector.broadcast %cst_52 : f32 to vector<2x16xf32>
    %139 = arith.addf %138, %137 : vector<2x16xf32>
    %cst_53 = arith.constant 1.000000e+00 : f32
    %140 = vector.broadcast %cst_53 : f32 to vector<2x16xf32>
    %141 = arith.divf %140, %139 : vector<2x16xf32>
    %142 = vector.extract_strided_slice %94 {offsets = [0, 32], sizes = [2, 16], strides = [1, 1]} : vector<2x64xf32> to vector<2x16xf32>
    %143 = math.tanh %142 : vector<2x16xf32>
    %144 = vector.extract_strided_slice %94 {offsets = [0, 48], sizes = [2, 16], strides = [1, 1]} : vector<2x64xf32> to vector<2x16xf32>
    %cst_54 = arith.constant 0.000000e+00 : f32
    %145 = vector.broadcast %cst_54 : f32 to vector<2x16xf32>
    %146 = arith.subf %145, %144 : vector<2x16xf32>
    %147 = math.exp %146 : vector<2x16xf32>
    %cst_55 = arith.constant 1.000000e+00 : f32
    %148 = vector.broadcast %cst_55 : f32 to vector<2x16xf32>
    %149 = arith.addf %148, %147 : vector<2x16xf32>
    %cst_56 = arith.constant 1.000000e+00 : f32
    %150 = vector.broadcast %cst_56 : f32 to vector<2x16xf32>
    %151 = arith.divf %150, %149 : vector<2x16xf32>
    %152 = arith.mulf %141, %80 : vector<2x16xf32>
    %153 = arith.mulf %133, %143 : vector<2x16xf32>
    %154 = arith.addf %152, %153 : vector<2x16xf32>
    %155 = math.tanh %154 : vector<2x16xf32>
    %156 = arith.mulf %151, %155 : vector<2x16xf32>
    %157 = vector.shape_cast %125 : vector<2x16xf32> to vector<2x1x16xf32>
    %c0_57 = arith.constant 0 : index
    %c1 = arith.constant 1 : index
    %c0_58 = arith.constant 0 : index
    %158 = vector.load %arg20[%c0_57, %c1, %c0_58] : memref<2x8x32xf32, #tpu.memory_space<vmem>>, vector<2x1x16xf32>
    tpu.vector_store %arg20[%c0_57, %c1, %c0_58], %157 {strides = array<i32>} : memref<2x8x32xf32, #tpu.memory_space<vmem>>, vector<2x1x16xf32>,
    %159 = vector.shape_cast %156 : vector<2x16xf32> to vector<2x1x16xf32>
    %c0_59 = arith.constant 0 : index
    %c6 = arith.constant 6 : index
    %c16_60 = arith.constant 16 : index
    %160 = vector.load %arg20[%c0_59, %c6, %c16_60] : memref<2x8x32xf32, #tpu.memory_space<vmem>>, vector<2x1x16xf32>
    tpu.vector_store %arg20[%c0_59, %c6, %c16_60], %159 {strides = array<i32>} : memref<2x8x32xf32, #tpu.memory_space<vmem>>, vector<2x1x16xf32>,
    %161 = vector.extract_strided_slice %6 {offsets = [0, 2, 0], sizes = [2, 1, 64], strides = [1, 1, 1]} : vector<2x8x128xf32> to vector<2x1x64xf32>
    %162 = vector.shape_cast %161 : vector<2x1x64xf32> to vector<2x64xf32>
    %cst_61 = arith.constant dense<0.000000e+00> : vector<2x64xf32>
    %163 = tpu.matmul %125, %7, %cst_61 {dimension_numbers = #tpu.dot_dimension_numbers<[1], [0], [0], [1], [0, 0, 1, 1], [], []>} : vector<2x16xf32>, vector<16x64xf32>, vector<2x64xf32> -> vector<2x64xf32>
    %164 = arith.addf %162, %163 : vector<2x64xf32>
    %165 = vector.extract_strided_slice %6 {offsets = [0, 5, 64], sizes = [2, 1, 64], strides = [1, 1, 1]} : vector<2x8x128xf32> to vector<2x1x64xf32>
    %166 = vector.shape_cast %165 : vector<2x1x64xf32> to vector<2x64xf32>
    %cst_62 = arith.constant dense<0.000000e+00> : vector<2x64xf32>
    %167 = tpu.matmul %156, %8, %cst_62 {dimension_numbers = #tpu.dot_dimension_numbers<[1], [0], [0], [1], [0, 0, 1, 1], [], []>} : vector<2x16xf32>, vector<16x64xf32>, vector<2x64xf32> -> vector<2x64xf32>
    %168 = arith.addf %166, %167 : vector<2x64xf32>
    %169 = vector.extract_strided_slice %164 {offsets = [0, 0], sizes = [2, 16], strides = [1, 1]} : vector<2x64xf32> to vector<2x16xf32>
    %cst_63 = arith.constant 0.000000e+00 : f32
    %170 = vector.broadcast %cst_63 : f32 to vector<2x16xf32>
    %171 = arith.subf %170, %169 : vector<2x16xf32>
    %172 = math.exp %171 : vector<2x16xf32>
    %cst_64 = arith.constant 1.000000e+00 : f32
    %173 = vector.broadcast %cst_64 : f32 to vector<2x16xf32>
    %174 = arith.addf %173, %172 : vector<2x16xf32>
    %cst_65 = arith.constant 1.000000e+00 : f32
    %175 = vector.broadcast %cst_65 : f32 to vector<2x16xf32>
    %176 = arith.divf %175, %174 : vector<2x16xf32>
    %177 = vector.extract_strided_slice %164 {offsets = [0, 16], sizes = [2, 16], strides = [1, 1]} : vector<2x64xf32> to vector<2x16xf32>
    %cst_66 = arith.constant 0.000000e+00 : f32
    %178 = vector.broadcast %cst_66 : f32 to vector<2x16xf32>
    %179 = arith.subf %178, %177 : vector<2x16xf32>
    %180 = math.exp %179 : vector<2x16xf32>
    %cst_67 = arith.constant 1.000000e+00 : f32
    %181 = vector.broadcast %cst_67 : f32 to vector<2x16xf32>
    %182 = arith.addf %181, %180 : vector<2x16xf32>
    %cst_68 = arith.constant 1.000000e+00 : f32
    %183 = vector.broadcast %cst_68 : f32 to vector<2x16xf32>
    %184 = arith.divf %183, %182 : vector<2x16xf32>
    %185 = vector.extract_strided_slice %164 {offsets = [0, 32], sizes = [2, 16], strides = [1, 1]} : vector<2x64xf32> to vector<2x16xf32>
    %186 = math.tanh %185 : vector<2x16xf32>
    %187 = vector.extract_strided_slice %164 {offsets = [0, 48], sizes = [2, 16], strides = [1, 1]} : vector<2x64xf32> to vector<2x16xf32>
    %cst_69 = arith.constant 0.000000e+00 : f32
    %188 = vector.broadcast %cst_69 : f32 to vector<2x16xf32>
    %189 = arith.subf %188, %187 : vector<2x16xf32>
    %190 = math.exp %189 : vector<2x16xf32>
    %cst_70 = arith.constant 1.000000e+00 : f32
    %191 = vector.broadcast %cst_70 : f32 to vector<2x16xf32>
    %192 = arith.addf %191, %190 : vector<2x16xf32>
    %cst_71 = arith.constant 1.000000e+00 : f32
    %193 = vector.broadcast %cst_71 : f32 to vector<2x16xf32>
    %194 = arith.divf %193, %192 : vector<2x16xf32>
    %195 = arith.mulf %184, %123 : vector<2x16xf32>
    %196 = arith.mulf %176, %186 : vector<2x16xf32>
    %197 = arith.addf %195, %196 : vector<2x16xf32>
    %198 = math.tanh %197 : vector<2x16xf32>
    %199 = arith.mulf %194, %198 : vector<2x16xf32>
    %200 = vector.extract_strided_slice %168 {offsets = [0, 0], sizes = [2, 16], strides = [1, 1]} : vector<2x64xf32> to vector<2x16xf32>
    %cst_72 = arith.constant 0.000000e+00 : f32
    %201 = vector.broadcast %cst_72 : f32 to vector<2x16xf32>
    %202 = arith.subf %201, %200 : vector<2x16xf32>
    %203 = math.exp %202 : vector<2x16xf32>
    %cst_73 = arith.constant 1.000000e+00 : f32
    %204 = vector.broadcast %cst_73 : f32 to vector<2x16xf32>
    %205 = arith.addf %204, %203 : vector<2x16xf32>
    %cst_74 = arith.constant 1.000000e+00 : f32
    %206 = vector.broadcast %cst_74 : f32 to vector<2x16xf32>
    %207 = arith.divf %206, %205 : vector<2x16xf32>
    %208 = vector.extract_strided_slice %168 {offsets = [0, 16], sizes = [2, 16], strides = [1, 1]} : vector<2x64xf32> to vector<2x16xf32>
    %cst_75 = arith.constant 0.000000e+00 : f32
    %209 = vector.broadcast %cst_75 : f32 to vector<2x16xf32>
    %210 = arith.subf %209, %208 : vector<2x16xf32>
    %211 = math.exp %210 : vector<2x16xf32>
    %cst_76 = arith.constant 1.000000e+00 : f32
    %212 = vector.broadcast %cst_76 : f32 to vector<2x16xf32>
    %213 = arith.addf %212, %211 : vector<2x16xf32>
    %cst_77 = arith.constant 1.000000e+00 : f32
    %214 = vector.broadcast %cst_77 : f32 to vector<2x16xf32>
    %215 = arith.divf %214, %213 : vector<2x16xf32>
    %216 = vector.extract_strided_slice %168 {offsets = [0, 32], sizes = [2, 16], strides = [1, 1]} : vector<2x64xf32> to vector<2x16xf32>
    %217 = math.tanh %216 : vector<2x16xf32>
    %218 = vector.extract_strided_slice %168 {offsets = [0, 48], sizes = [2, 16], strides = [1, 1]} : vector<2x64xf32> to vector<2x16xf32>
    %cst_78 = arith.constant 0.000000e+00 : f32
    %219 = vector.broadcast %cst_78 : f32 to vector<2x16xf32>
    %220 = arith.subf %219, %218 : vector<2x16xf32>
    %221 = math.exp %220 : vector<2x16xf32>
    %cst_79 = arith.constant 1.000000e+00 : f32
    %222 = vector.broadcast %cst_79 : f32 to vector<2x16xf32>
    %223 = arith.addf %222, %221 : vector<2x16xf32>
    %cst_80 = arith.constant 1.000000e+00 : f32
    %224 = vector.broadcast %cst_80 : f32 to vector<2x16xf32>
    %225 = arith.divf %224, %223 : vector<2x16xf32>
    %226 = arith.mulf %215, %154 : vector<2x16xf32>
    %227 = arith.mulf %207, %217 : vector<2x16xf32>
    %228 = arith.addf %226, %227 : vector<2x16xf32>
    %229 = math.tanh %228 : vector<2x16xf32>
    %230 = arith.mulf %225, %229 : vector<2x16xf32>
    %231 = vector.shape_cast %199 : vector<2x16xf32> to vector<2x1x16xf32>
    %c0_81 = arith.constant 0 : index
    %c2 = arith.constant 2 : index
    %c0_82 = arith.constant 0 : index
    %232 = vector.load %arg20[%c0_81, %c2, %c0_82] : memref<2x8x32xf32, #tpu.memory_space<vmem>>, vector<2x1x16xf32>
    tpu.vector_store %arg20[%c0_81, %c2, %c0_82], %231 {strides = array<i32>} : memref<2x8x32xf32, #tpu.memory_space<vmem>>, vector<2x1x16xf32>,
    %233 = vector.shape_cast %230 : vector<2x16xf32> to vector<2x1x16xf32>
    %c0_83 = arith.constant 0 : index
    %c5 = arith.constant 5 : index
    %c16_84 = arith.constant 16 : index
    %234 = vector.load %arg20[%c0_83, %c5, %c16_84] : memref<2x8x32xf32, #tpu.memory_space<vmem>>, vector<2x1x16xf32>
    tpu.vector_store %arg20[%c0_83, %c5, %c16_84], %233 {strides = array<i32>} : memref<2x8x32xf32, #tpu.memory_space<vmem>>, vector<2x1x16xf32>,
    %235 = vector.extract_strided_slice %6 {offsets = [0, 3, 0], sizes = [2, 1, 64], strides = [1, 1, 1]} : vector<2x8x128xf32> to vector<2x1x64xf32>
    %236 = vector.shape_cast %235 : vector<2x1x64xf32> to vector<2x64xf32>
    %cst_85 = arith.constant dense<0.000000e+00> : vector<2x64xf32>
    %237 = tpu.matmul %199, %7, %cst_85 {dimension_numbers = #tpu.dot_dimension_numbers<[1], [0], [0], [1], [0, 0, 1, 1], [], []>} : vector<2x16xf32>, vector<16x64xf32>, vector<2x64xf32> -> vector<2x64xf32>
    %238 = arith.addf %236, %237 : vector<2x64xf32>
    %239 = vector.extract_strided_slice %6 {offsets = [0, 4, 64], sizes = [2, 1, 64], strides = [1, 1, 1]} : vector<2x8x128xf32> to vector<2x1x64xf32>
    %240 = vector.shape_cast %239 : vector<2x1x64xf32> to vector<2x64xf32>
    %cst_86 = arith.constant dense<0.000000e+00> : vector<2x64xf32>
    %241 = tpu.matmul %230, %8, %cst_86 {dimension_numbers = #tpu.dot_dimension_numbers<[1], [0], [0], [1], [0, 0, 1, 1], [], []>} : vector<2x16xf32>, vector<16x64xf32>, vector<2x64xf32> -> vector<2x64xf32>
    %242 = arith.addf %240, %241 : vector<2x64xf32>
    %243 = vector.extract_strided_slice %238 {offsets = [0, 0], sizes = [2, 16], strides = [1, 1]} : vector<2x64xf32> to vector<2x16xf32>
    %cst_87 = arith.constant 0.000000e+00 : f32
    %244 = vector.broadcast %cst_87 : f32 to vector<2x16xf32>
    %245 = arith.subf %244, %243 : vector<2x16xf32>
    %246 = math.exp %245 : vector<2x16xf32>
    %cst_88 = arith.constant 1.000000e+00 : f32
    %247 = vector.broadcast %cst_88 : f32 to vector<2x16xf32>
    %248 = arith.addf %247, %246 : vector<2x16xf32>
    %cst_89 = arith.constant 1.000000e+00 : f32
    %249 = vector.broadcast %cst_89 : f32 to vector<2x16xf32>
    %250 = arith.divf %249, %248 : vector<2x16xf32>
    %251 = vector.extract_strided_slice %238 {offsets = [0, 16], sizes = [2, 16], strides = [1, 1]} : vector<2x64xf32> to vector<2x16xf32>
    %cst_90 = arith.constant 0.000000e+00 : f32
    %252 = vector.broadcast %cst_90 : f32 to vector<2x16xf32>
    %253 = arith.subf %252, %251 : vector<2x16xf32>
    %254 = math.exp %253 : vector<2x16xf32>
    %cst_91 = arith.constant 1.000000e+00 : f32
    %255 = vector.broadcast %cst_91 : f32 to vector<2x16xf32>
    %256 = arith.addf %255, %254 : vector<2x16xf32>
    %cst_92 = arith.constant 1.000000e+00 : f32
    %257 = vector.broadcast %cst_92 : f32 to vector<2x16xf32>
    %258 = arith.divf %257, %256 : vector<2x16xf32>
    %259 = vector.extract_strided_slice %238 {offsets = [0, 32], sizes = [2, 16], strides = [1, 1]} : vector<2x64xf32> to vector<2x16xf32>
    %260 = math.tanh %259 : vector<2x16xf32>
    %261 = vector.extract_strided_slice %238 {offsets = [0, 48], sizes = [2, 16], strides = [1, 1]} : vector<2x64xf32> to vector<2x16xf32>
    %cst_93 = arith.constant 0.000000e+00 : f32
    %262 = vector.broadcast %cst_93 : f32 to vector<2x16xf32>
    %263 = arith.subf %262, %261 : vector<2x16xf32>
    %264 = math.exp %263 : vector<2x16xf32>
    %cst_94 = arith.constant 1.000000e+00 : f32
    %265 = vector.broadcast %cst_94 : f32 to vector<2x16xf32>
    %266 = arith.addf %265, %264 : vector<2x16xf32>
    %cst_95 = arith.constant 1.000000e+00 : f32
    %267 = vector.broadcast %cst_95 : f32 to vector<2x16xf32>
    %268 = arith.divf %267, %266 : vector<2x16xf32>
    %269 = arith.mulf %258, %197 : vector<2x16xf32>
    %270 = arith.mulf %250, %260 : vector<2x16xf32>
    %271 = arith.addf %269, %270 : vector<2x16xf32>
    %272 = math.tanh %271 : vector<2x16xf32>
    %273 = arith.mulf %268, %272 : vector<2x16xf32>
    %274 = vector.extract_strided_slice %242 {offsets = [0, 0], sizes = [2, 16], strides = [1, 1]} : vector<2x64xf32> to vector<2x16xf32>
    %cst_96 = arith.constant 0.000000e+00 : f32
    %275 = vector.broadcast %cst_96 : f32 to vector<2x16xf32>
    %276 = arith.subf %275, %274 : vector<2x16xf32>
    %277 = math.exp %276 : vector<2x16xf32>
    %cst_97 = arith.constant 1.000000e+00 : f32
    %278 = vector.broadcast %cst_97 : f32 to vector<2x16xf32>
    %279 = arith.addf %278, %277 : vector<2x16xf32>
    %cst_98 = arith.constant 1.000000e+00 : f32
    %280 = vector.broadcast %cst_98 : f32 to vector<2x16xf32>
    %281 = arith.divf %280, %279 : vector<2x16xf32>
    %282 = vector.extract_strided_slice %242 {offsets = [0, 16], sizes = [2, 16], strides = [1, 1]} : vector<2x64xf32> to vector<2x16xf32>
    %cst_99 = arith.constant 0.000000e+00 : f32
    %283 = vector.broadcast %cst_99 : f32 to vector<2x16xf32>
    %284 = arith.subf %283, %282 : vector<2x16xf32>
    %285 = math.exp %284 : vector<2x16xf32>
    %cst_100 = arith.constant 1.000000e+00 : f32
    %286 = vector.broadcast %cst_100 : f32 to vector<2x16xf32>
    %287 = arith.addf %286, %285 : vector<2x16xf32>
    %cst_101 = arith.constant 1.000000e+00 : f32
    %288 = vector.broadcast %cst_101 : f32 to vector<2x16xf32>
    %289 = arith.divf %288, %287 : vector<2x16xf32>
    %290 = vector.extract_strided_slice %242 {offsets = [0, 32], sizes = [2, 16], strides = [1, 1]} : vector<2x64xf32> to vector<2x16xf32>
    %291 = math.tanh %290 : vector<2x16xf32>
    %292 = vector.extract_strided_slice %242 {offsets = [0, 48], sizes = [2, 16], strides = [1, 1]} : vector<2x64xf32> to vector<2x16xf32>
    %cst_102 = arith.constant 0.000000e+00 : f32
    %293 = vector.broadcast %cst_102 : f32 to vector<2x16xf32>
    %294 = arith.subf %293, %292 : vector<2x16xf32>
    %295 = math.exp %294 : vector<2x16xf32>
    %cst_103 = arith.constant 1.000000e+00 : f32
    %296 = vector.broadcast %cst_103 : f32 to vector<2x16xf32>
    %297 = arith.addf %296, %295 : vector<2x16xf32>
    %cst_104 = arith.constant 1.000000e+00 : f32
    %298 = vector.broadcast %cst_104 : f32 to vector<2x16xf32>
    %299 = arith.divf %298, %297 : vector<2x16xf32>
    %300 = arith.mulf %289, %228 : vector<2x16xf32>
    %301 = arith.mulf %281, %291 : vector<2x16xf32>
    %302 = arith.addf %300, %301 : vector<2x16xf32>
    %303 = math.tanh %302 : vector<2x16xf32>
    %304 = arith.mulf %299, %303 : vector<2x16xf32>
    %305 = vector.shape_cast %273 : vector<2x16xf32> to vector<2x1x16xf32>
    %c0_105 = arith.constant 0 : index
    %c3 = arith.constant 3 : index
    %c0_106 = arith.constant 0 : index
    %306 = vector.load %arg20[%c0_105, %c3, %c0_106] : memref<2x8x32xf32, #tpu.memory_space<vmem>>, vector<2x1x16xf32>
    tpu.vector_store %arg20[%c0_105, %c3, %c0_106], %305 {strides = array<i32>} : memref<2x8x32xf32, #tpu.memory_space<vmem>>, vector<2x1x16xf32>,
    %307 = vector.shape_cast %304 : vector<2x16xf32> to vector<2x1x16xf32>
    %c0_107 = arith.constant 0 : index
    %c4 = arith.constant 4 : index
    %c16_108 = arith.constant 16 : index
    %308 = vector.load %arg20[%c0_107, %c4, %c16_108] : memref<2x8x32xf32, #tpu.memory_space<vmem>>, vector<2x1x16xf32>
    tpu.vector_store %arg20[%c0_107, %c4, %c16_108], %307 {strides = array<i32>} : memref<2x8x32xf32, #tpu.memory_space<vmem>>, vector<2x1x16xf32>,
    %309 = vector.extract_strided_slice %6 {offsets = [0, 4, 0], sizes = [2, 1, 64], strides = [1, 1, 1]} : vector<2x8x128xf32> to vector<2x1x64xf32>
    %310 = vector.shape_cast %309 : vector<2x1x64xf32> to vector<2x64xf32>
    %cst_109 = arith.constant dense<0.000000e+00> : vector<2x64xf32>
    %311 = tpu.matmul %273, %7, %cst_109 {dimension_numbers = #tpu.dot_dimension_numbers<[1], [0], [0], [1], [0, 0, 1, 1], [], []>} : vector<2x16xf32>, vector<16x64xf32>, vector<2x64xf32> -> vector<2x64xf32>
    %312 = arith.addf %310, %311 : vector<2x64xf32>
    %313 = vector.extract_strided_slice %6 {offsets = [0, 3, 64], sizes = [2, 1, 64], strides = [1, 1, 1]} : vector<2x8x128xf32> to vector<2x1x64xf32>
    %314 = vector.shape_cast %313 : vector<2x1x64xf32> to vector<2x64xf32>
    %cst_110 = arith.constant dense<0.000000e+00> : vector<2x64xf32>
    %315 = tpu.matmul %304, %8, %cst_110 {dimension_numbers = #tpu.dot_dimension_numbers<[1], [0], [0], [1], [0, 0, 1, 1], [], []>} : vector<2x16xf32>, vector<16x64xf32>, vector<2x64xf32> -> vector<2x64xf32>
    %316 = arith.addf %314, %315 : vector<2x64xf32>
    %317 = vector.extract_strided_slice %312 {offsets = [0, 0], sizes = [2, 16], strides = [1, 1]} : vector<2x64xf32> to vector<2x16xf32>
    %cst_111 = arith.constant 0.000000e+00 : f32
    %318 = vector.broadcast %cst_111 : f32 to vector<2x16xf32>
    %319 = arith.subf %318, %317 : vector<2x16xf32>
    %320 = math.exp %319 : vector<2x16xf32>
    %cst_112 = arith.constant 1.000000e+00 : f32
    %321 = vector.broadcast %cst_112 : f32 to vector<2x16xf32>
    %322 = arith.addf %321, %320 : vector<2x16xf32>
    %cst_113 = arith.constant 1.000000e+00 : f32
    %323 = vector.broadcast %cst_113 : f32 to vector<2x16xf32>
    %324 = arith.divf %323, %322 : vector<2x16xf32>
    %325 = vector.extract_strided_slice %312 {offsets = [0, 16], sizes = [2, 16], strides = [1, 1]} : vector<2x64xf32> to vector<2x16xf32>
    %cst_114 = arith.constant 0.000000e+00 : f32
    %326 = vector.broadcast %cst_114 : f32 to vector<2x16xf32>
    %327 = arith.subf %326, %325 : vector<2x16xf32>
    %328 = math.exp %327 : vector<2x16xf32>
    %cst_115 = arith.constant 1.000000e+00 : f32
    %329 = vector.broadcast %cst_115 : f32 to vector<2x16xf32>
    %330 = arith.addf %329, %328 : vector<2x16xf32>
    %cst_116 = arith.constant 1.000000e+00 : f32
    %331 = vector.broadcast %cst_116 : f32 to vector<2x16xf32>
    %332 = arith.divf %331, %330 : vector<2x16xf32>
    %333 = vector.extract_strided_slice %312 {offsets = [0, 32], sizes = [2, 16], strides = [1, 1]} : vector<2x64xf32> to vector<2x16xf32>
    %334 = math.tanh %333 : vector<2x16xf32>
    %335 = vector.extract_strided_slice %312 {offsets = [0, 48], sizes = [2, 16], strides = [1, 1]} : vector<2x64xf32> to vector<2x16xf32>
    %cst_117 = arith.constant 0.000000e+00 : f32
    %336 = vector.broadcast %cst_117 : f32 to vector<2x16xf32>
    %337 = arith.subf %336, %335 : vector<2x16xf32>
    %338 = math.exp %337 : vector<2x16xf32>
    %cst_118 = arith.constant 1.000000e+00 : f32
    %339 = vector.broadcast %cst_118 : f32 to vector<2x16xf32>
    %340 = arith.addf %339, %338 : vector<2x16xf32>
    %cst_119 = arith.constant 1.000000e+00 : f32
    %341 = vector.broadcast %cst_119 : f32 to vector<2x16xf32>
    %342 = arith.divf %341, %340 : vector<2x16xf32>
    %343 = arith.mulf %332, %271 : vector<2x16xf32>
    %344 = arith.mulf %324, %334 : vector<2x16xf32>
    %345 = arith.addf %343, %344 : vector<2x16xf32>
    %346 = math.tanh %345 : vector<2x16xf32>
    %347 = arith.mulf %342, %346 : vector<2x16xf32>
    %348 = vector.extract_strided_slice %316 {offsets = [0, 0], sizes = [2, 16], strides = [1, 1]} : vector<2x64xf32> to vector<2x16xf32>
    %cst_120 = arith.constant 0.000000e+00 : f32
    %349 = vector.broadcast %cst_120 : f32 to vector<2x16xf32>
    %350 = arith.subf %349, %348 : vector<2x16xf32>
    %351 = math.exp %350 : vector<2x16xf32>
    %cst_121 = arith.constant 1.000000e+00 : f32
    %352 = vector.broadcast %cst_121 : f32 to vector<2x16xf32>
    %353 = arith.addf %352, %351 : vector<2x16xf32>
    %cst_122 = arith.constant 1.000000e+00 : f32
    %354 = vector.broadcast %cst_122 : f32 to vector<2x16xf32>
    %355 = arith.divf %354, %353 : vector<2x16xf32>
    %356 = vector.extract_strided_slice %316 {offsets = [0, 16], sizes = [2, 16], strides = [1, 1]} : vector<2x64xf32> to vector<2x16xf32>
    %cst_123 = arith.constant 0.000000e+00 : f32
    %357 = vector.broadcast %cst_123 : f32 to vector<2x16xf32>
    %358 = arith.subf %357, %356 : vector<2x16xf32>
    %359 = math.exp %358 : vector<2x16xf32>
    %cst_124 = arith.constant 1.000000e+00 : f32
    %360 = vector.broadcast %cst_124 : f32 to vector<2x16xf32>
    %361 = arith.addf %360, %359 : vector<2x16xf32>
    %cst_125 = arith.constant 1.000000e+00 : f32
    %362 = vector.broadcast %cst_125 : f32 to vector<2x16xf32>
    %363 = arith.divf %362, %361 : vector<2x16xf32>
    %364 = vector.extract_strided_slice %316 {offsets = [0, 32], sizes = [2, 16], strides = [1, 1]} : vector<2x64xf32> to vector<2x16xf32>
    %365 = math.tanh %364 : vector<2x16xf32>
    %366 = vector.extract_strided_slice %316 {offsets = [0, 48], sizes = [2, 16], strides = [1, 1]} : vector<2x64xf32> to vector<2x16xf32>
    %cst_126 = arith.constant 0.000000e+00 : f32
    %367 = vector.broadcast %cst_126 : f32 to vector<2x16xf32>
    %368 = arith.subf %367, %366 : vector<2x16xf32>
    %369 = math.exp %368 : vector<2x16xf32>
    %cst_127 = arith.constant 1.000000e+00 : f32
    %370 = vector.broadcast %cst_127 : f32 to vector<2x16xf32>
    %371 = arith.addf %370, %369 : vector<2x16xf32>
    %cst_128 = arith.constant 1.000000e+00 : f32
    %372 = vector.broadcast %cst_128 : f32 to vector<2x16xf32>
    %373 = arith.divf %372, %371 : vector<2x16xf32>
    %374 = arith.mulf %363, %302 : vector<2x16xf32>
    %375 = arith.mulf %355, %365 : vector<2x16xf32>
    %376 = arith.addf %374, %375 : vector<2x16xf32>
    %377 = math.tanh %376 : vector<2x16xf32>
    %378 = arith.mulf %373, %377 : vector<2x16xf32>
    %379 = vector.shape_cast %347 : vector<2x16xf32> to vector<2x1x16xf32>
    %c0_129 = arith.constant 0 : index
    %c4_130 = arith.constant 4 : index
    %c0_131 = arith.constant 0 : index
    %380 = vector.load %arg20[%c0_129, %c4_130, %c0_131] : memref<2x8x32xf32, #tpu.memory_space<vmem>>, vector<2x1x16xf32>
    tpu.vector_store %arg20[%c0_129, %c4_130, %c0_131], %379 {strides = array<i32>} : memref<2x8x32xf32, #tpu.memory_space<vmem>>, vector<2x1x16xf32>,
    %381 = vector.shape_cast %378 : vector<2x16xf32> to vector<2x1x16xf32>
    %c0_132 = arith.constant 0 : index
    %c3_133 = arith.constant 3 : index
    %c16_134 = arith.constant 16 : index
    %382 = vector.load %arg20[%c0_132, %c3_133, %c16_134] : memref<2x8x32xf32, #tpu.memory_space<vmem>>, vector<2x1x16xf32>
    tpu.vector_store %arg20[%c0_132, %c3_133, %c16_134], %381 {strides = array<i32>} : memref<2x8x32xf32, #tpu.memory_space<vmem>>, vector<2x1x16xf32>,
    %383 = vector.extract_strided_slice %6 {offsets = [0, 5, 0], sizes = [2, 1, 64], strides = [1, 1, 1]} : vector<2x8x128xf32> to vector<2x1x64xf32>
    %384 = vector.shape_cast %383 : vector<2x1x64xf32> to vector<2x64xf32>
    %cst_135 = arith.constant dense<0.000000e+00> : vector<2x64xf32>
    %385 = tpu.matmul %347, %7, %cst_135 {dimension_numbers = #tpu.dot_dimension_numbers<[1], [0], [0], [1], [0, 0, 1, 1], [], []>} : vector<2x16xf32>, vector<16x64xf32>, vector<2x64xf32> -> vector<2x64xf32>
    %386 = arith.addf %384, %385 : vector<2x64xf32>
    %387 = vector.extract_strided_slice %6 {offsets = [0, 2, 64], sizes = [2, 1, 64], strides = [1, 1, 1]} : vector<2x8x128xf32> to vector<2x1x64xf32>
    %388 = vector.shape_cast %387 : vector<2x1x64xf32> to vector<2x64xf32>
    %cst_136 = arith.constant dense<0.000000e+00> : vector<2x64xf32>
    %389 = tpu.matmul %378, %8, %cst_136 {dimension_numbers = #tpu.dot_dimension_numbers<[1], [0], [0], [1], [0, 0, 1, 1], [], []>} : vector<2x16xf32>, vector<16x64xf32>, vector<2x64xf32> -> vector<2x64xf32>
    %390 = arith.addf %388, %389 : vector<2x64xf32>
    %391 = vector.extract_strided_slice %386 {offsets = [0, 0], sizes = [2, 16], strides = [1, 1]} : vector<2x64xf32> to vector<2x16xf32>
    %cst_137 = arith.constant 0.000000e+00 : f32
    %392 = vector.broadcast %cst_137 : f32 to vector<2x16xf32>
    %393 = arith.subf %392, %391 : vector<2x16xf32>
    %394 = math.exp %393 : vector<2x16xf32>
    %cst_138 = arith.constant 1.000000e+00 : f32
    %395 = vector.broadcast %cst_138 : f32 to vector<2x16xf32>
    %396 = arith.addf %395, %394 : vector<2x16xf32>
    %cst_139 = arith.constant 1.000000e+00 : f32
    %397 = vector.broadcast %cst_139 : f32 to vector<2x16xf32>
    %398 = arith.divf %397, %396 : vector<2x16xf32>
    %399 = vector.extract_strided_slice %386 {offsets = [0, 16], sizes = [2, 16], strides = [1, 1]} : vector<2x64xf32> to vector<2x16xf32>
    %cst_140 = arith.constant 0.000000e+00 : f32
    %400 = vector.broadcast %cst_140 : f32 to vector<2x16xf32>
    %401 = arith.subf %400, %399 : vector<2x16xf32>
    %402 = math.exp %401 : vector<2x16xf32>
    %cst_141 = arith.constant 1.000000e+00 : f32
    %403 = vector.broadcast %cst_141 : f32 to vector<2x16xf32>
    %404 = arith.addf %403, %402 : vector<2x16xf32>
    %cst_142 = arith.constant 1.000000e+00 : f32
    %405 = vector.broadcast %cst_142 : f32 to vector<2x16xf32>
    %406 = arith.divf %405, %404 : vector<2x16xf32>
    %407 = vector.extract_strided_slice %386 {offsets = [0, 32], sizes = [2, 16], strides = [1, 1]} : vector<2x64xf32> to vector<2x16xf32>
    %408 = math.tanh %407 : vector<2x16xf32>
    %409 = vector.extract_strided_slice %386 {offsets = [0, 48], sizes = [2, 16], strides = [1, 1]} : vector<2x64xf32> to vector<2x16xf32>
    %cst_143 = arith.constant 0.000000e+00 : f32
    %410 = vector.broadcast %cst_143 : f32 to vector<2x16xf32>
    %411 = arith.subf %410, %409 : vector<2x16xf32>
    %412 = math.exp %411 : vector<2x16xf32>
    %cst_144 = arith.constant 1.000000e+00 : f32
    %413 = vector.broadcast %cst_144 : f32 to vector<2x16xf32>
    %414 = arith.addf %413, %412 : vector<2x16xf32>
    %cst_145 = arith.constant 1.000000e+00 : f32
    %415 = vector.broadcast %cst_145 : f32 to vector<2x16xf32>
    %416 = arith.divf %415, %414 : vector<2x16xf32>
    %417 = arith.mulf %406, %345 : vector<2x16xf32>
    %418 = arith.mulf %398, %408 : vector<2x16xf32>
    %419 = arith.addf %417, %418 : vector<2x16xf32>
    %420 = math.tanh %419 : vector<2x16xf32>
    %421 = arith.mulf %416, %420 : vector<2x16xf32>
    %422 = vector.extract_strided_slice %390 {offsets = [0, 0], sizes = [2, 16], strides = [1, 1]} : vector<2x64xf32> to vector<2x16xf32>
    %cst_146 = arith.constant 0.000000e+00 : f32
    %423 = vector.broadcast %cst_146 : f32 to vector<2x16xf32>
    %424 = arith.subf %423, %422 : vector<2x16xf32>
    %425 = math.exp %424 : vector<2x16xf32>
    %cst_147 = arith.constant 1.000000e+00 : f32
    %426 = vector.broadcast %cst_147 : f32 to vector<2x16xf32>
    %427 = arith.addf %426, %425 : vector<2x16xf32>
    %cst_148 = arith.constant 1.000000e+00 : f32
    %428 = vector.broadcast %cst_148 : f32 to vector<2x16xf32>
    %429 = arith.divf %428, %427 : vector<2x16xf32>
    %430 = vector.extract_strided_slice %390 {offsets = [0, 16], sizes = [2, 16], strides = [1, 1]} : vector<2x64xf32> to vector<2x16xf32>
    %cst_149 = arith.constant 0.000000e+00 : f32
    %431 = vector.broadcast %cst_149 : f32 to vector<2x16xf32>
    %432 = arith.subf %431, %430 : vector<2x16xf32>
    %433 = math.exp %432 : vector<2x16xf32>
    %cst_150 = arith.constant 1.000000e+00 : f32
    %434 = vector.broadcast %cst_150 : f32 to vector<2x16xf32>
    %435 = arith.addf %434, %433 : vector<2x16xf32>
    %cst_151 = arith.constant 1.000000e+00 : f32
    %436 = vector.broadcast %cst_151 : f32 to vector<2x16xf32>
    %437 = arith.divf %436, %435 : vector<2x16xf32>
    %438 = vector.extract_strided_slice %390 {offsets = [0, 32], sizes = [2, 16], strides = [1, 1]} : vector<2x64xf32> to vector<2x16xf32>
    %439 = math.tanh %438 : vector<2x16xf32>
    %440 = vector.extract_strided_slice %390 {offsets = [0, 48], sizes = [2, 16], strides = [1, 1]} : vector<2x64xf32> to vector<2x16xf32>
    %cst_152 = arith.constant 0.000000e+00 : f32
    %441 = vector.broadcast %cst_152 : f32 to vector<2x16xf32>
    %442 = arith.subf %441, %440 : vector<2x16xf32>
    %443 = math.exp %442 : vector<2x16xf32>
    %cst_153 = arith.constant 1.000000e+00 : f32
    %444 = vector.broadcast %cst_153 : f32 to vector<2x16xf32>
    %445 = arith.addf %444, %443 : vector<2x16xf32>
    %cst_154 = arith.constant 1.000000e+00 : f32
    %446 = vector.broadcast %cst_154 : f32 to vector<2x16xf32>
    %447 = arith.divf %446, %445 : vector<2x16xf32>
    %448 = arith.mulf %437, %376 : vector<2x16xf32>
    %449 = arith.mulf %429, %439 : vector<2x16xf32>
    %450 = arith.addf %448, %449 : vector<2x16xf32>
    %451 = math.tanh %450 : vector<2x16xf32>
    %452 = arith.mulf %447, %451 : vector<2x16xf32>
    %453 = vector.shape_cast %421 : vector<2x16xf32> to vector<2x1x16xf32>
    %c0_155 = arith.constant 0 : index
    %c5_156 = arith.constant 5 : index
    %c0_157 = arith.constant 0 : index
    %454 = vector.load %arg20[%c0_155, %c5_156, %c0_157] : memref<2x8x32xf32, #tpu.memory_space<vmem>>, vector<2x1x16xf32>
    tpu.vector_store %arg20[%c0_155, %c5_156, %c0_157], %453 {strides = array<i32>} : memref<2x8x32xf32, #tpu.memory_space<vmem>>, vector<2x1x16xf32>,
    %455 = vector.shape_cast %452 : vector<2x16xf32> to vector<2x1x16xf32>
    %c0_158 = arith.constant 0 : index
    %c2_159 = arith.constant 2 : index
    %c16_160 = arith.constant 16 : index
    %456 = vector.load %arg20[%c0_158, %c2_159, %c16_160] : memref<2x8x32xf32, #tpu.memory_space<vmem>>, vector<2x1x16xf32>
    tpu.vector_store %arg20[%c0_158, %c2_159, %c16_160], %455 {strides = array<i32>} : memref<2x8x32xf32, #tpu.memory_space<vmem>>, vector<2x1x16xf32>,
    %457 = vector.extract_strided_slice %6 {offsets = [0, 6, 0], sizes = [2, 1, 64], strides = [1, 1, 1]} : vector<2x8x128xf32> to vector<2x1x64xf32>
    %458 = vector.shape_cast %457 : vector<2x1x64xf32> to vector<2x64xf32>
    %cst_161 = arith.constant dense<0.000000e+00> : vector<2x64xf32>
    %459 = tpu.matmul %421, %7, %cst_161 {dimension_numbers = #tpu.dot_dimension_numbers<[1], [0], [0], [1], [0, 0, 1, 1], [], []>} : vector<2x16xf32>, vector<16x64xf32>, vector<2x64xf32> -> vector<2x64xf32>
    %460 = arith.addf %458, %459 : vector<2x64xf32>
    %461 = vector.extract_strided_slice %6 {offsets = [0, 1, 64], sizes = [2, 1, 64], strides = [1, 1, 1]} : vector<2x8x128xf32> to vector<2x1x64xf32>
    %462 = vector.shape_cast %461 : vector<2x1x64xf32> to vector<2x64xf32>
    %cst_162 = arith.constant dense<0.000000e+00> : vector<2x64xf32>
    %463 = tpu.matmul %452, %8, %cst_162 {dimension_numbers = #tpu.dot_dimension_numbers<[1], [0], [0], [1], [0, 0, 1, 1], [], []>} : vector<2x16xf32>, vector<16x64xf32>, vector<2x64xf32> -> vector<2x64xf32>
    %464 = arith.addf %462, %463 : vector<2x64xf32>
    %465 = vector.extract_strided_slice %460 {offsets = [0, 0], sizes = [2, 16], strides = [1, 1]} : vector<2x64xf32> to vector<2x16xf32>
    %cst_163 = arith.constant 0.000000e+00 : f32
    %466 = vector.broadcast %cst_163 : f32 to vector<2x16xf32>
    %467 = arith.subf %466, %465 : vector<2x16xf32>
    %468 = math.exp %467 : vector<2x16xf32>
    %cst_164 = arith.constant 1.000000e+00 : f32
    %469 = vector.broadcast %cst_164 : f32 to vector<2x16xf32>
    %470 = arith.addf %469, %468 : vector<2x16xf32>
    %cst_165 = arith.constant 1.000000e+00 : f32
    %471 = vector.broadcast %cst_165 : f32 to vector<2x16xf32>
    %472 = arith.divf %471, %470 : vector<2x16xf32>
    %473 = vector.extract_strided_slice %460 {offsets = [0, 16], sizes = [2, 16], strides = [1, 1]} : vector<2x64xf32> to vector<2x16xf32>
    %cst_166 = arith.constant 0.000000e+00 : f32
    %474 = vector.broadcast %cst_166 : f32 to vector<2x16xf32>
    %475 = arith.subf %474, %473 : vector<2x16xf32>
    %476 = math.exp %475 : vector<2x16xf32>
    %cst_167 = arith.constant 1.000000e+00 : f32
    %477 = vector.broadcast %cst_167 : f32 to vector<2x16xf32>
    %478 = arith.addf %477, %476 : vector<2x16xf32>
    %cst_168 = arith.constant 1.000000e+00 : f32
    %479 = vector.broadcast %cst_168 : f32 to vector<2x16xf32>
    %480 = arith.divf %479, %478 : vector<2x16xf32>
    %481 = vector.extract_strided_slice %460 {offsets = [0, 32], sizes = [2, 16], strides = [1, 1]} : vector<2x64xf32> to vector<2x16xf32>
    %482 = math.tanh %481 : vector<2x16xf32>
    %483 = vector.extract_strided_slice %460 {offsets = [0, 48], sizes = [2, 16], strides = [1, 1]} : vector<2x64xf32> to vector<2x16xf32>
    %cst_169 = arith.constant 0.000000e+00 : f32
    %484 = vector.broadcast %cst_169 : f32 to vector<2x16xf32>
    %485 = arith.subf %484, %483 : vector<2x16xf32>
    %486 = math.exp %485 : vector<2x16xf32>
    %cst_170 = arith.constant 1.000000e+00 : f32
    %487 = vector.broadcast %cst_170 : f32 to vector<2x16xf32>
    %488 = arith.addf %487, %486 : vector<2x16xf32>
    %cst_171 = arith.constant 1.000000e+00 : f32
    %489 = vector.broadcast %cst_171 : f32 to vector<2x16xf32>
    %490 = arith.divf %489, %488 : vector<2x16xf32>
    %491 = arith.mulf %480, %419 : vector<2x16xf32>
    %492 = arith.mulf %472, %482 : vector<2x16xf32>
    %493 = arith.addf %491, %492 : vector<2x16xf32>
    %494 = math.tanh %493 : vector<2x16xf32>
    %495 = arith.mulf %490, %494 : vector<2x16xf32>
    %496 = vector.extract_strided_slice %464 {offsets = [0, 0], sizes = [2, 16], strides = [1, 1]} : vector<2x64xf32> to vector<2x16xf32>
    %cst_172 = arith.constant 0.000000e+00 : f32
    %497 = vector.broadcast %cst_172 : f32 to vector<2x16xf32>
    %498 = arith.subf %497, %496 : vector<2x16xf32>
    %499 = math.exp %498 : vector<2x16xf32>
    %cst_173 = arith.constant 1.000000e+00 : f32
    %500 = vector.broadcast %cst_173 : f32 to vector<2x16xf32>
    %501 = arith.addf %500, %499 : vector<2x16xf32>
    %cst_174 = arith.constant 1.000000e+00 : f32
    %502 = vector.broadcast %cst_174 : f32 to vector<2x16xf32>
    %503 = arith.divf %502, %501 : vector<2x16xf32>
    %504 = vector.extract_strided_slice %464 {offsets = [0, 16], sizes = [2, 16], strides = [1, 1]} : vector<2x64xf32> to vector<2x16xf32>
    %cst_175 = arith.constant 0.000000e+00 : f32
    %505 = vector.broadcast %cst_175 : f32 to vector<2x16xf32>
    %506 = arith.subf %505, %504 : vector<2x16xf32>
    %507 = math.exp %506 : vector<2x16xf32>
    %cst_176 = arith.constant 1.000000e+00 : f32
    %508 = vector.broadcast %cst_176 : f32 to vector<2x16xf32>
    %509 = arith.addf %508, %507 : vector<2x16xf32>
    %cst_177 = arith.constant 1.000000e+00 : f32
    %510 = vector.broadcast %cst_177 : f32 to vector<2x16xf32>
    %511 = arith.divf %510, %509 : vector<2x16xf32>
    %512 = vector.extract_strided_slice %464 {offsets = [0, 32], sizes = [2, 16], strides = [1, 1]} : vector<2x64xf32> to vector<2x16xf32>
    %513 = math.tanh %512 : vector<2x16xf32>
    %514 = vector.extract_strided_slice %464 {offsets = [0, 48], sizes = [2, 16], strides = [1, 1]} : vector<2x64xf32> to vector<2x16xf32>
    %cst_178 = arith.constant 0.000000e+00 : f32
    %515 = vector.broadcast %cst_178 : f32 to vector<2x16xf32>
    %516 = arith.subf %515, %514 : vector<2x16xf32>
    %517 = math.exp %516 : vector<2x16xf32>
    %cst_179 = arith.constant 1.000000e+00 : f32
    %518 = vector.broadcast %cst_179 : f32 to vector<2x16xf32>
    %519 = arith.addf %518, %517 : vector<2x16xf32>
    %cst_180 = arith.constant 1.000000e+00 : f32
    %520 = vector.broadcast %cst_180 : f32 to vector<2x16xf32>
    %521 = arith.divf %520, %519 : vector<2x16xf32>
    %522 = arith.mulf %511, %450 : vector<2x16xf32>
    %523 = arith.mulf %503, %513 : vector<2x16xf32>
    %524 = arith.addf %522, %523 : vector<2x16xf32>
    %525 = math.tanh %524 : vector<2x16xf32>
    %526 = arith.mulf %521, %525 : vector<2x16xf32>
    %527 = vector.shape_cast %495 : vector<2x16xf32> to vector<2x1x16xf32>
    %c0_181 = arith.constant 0 : index
    %c6_182 = arith.constant 6 : index
    %c0_183 = arith.constant 0 : index
    %528 = vector.load %arg20[%c0_181, %c6_182, %c0_183] : memref<2x8x32xf32, #tpu.memory_space<vmem>>, vector<2x1x16xf32>
    tpu.vector_store %arg20[%c0_181, %c6_182, %c0_183], %527 {strides = array<i32>} : memref<2x8x32xf32, #tpu.memory_space<vmem>>, vector<2x1x16xf32>,
    %529 = vector.shape_cast %526 : vector<2x16xf32> to vector<2x1x16xf32>
    %c0_184 = arith.constant 0 : index
    %c1_185 = arith.constant 1 : index
    %c16_186 = arith.constant 16 : index
    %530 = vector.load %arg20[%c0_184, %c1_185, %c16_186] : memref<2x8x32xf32, #tpu.memory_space<vmem>>, vector<2x1x16xf32>
    tpu.vector_store %arg20[%c0_184, %c1_185, %c16_186], %529 {strides = array<i32>} : memref<2x8x32xf32, #tpu.memory_space<vmem>>, vector<2x1x16xf32>,
    %531 = vector.extract_strided_slice %6 {offsets = [0, 7, 0], sizes = [2, 1, 64], strides = [1, 1, 1]} : vector<2x8x128xf32> to vector<2x1x64xf32>
    %532 = vector.shape_cast %531 : vector<2x1x64xf32> to vector<2x64xf32>
    %cst_187 = arith.constant dense<0.000000e+00> : vector<2x64xf32>
    %533 = tpu.matmul %495, %7, %cst_187 {dimension_numbers = #tpu.dot_dimension_numbers<[1], [0], [0], [1], [0, 0, 1, 1], [], []>} : vector<2x16xf32>, vector<16x64xf32>, vector<2x64xf32> -> vector<2x64xf32>
    %534 = arith.addf %532, %533 : vector<2x64xf32>
    %535 = vector.extract_strided_slice %6 {offsets = [0, 0, 64], sizes = [2, 1, 64], strides = [1, 1, 1]} : vector<2x8x128xf32> to vector<2x1x64xf32>
    %536 = vector.shape_cast %535 : vector<2x1x64xf32> to vector<2x64xf32>
    %cst_188 = arith.constant dense<0.000000e+00> : vector<2x64xf32>
    %537 = tpu.matmul %526, %8, %cst_188 {dimension_numbers = #tpu.dot_dimension_numbers<[1], [0], [0], [1], [0, 0, 1, 1], [], []>} : vector<2x16xf32>, vector<16x64xf32>, vector<2x64xf32> -> vector<2x64xf32>
    %538 = arith.addf %536, %537 : vector<2x64xf32>
    %539 = vector.extract_strided_slice %534 {offsets = [0, 0], sizes = [2, 16], strides = [1, 1]} : vector<2x64xf32> to vector<2x16xf32>
    %cst_189 = arith.constant 0.000000e+00 : f32
    %540 = vector.broadcast %cst_189 : f32 to vector<2x16xf32>
    %541 = arith.subf %540, %539 : vector<2x16xf32>
    %542 = math.exp %541 : vector<2x16xf32>
    %cst_190 = arith.constant 1.000000e+00 : f32
    %543 = vector.broadcast %cst_190 : f32 to vector<2x16xf32>
    %544 = arith.addf %543, %542 : vector<2x16xf32>
    %cst_191 = arith.constant 1.000000e+00 : f32
    %545 = vector.broadcast %cst_191 : f32 to vector<2x16xf32>
    %546 = arith.divf %545, %544 : vector<2x16xf32>
    %547 = vector.extract_strided_slice %534 {offsets = [0, 16], sizes = [2, 16], strides = [1, 1]} : vector<2x64xf32> to vector<2x16xf32>
    %cst_192 = arith.constant 0.000000e+00 : f32
    %548 = vector.broadcast %cst_192 : f32 to vector<2x16xf32>
    %549 = arith.subf %548, %547 : vector<2x16xf32>
    %550 = math.exp %549 : vector<2x16xf32>
    %cst_193 = arith.constant 1.000000e+00 : f32
    %551 = vector.broadcast %cst_193 : f32 to vector<2x16xf32>
    %552 = arith.addf %551, %550 : vector<2x16xf32>
    %cst_194 = arith.constant 1.000000e+00 : f32
    %553 = vector.broadcast %cst_194 : f32 to vector<2x16xf32>
    %554 = arith.divf %553, %552 : vector<2x16xf32>
    %555 = vector.extract_strided_slice %534 {offsets = [0, 32], sizes = [2, 16], strides = [1, 1]} : vector<2x64xf32> to vector<2x16xf32>
    %556 = math.tanh %555 : vector<2x16xf32>
    %557 = vector.extract_strided_slice %534 {offsets = [0, 48], sizes = [2, 16], strides = [1, 1]} : vector<2x64xf32> to vector<2x16xf32>
    %cst_195 = arith.constant 0.000000e+00 : f32
    %558 = vector.broadcast %cst_195 : f32 to vector<2x16xf32>
    %559 = arith.subf %558, %557 : vector<2x16xf32>
    %560 = math.exp %559 : vector<2x16xf32>
    %cst_196 = arith.constant 1.000000e+00 : f32
    %561 = vector.broadcast %cst_196 : f32 to vector<2x16xf32>
    %562 = arith.addf %561, %560 : vector<2x16xf32>
    %cst_197 = arith.constant 1.000000e+00 : f32
    %563 = vector.broadcast %cst_197 : f32 to vector<2x16xf32>
    %564 = arith.divf %563, %562 : vector<2x16xf32>
    %565 = arith.mulf %554, %493 : vector<2x16xf32>
    %566 = arith.mulf %546, %556 : vector<2x16xf32>
    %567 = arith.addf %565, %566 : vector<2x16xf32>
    %568 = math.tanh %567 : vector<2x16xf32>
    %569 = arith.mulf %564, %568 : vector<2x16xf32>
    %570 = vector.extract_strided_slice %538 {offsets = [0, 0], sizes = [2, 16], strides = [1, 1]} : vector<2x64xf32> to vector<2x16xf32>
    %cst_198 = arith.constant 0.000000e+00 : f32
    %571 = vector.broadcast %cst_198 : f32 to vector<2x16xf32>
    %572 = arith.subf %571, %570 : vector<2x16xf32>
    %573 = math.exp %572 : vector<2x16xf32>
    %cst_199 = arith.constant 1.000000e+00 : f32
    %574 = vector.broadcast %cst_199 : f32 to vector<2x16xf32>
    %575 = arith.addf %574, %573 : vector<2x16xf32>
    %cst_200 = arith.constant 1.000000e+00 : f32
    %576 = vector.broadcast %cst_200 : f32 to vector<2x16xf32>
    %577 = arith.divf %576, %575 : vector<2x16xf32>
    %578 = vector.extract_strided_slice %538 {offsets = [0, 16], sizes = [2, 16], strides = [1, 1]} : vector<2x64xf32> to vector<2x16xf32>
    %cst_201 = arith.constant 0.000000e+00 : f32
    %579 = vector.broadcast %cst_201 : f32 to vector<2x16xf32>
    %580 = arith.subf %579, %578 : vector<2x16xf32>
    %581 = math.exp %580 : vector<2x16xf32>
    %cst_202 = arith.constant 1.000000e+00 : f32
    %582 = vector.broadcast %cst_202 : f32 to vector<2x16xf32>
    %583 = arith.addf %582, %581 : vector<2x16xf32>
    %cst_203 = arith.constant 1.000000e+00 : f32
    %584 = vector.broadcast %cst_203 : f32 to vector<2x16xf32>
    %585 = arith.divf %584, %583 : vector<2x16xf32>
    %586 = vector.extract_strided_slice %538 {offsets = [0, 32], sizes = [2, 16], strides = [1, 1]} : vector<2x64xf32> to vector<2x16xf32>
    %587 = math.tanh %586 : vector<2x16xf32>
    %588 = vector.extract_strided_slice %538 {offsets = [0, 48], sizes = [2, 16], strides = [1, 1]} : vector<2x64xf32> to vector<2x16xf32>
    %cst_204 = arith.constant 0.000000e+00 : f32
    %589 = vector.broadcast %cst_204 : f32 to vector<2x16xf32>
    %590 = arith.subf %589, %588 : vector<2x16xf32>
    %591 = math.exp %590 : vector<2x16xf32>
    %cst_205 = arith.constant 1.000000e+00 : f32
    %592 = vector.broadcast %cst_205 : f32 to vector<2x16xf32>
    %593 = arith.addf %592, %591 : vector<2x16xf32>
    %cst_206 = arith.constant 1.000000e+00 : f32
    %594 = vector.broadcast %cst_206 : f32 to vector<2x16xf32>
    %595 = arith.divf %594, %593 : vector<2x16xf32>
    %596 = arith.mulf %585, %524 : vector<2x16xf32>
    %597 = arith.mulf %577, %587 : vector<2x16xf32>
    %598 = arith.addf %596, %597 : vector<2x16xf32>
    %599 = math.tanh %598 : vector<2x16xf32>
    %600 = arith.mulf %595, %599 : vector<2x16xf32>
    %601 = vector.shape_cast %569 : vector<2x16xf32> to vector<2x1x16xf32>
    %c0_207 = arith.constant 0 : index
    %c7_208 = arith.constant 7 : index
    %c0_209 = arith.constant 0 : index
    %602 = vector.load %arg20[%c0_207, %c7_208, %c0_209] : memref<2x8x32xf32, #tpu.memory_space<vmem>>, vector<2x1x16xf32>
    tpu.vector_store %arg20[%c0_207, %c7_208, %c0_209], %601 {strides = array<i32>} : memref<2x8x32xf32, #tpu.memory_space<vmem>>, vector<2x1x16xf32>,
    %603 = vector.shape_cast %600 : vector<2x16xf32> to vector<2x1x16xf32>
    %c0_210 = arith.constant 0 : index
    %c0_211 = arith.constant 0 : index
    %c16_212 = arith.constant 16 : index
    %604 = vector.load %arg20[%c0_210, %c0_211, %c16_212] : memref<2x8x32xf32, #tpu.memory_space<vmem>>, vector<2x1x16xf32>
    tpu.vector_store %arg20[%c0_210, %c0_211, %c16_212], %603 {strides = array<i32>} : memref<2x8x32xf32, #tpu.memory_space<vmem>>, vector<2x1x16xf32>,
    %c0_213 = arith.constant 0 : index
    %c0_214 = arith.constant 0 : index
    %c0_215 = arith.constant 0 : index
    %605 = vector.load %arg20[%c0_213, %c0_214, %c0_215] : memref<2x8x32xf32, #tpu.memory_space<vmem>>, vector<2x8x32xf32>
    %606 = vector.shape_cast %605 : vector<2x8x32xf32> to vector<16x32xf32>
    %c0_216 = arith.constant 0 : index
    %c0_217 = arith.constant 0 : index
    %607 = vector.load %arg5[%c0_216, %c0_217] : memref<32x32xf32, #tpu.memory_space<vmem>>, vector<32x32xf32>
    %cst_218 = arith.constant dense<0.000000e+00> : vector<16x32xf32>
    %608 = tpu.matmul %606, %607, %cst_218 {dimension_numbers = #tpu.dot_dimension_numbers<[1], [0], [0], [1], [0, 0, 1, 1], [], []>} : vector<16x32xf32>, vector<32x32xf32>, vector<16x32xf32> -> vector<16x32xf32>
    %c0_219 = arith.constant 0 : index
    %c0_220 = arith.constant 0 : index
    %609 = vector.load %arg6[%c0_219, %c0_220] : memref<1x32xf32, #tpu.memory_space<vmem>>, vector<1x32xf32>
    %610 = vector.broadcast %609 : vector<1x32xf32> to vector<16x32xf32>
    %611 = arith.addf %608, %610 : vector<16x32xf32>
    %612 = arith.addf %0, %611 : vector<16x32xf32>
    %c0_221 = arith.constant 0 : index
    %c0_222 = arith.constant 0 : index
    %613 = vector.load %arg7[%c0_221, %c0_222] : memref<1x32xf32, #tpu.memory_space<vmem>>, vector<1x32xf32>
    %c0_223 = arith.constant 0 : index
    %c0_224 = arith.constant 0 : index
    %614 = vector.load %arg8[%c0_223, %c0_224] : memref<1x32xf32, #tpu.memory_space<vmem>>, vector<1x32xf32>
    %cst_225 = arith.constant dense<0.000000e+00> : vector<16xf32>
    %615 = vector.multi_reduction <add>, %612, %cst_225 [1] : vector<16x32xf32> to vector<16xf32>
    %616 = vector.shape_cast %615 : vector<16xf32> to vector<16x1xf32>
    %cst_226 = arith.constant 3.200000e+01 : f32
    %617 = vector.broadcast %cst_226 : f32 to vector<16x1xf32>
    %618 = arith.divf %616, %617 : vector<16x1xf32>
    %619 = vector.broadcast %618 : vector<16x1xf32> to vector<16x32xf32>
    %620 = arith.subf %612, %619 : vector<16x32xf32>
    %621 = arith.mulf %620, %620 : vector<16x32xf32>
    %cst_227 = arith.constant dense<0.000000e+00> : vector<16xf32>
    %622 = vector.multi_reduction <add>, %621, %cst_227 [1] : vector<16x32xf32> to vector<16xf32>
    %623 = vector.shape_cast %622 : vector<16xf32> to vector<16x1xf32>
    %cst_228 = arith.constant 3.200000e+01 : f32
    %624 = vector.broadcast %cst_228 : f32 to vector<16x1xf32>
    %625 = arith.divf %623, %624 : vector<16x1xf32>
    %626 = vector.broadcast %618 : vector<16x1xf32> to vector<16x32xf32>
    %627 = arith.subf %612, %626 : vector<16x32xf32>
    %cst_229 = arith.constant 9.99999974E-6 : f32
    %628 = vector.broadcast %cst_229 : f32 to vector<16x1xf32>
    %629 = arith.addf %625, %628 : vector<16x1xf32>
    %630 = math.rsqrt %629 : vector<16x1xf32>
    %631 = vector.broadcast %630 : vector<16x1xf32> to vector<16x32xf32>
    %632 = arith.mulf %627, %631 : vector<16x32xf32>
    %633 = vector.broadcast %613 : vector<1x32xf32> to vector<16x32xf32>
    %634 = arith.mulf %632, %633 : vector<16x32xf32>
    %635 = vector.broadcast %614 : vector<1x32xf32> to vector<16x32xf32>
    %636 = arith.addf %634, %635 : vector<16x32xf32>
    %c0_230 = arith.constant 0 : index
    %c0_231 = arith.constant 0 : index
    %637 = vector.load %arg9[%c0_230, %c0_231] : memref<32x96xf32, #tpu.memory_space<vmem>>, vector<32x96xf32>
    %cst_232 = arith.constant dense<0.000000e+00> : vector<16x96xf32>
    %638 = tpu.matmul %636, %637, %cst_232 {dimension_numbers = #tpu.dot_dimension_numbers<[1], [0], [0], [1], [0, 0, 1, 1], [], []>} : vector<16x32xf32>, vector<32x96xf32>, vector<16x96xf32> -> vector<16x96xf32>
    %c0_233 = arith.constant 0 : index
    %c0_234 = arith.constant 0 : index
    %639 = vector.load %arg10[%c0_233, %c0_234] : memref<1x96xf32, #tpu.memory_space<vmem>>, vector<1x96xf32>
    %640 = vector.broadcast %639 : vector<1x96xf32> to vector<16x96xf32>
    %641 = arith.addf %638, %640 : vector<16x96xf32>
    %642 = vector.shape_cast %641 : vector<16x96xf32> to vector<2x8x96xf32>
    %c0_235 = arith.constant 0 : index
    %c0_236 = arith.constant 0 : index
    %643 = vector.load %arg11[%c0_235, %c0_236] : memref<32x32xf32, #tpu.memory_space<vmem>>, vector<32x32xf32>
    %cst_237 = arith.constant 0.000000e+00 : f32
    %644 = vector.broadcast %cst_237 : f32 to vector<16x32xf32>
    %645 = vector.extract_strided_slice %642 {offsets = [0, 0, 0], sizes = [2, 8, 8], strides = [1, 1, 1]} : vector<2x8x96xf32> to vector<2x8x8xf32>
    %646 = vector.extract_strided_slice %642 {offsets = [0, 0, 32], sizes = [2, 8, 8], strides = [1, 1, 1]} : vector<2x8x96xf32> to vector<2x8x8xf32>
    %647 = vector.extract_strided_slice %642 {offsets = [0, 0, 64], sizes = [2, 8, 8], strides = [1, 1, 1]} : vector<2x8x96xf32> to vector<2x8x8xf32>
    "tpu.trace_start"() <{level = 10 : i32, message = "bqd,bkd->bqk"}> : () -> ()
    %cst_238 = arith.constant dense<0.000000e+00> : vector<2x8x8xf32>
    %648 = tpu.matmul %645, %646, %cst_238 {dimension_numbers = #tpu.dot_dimension_numbers<[2], [2], [1], [1], [0, 0, 0, 1, 1, 1], [0], [0]>} : vector<2x8x8xf32>, vector<2x8x8xf32>, vector<2x8x8xf32> -> vector<2x8x8xf32>
    "tpu.trace_stop"() : () -> ()
    %cst_239 = arith.constant 0.353553385 : f32
    %649 = vector.broadcast %cst_239 : f32 to vector<2x8x8xf32>
    %650 = arith.mulf %648, %649 : vector<2x8x8xf32>
    %cst_240 = arith.constant dense<0xFF800000> : vector<2x8xf32>
    %651 = vector.multi_reduction <maximumf>, %650, %cst_240 [2] : vector<2x8x8xf32> to vector<2x8xf32>
    %652 = vector.shape_cast %651 : vector<2x8xf32> to vector<2x8x1xf32>
    %653 = vector.broadcast %652 : vector<2x8x1xf32> to vector<2x8x8xf32>
    %654 = arith.subf %650, %653 : vector<2x8x8xf32>
    %655 = math.exp %654 : vector<2x8x8xf32>
    %cst_241 = arith.constant dense<0.000000e+00> : vector<2x8xf32>
    %656 = vector.multi_reduction <add>, %655, %cst_241 [2] : vector<2x8x8xf32> to vector<2x8xf32>
    %657 = vector.shape_cast %656 : vector<2x8xf32> to vector<2x8x1xf32>
    %658 = tpu.reciprocal %657 {approx = true} : vector<2x8x1xf32> -> vector<2x8x1xf32>
    %659 = vector.broadcast %658 : vector<2x8x1xf32> to vector<2x8x8xf32>
    %660 = arith.mulf %655, %659 : vector<2x8x8xf32>
    "tpu.trace_start"() <{level = 10 : i32, message = "bqk,bkd->bqd"}> : () -> ()
    %cst_242 = arith.constant dense<0.000000e+00> : vector<2x8x8xf32>
    %661 = tpu.matmul %660, %647, %cst_242 {dimension_numbers = #tpu.dot_dimension_numbers<[2], [1], [1], [2], [0, 0, 0, 1, 1, 2], [0], [0]>} : vector<2x8x8xf32>, vector<2x8x8xf32>, vector<2x8x8xf32> -> vector<2x8x8xf32>
    "tpu.trace_stop"() : () -> ()
    %662 = vector.shape_cast %661 : vector<2x8x8xf32> to vector<16x8xf32>
    %663 = vector.extract_strided_slice %643 {offsets = [0, 0], sizes = [8, 32], strides = [1, 1]} : vector<32x32xf32> to vector<8x32xf32>
    %cst_243 = arith.constant dense<0.000000e+00> : vector<16x32xf32>
    %664 = tpu.matmul %662, %663, %cst_243 {dimension_numbers = #tpu.dot_dimension_numbers<[1], [0], [0], [1], [0, 0, 1, 1], [], []>} : vector<16x8xf32>, vector<8x32xf32>, vector<16x32xf32> -> vector<16x32xf32>
    %665 = arith.addf %644, %664 : vector<16x32xf32>
    %666 = vector.extract_strided_slice %642 {offsets = [0, 0, 8], sizes = [2, 8, 8], strides = [1, 1, 1]} : vector<2x8x96xf32> to vector<2x8x8xf32>
    %667 = vector.extract_strided_slice %642 {offsets = [0, 0, 40], sizes = [2, 8, 8], strides = [1, 1, 1]} : vector<2x8x96xf32> to vector<2x8x8xf32>
    %668 = vector.extract_strided_slice %642 {offsets = [0, 0, 72], sizes = [2, 8, 8], strides = [1, 1, 1]} : vector<2x8x96xf32> to vector<2x8x8xf32>
    "tpu.trace_start"() <{level = 10 : i32, message = "bqd,bkd->bqk"}> : () -> ()
    %cst_244 = arith.constant dense<0.000000e+00> : vector<2x8x8xf32>
    %669 = tpu.matmul %666, %667, %cst_244 {dimension_numbers = #tpu.dot_dimension_numbers<[2], [2], [1], [1], [0, 0, 0, 1, 1, 1], [0], [0]>} : vector<2x8x8xf32>, vector<2x8x8xf32>, vector<2x8x8xf32> -> vector<2x8x8xf32>
    "tpu.trace_stop"() : () -> ()
    %cst_245 = arith.constant 0.353553385 : f32
    %670 = vector.broadcast %cst_245 : f32 to vector<2x8x8xf32>
    %671 = arith.mulf %669, %670 : vector<2x8x8xf32>
    %cst_246 = arith.constant dense<0xFF800000> : vector<2x8xf32>
    %672 = vector.multi_reduction <maximumf>, %671, %cst_246 [2] : vector<2x8x8xf32> to vector<2x8xf32>
    %673 = vector.shape_cast %672 : vector<2x8xf32> to vector<2x8x1xf32>
    %674 = vector.broadcast %673 : vector<2x8x1xf32> to vector<2x8x8xf32>
    %675 = arith.subf %671, %674 : vector<2x8x8xf32>
    %676 = math.exp %675 : vector<2x8x8xf32>
    %cst_247 = arith.constant dense<0.000000e+00> : vector<2x8xf32>
    %677 = vector.multi_reduction <add>, %676, %cst_247 [2] : vector<2x8x8xf32> to vector<2x8xf32>
    %678 = vector.shape_cast %677 : vector<2x8xf32> to vector<2x8x1xf32>
    %679 = tpu.reciprocal %678 {approx = true} : vector<2x8x1xf32> -> vector<2x8x1xf32>
    %680 = vector.broadcast %679 : vector<2x8x1xf32> to vector<2x8x8xf32>
    %681 = arith.mulf %676, %680 : vector<2x8x8xf32>
    "tpu.trace_start"() <{level = 10 : i32, message = "bqk,bkd->bqd"}> : () -> ()
    %cst_248 = arith.constant dense<0.000000e+00> : vector<2x8x8xf32>
    %682 = tpu.matmul %681, %668, %cst_248 {dimension_numbers = #tpu.dot_dimension_numbers<[2], [1], [1], [2], [0, 0, 0, 1, 1, 2], [0], [0]>} : vector<2x8x8xf32>, vector<2x8x8xf32>, vector<2x8x8xf32> -> vector<2x8x8xf32>
    "tpu.trace_stop"() : () -> ()
    %683 = vector.shape_cast %682 : vector<2x8x8xf32> to vector<16x8xf32>
    %684 = vector.extract_strided_slice %643 {offsets = [8, 0], sizes = [8, 32], strides = [1, 1]} : vector<32x32xf32> to vector<8x32xf32>
    %cst_249 = arith.constant dense<0.000000e+00> : vector<16x32xf32>
    %685 = tpu.matmul %683, %684, %cst_249 {dimension_numbers = #tpu.dot_dimension_numbers<[1], [0], [0], [1], [0, 0, 1, 1], [], []>} : vector<16x8xf32>, vector<8x32xf32>, vector<16x32xf32> -> vector<16x32xf32>
    %686 = arith.addf %665, %685 : vector<16x32xf32>
    %687 = vector.extract_strided_slice %642 {offsets = [0, 0, 16], sizes = [2, 8, 8], strides = [1, 1, 1]} : vector<2x8x96xf32> to vector<2x8x8xf32>
    %688 = vector.extract_strided_slice %642 {offsets = [0, 0, 48], sizes = [2, 8, 8], strides = [1, 1, 1]} : vector<2x8x96xf32> to vector<2x8x8xf32>
    %689 = vector.extract_strided_slice %642 {offsets = [0, 0, 80], sizes = [2, 8, 8], strides = [1, 1, 1]} : vector<2x8x96xf32> to vector<2x8x8xf32>
    "tpu.trace_start"() <{level = 10 : i32, message = "bqd,bkd->bqk"}> : () -> ()
    %cst_250 = arith.constant dense<0.000000e+00> : vector<2x8x8xf32>
    %690 = tpu.matmul %687, %688, %cst_250 {dimension_numbers = #tpu.dot_dimension_numbers<[2], [2], [1], [1], [0, 0, 0, 1, 1, 1], [0], [0]>} : vector<2x8x8xf32>, vector<2x8x8xf32>, vector<2x8x8xf32> -> vector<2x8x8xf32>
    "tpu.trace_stop"() : () -> ()
    %cst_251 = arith.constant 0.353553385 : f32
    %691 = vector.broadcast %cst_251 : f32 to vector<2x8x8xf32>
    %692 = arith.mulf %690, %691 : vector<2x8x8xf32>
    %cst_252 = arith.constant dense<0xFF800000> : vector<2x8xf32>
    %693 = vector.multi_reduction <maximumf>, %692, %cst_252 [2] : vector<2x8x8xf32> to vector<2x8xf32>
    %694 = vector.shape_cast %693 : vector<2x8xf32> to vector<2x8x1xf32>
    %695 = vector.broadcast %694 : vector<2x8x1xf32> to vector<2x8x8xf32>
    %696 = arith.subf %692, %695 : vector<2x8x8xf32>
    %697 = math.exp %696 : vector<2x8x8xf32>
    %cst_253 = arith.constant dense<0.000000e+00> : vector<2x8xf32>
    %698 = vector.multi_reduction <add>, %697, %cst_253 [2] : vector<2x8x8xf32> to vector<2x8xf32>
    %699 = vector.shape_cast %698 : vector<2x8xf32> to vector<2x8x1xf32>
    %700 = tpu.reciprocal %699 {approx = true} : vector<2x8x1xf32> -> vector<2x8x1xf32>
    %701 = vector.broadcast %700 : vector<2x8x1xf32> to vector<2x8x8xf32>
    %702 = arith.mulf %697, %701 : vector<2x8x8xf32>
    "tpu.trace_start"() <{level = 10 : i32, message = "bqk,bkd->bqd"}> : () -> ()
    %cst_254 = arith.constant dense<0.000000e+00> : vector<2x8x8xf32>
    %703 = tpu.matmul %702, %689, %cst_254 {dimension_numbers = #tpu.dot_dimension_numbers<[2], [1], [1], [2], [0, 0, 0, 1, 1, 2], [0], [0]>} : vector<2x8x8xf32>, vector<2x8x8xf32>, vector<2x8x8xf32> -> vector<2x8x8xf32>
    "tpu.trace_stop"() : () -> ()
    %704 = vector.shape_cast %703 : vector<2x8x8xf32> to vector<16x8xf32>
    %705 = vector.extract_strided_slice %643 {offsets = [16, 0], sizes = [8, 32], strides = [1, 1]} : vector<32x32xf32> to vector<8x32xf32>
    %cst_255 = arith.constant dense<0.000000e+00> : vector<16x32xf32>
    %706 = tpu.matmul %704, %705, %cst_255 {dimension_numbers = #tpu.dot_dimension_numbers<[1], [0], [0], [1], [0, 0, 1, 1], [], []>} : vector<16x8xf32>, vector<8x32xf32>, vector<16x32xf32> -> vector<16x32xf32>
    %707 = arith.addf %686, %706 : vector<16x32xf32>
    %708 = vector.extract_strided_slice %642 {offsets = [0, 0, 24], sizes = [2, 8, 8], strides = [1, 1, 1]} : vector<2x8x96xf32> to vector<2x8x8xf32>
    %709 = vector.extract_strided_slice %642 {offsets = [0, 0, 56], sizes = [2, 8, 8], strides = [1, 1, 1]} : vector<2x8x96xf32> to vector<2x8x8xf32>
    %710 = vector.extract_strided_slice %642 {offsets = [0, 0, 88], sizes = [2, 8, 8], strides = [1, 1, 1]} : vector<2x8x96xf32> to vector<2x8x8xf32>
    "tpu.trace_start"() <{level = 10 : i32, message = "bqd,bkd->bqk"}> : () -> ()
    %cst_256 = arith.constant dense<0.000000e+00> : vector<2x8x8xf32>
    %711 = tpu.matmul %708, %709, %cst_256 {dimension_numbers = #tpu.dot_dimension_numbers<[2], [2], [1], [1], [0, 0, 0, 1, 1, 1], [0], [0]>} : vector<2x8x8xf32>, vector<2x8x8xf32>, vector<2x8x8xf32> -> vector<2x8x8xf32>
    "tpu.trace_stop"() : () -> ()
    %cst_257 = arith.constant 0.353553385 : f32
    %712 = vector.broadcast %cst_257 : f32 to vector<2x8x8xf32>
    %713 = arith.mulf %711, %712 : vector<2x8x8xf32>
    %cst_258 = arith.constant dense<0xFF800000> : vector<2x8xf32>
    %714 = vector.multi_reduction <maximumf>, %713, %cst_258 [2] : vector<2x8x8xf32> to vector<2x8xf32>
    %715 = vector.shape_cast %714 : vector<2x8xf32> to vector<2x8x1xf32>
    %716 = vector.broadcast %715 : vector<2x8x1xf32> to vector<2x8x8xf32>
    %717 = arith.subf %713, %716 : vector<2x8x8xf32>
    %718 = math.exp %717 : vector<2x8x8xf32>
    %cst_259 = arith.constant dense<0.000000e+00> : vector<2x8xf32>
    %719 = vector.multi_reduction <add>, %718, %cst_259 [2] : vector<2x8x8xf32> to vector<2x8xf32>
    %720 = vector.shape_cast %719 : vector<2x8xf32> to vector<2x8x1xf32>
    %721 = tpu.reciprocal %720 {approx = true} : vector<2x8x1xf32> -> vector<2x8x1xf32>
    %722 = vector.broadcast %721 : vector<2x8x1xf32> to vector<2x8x8xf32>
    %723 = arith.mulf %718, %722 : vector<2x8x8xf32>
    "tpu.trace_start"() <{level = 10 : i32, message = "bqk,bkd->bqd"}> : () -> ()
    %cst_260 = arith.constant dense<0.000000e+00> : vector<2x8x8xf32>
    %724 = tpu.matmul %723, %710, %cst_260 {dimension_numbers = #tpu.dot_dimension_numbers<[2], [1], [1], [2], [0, 0, 0, 1, 1, 2], [0], [0]>} : vector<2x8x8xf32>, vector<2x8x8xf32>, vector<2x8x8xf32> -> vector<2x8x8xf32>
    "tpu.trace_stop"() : () -> ()
    %725 = vector.shape_cast %724 : vector<2x8x8xf32> to vector<16x8xf32>
    %726 = vector.extract_strided_slice %643 {offsets = [24, 0], sizes = [8, 32], strides = [1, 1]} : vector<32x32xf32> to vector<8x32xf32>
    %cst_261 = arith.constant dense<0.000000e+00> : vector<16x32xf32>
    %727 = tpu.matmul %725, %726, %cst_261 {dimension_numbers = #tpu.dot_dimension_numbers<[1], [0], [0], [1], [0, 0, 1, 1], [], []>} : vector<16x8xf32>, vector<8x32xf32>, vector<16x32xf32> -> vector<16x32xf32>
    %728 = arith.addf %707, %727 : vector<16x32xf32>
    %c0_262 = arith.constant 0 : index
    %c0_263 = arith.constant 0 : index
    %729 = vector.load %arg12[%c0_262, %c0_263] : memref<1x32xf32, #tpu.memory_space<vmem>>, vector<1x32xf32>
    %730 = vector.broadcast %729 : vector<1x32xf32> to vector<16x32xf32>
    %731 = arith.addf %728, %730 : vector<16x32xf32>
    %732 = arith.addf %636, %731 : vector<16x32xf32>
    %c0_264 = arith.constant 0 : index
    %c0_265 = arith.constant 0 : index
    %733 = vector.load %arg13[%c0_264, %c0_265] : memref<1x32xf32, #tpu.memory_space<vmem>>, vector<1x32xf32>
    %c0_266 = arith.constant 0 : index
    %c0_267 = arith.constant 0 : index
    %734 = vector.load %arg14[%c0_266, %c0_267] : memref<1x32xf32, #tpu.memory_space<vmem>>, vector<1x32xf32>
    %cst_268 = arith.constant dense<0.000000e+00> : vector<16xf32>
    %735 = vector.multi_reduction <add>, %732, %cst_268 [1] : vector<16x32xf32> to vector<16xf32>
    %736 = vector.shape_cast %735 : vector<16xf32> to vector<16x1xf32>
    %cst_269 = arith.constant 3.200000e+01 : f32
    %737 = vector.broadcast %cst_269 : f32 to vector<16x1xf32>
    %738 = arith.divf %736, %737 : vector<16x1xf32>
    %739 = vector.broadcast %738 : vector<16x1xf32> to vector<16x32xf32>
    %740 = arith.subf %732, %739 : vector<16x32xf32>
    %741 = arith.mulf %740, %740 : vector<16x32xf32>
    %cst_270 = arith.constant dense<0.000000e+00> : vector<16xf32>
    %742 = vector.multi_reduction <add>, %741, %cst_270 [1] : vector<16x32xf32> to vector<16xf32>
    %743 = vector.shape_cast %742 : vector<16xf32> to vector<16x1xf32>
    %cst_271 = arith.constant 3.200000e+01 : f32
    %744 = vector.broadcast %cst_271 : f32 to vector<16x1xf32>
    %745 = arith.divf %743, %744 : vector<16x1xf32>
    %746 = vector.broadcast %738 : vector<16x1xf32> to vector<16x32xf32>
    %747 = arith.subf %732, %746 : vector<16x32xf32>
    %cst_272 = arith.constant 9.99999974E-6 : f32
    %748 = vector.broadcast %cst_272 : f32 to vector<16x1xf32>
    %749 = arith.addf %745, %748 : vector<16x1xf32>
    %750 = math.rsqrt %749 : vector<16x1xf32>
    %751 = vector.broadcast %750 : vector<16x1xf32> to vector<16x32xf32>
    %752 = arith.mulf %747, %751 : vector<16x32xf32>
    %753 = vector.broadcast %733 : vector<1x32xf32> to vector<16x32xf32>
    %754 = arith.mulf %752, %753 : vector<16x32xf32>
    %755 = vector.broadcast %734 : vector<1x32xf32> to vector<16x32xf32>
    %756 = arith.addf %754, %755 : vector<16x32xf32>
    %c0_273 = arith.constant 0 : index
    %c0_274 = arith.constant 0 : index
    %757 = vector.load %arg15[%c0_273, %c0_274] : memref<32x128xf32, #tpu.memory_space<vmem>>, vector<32x128xf32>
    %cst_275 = arith.constant dense<0.000000e+00> : vector<16x128xf32>
    %758 = tpu.matmul %756, %757, %cst_275 {dimension_numbers = #tpu.dot_dimension_numbers<[1], [0], [0], [1], [0, 0, 1, 1], [], []>} : vector<16x32xf32>, vector<32x128xf32>, vector<16x128xf32> -> vector<16x128xf32>
    %c0_276 = arith.constant 0 : index
    %c0_277 = arith.constant 0 : index
    %759 = vector.load %arg16[%c0_276, %c0_277] : memref<1x128xf32, #tpu.memory_space<vmem>>, vector<1x128xf32>
    %760 = vector.broadcast %759 : vector<1x128xf32> to vector<16x128xf32>
    %761 = arith.addf %758, %760 : vector<16x128xf32>
    %cst_278 = arith.constant 0.000000e+00 : f32
    %762 = vector.broadcast %cst_278 : f32 to vector<16x128xf32>
    %763 = arith.maximumf %761, %762 : vector<16x128xf32>
    %c0_279 = arith.constant 0 : index
    %c0_280 = arith.constant 0 : index
    %764 = vector.load %arg17[%c0_279, %c0_280] : memref<128x32xf32, #tpu.memory_space<vmem>>, vector<128x32xf32>
    %cst_281 = arith.constant dense<0.000000e+00> : vector<16x32xf32>
    %765 = tpu.matmul %763, %764, %cst_281 {dimension_numbers = #tpu.dot_dimension_numbers<[1], [0], [0], [1], [0, 0, 1, 1], [], []>} : vector<16x128xf32>, vector<128x32xf32>, vector<16x32xf32> -> vector<16x32xf32>
    %c0_282 = arith.constant 0 : index
    %c0_283 = arith.constant 0 : index
    %766 = vector.load %arg18[%c0_282, %c0_283] : memref<1x32xf32, #tpu.memory_space<vmem>>, vector<1x32xf32>
    %767 = vector.broadcast %766 : vector<1x32xf32> to vector<16x32xf32>
    %768 = arith.addf %765, %767 : vector<16x32xf32>
    %769 = arith.addf %756, %768 : vector<16x32xf32>
    %c0_284 = arith.constant 0 : index
    %c0_285 = arith.constant 0 : index
    %770 = vector.load %arg19[%c0_284, %c0_285] : memref<16x32xf32, #tpu.memory_space<vmem>>, vector<16x32xf32>
    tpu.vector_store %arg19[%c0_284, %c0_285], %769 {strides = array<i32>} : memref<16x32xf32, #tpu.memory_space<vmem>>, vector<16x32xf32>,
    return
  }
}

</mosaic_0001>

<llo_original>
// kernel: tpu_custom_call.1
$region0: #{tpu_custom_call.1}
  #allocation0 [shape = 'u32[]', space=smem, size = 0x4, offset = 0x4, fixed_abs, tag = 'smem constant byte address 0x4 - core index']
  #allocation1 [shape = 'u32[144,128]{1,0:T(1,128)}', space=vmem, size = 0x12000, scoped, tag = 'internal scratch']
  #allocation2 [shape = 'f32[2,8,32]{2,1,0:T(8,128)}', space=vmem, size = 0x2000, scoped, tag = 'scratch operand']
  %s0 = inlined_call_operand.hbm [shape: f32[16,32], index: 0, kind: input, shape index: {}]
  %s1 = inlined_call_operand.vmem [shape: f32[32,128], index: 1, kind: input, shape index: {}]
  %s2 = inlined_call_operand.vmem [shape: f32[1,128], index: 2, kind: input, shape index: {}]
  %s3 = inlined_call_operand.hbm [shape: f32[16,64], index: 3, kind: input, shape index: {}]
  %s4 = inlined_call_operand.hbm [shape: f32[16,64], index: 4, kind: input, shape index: {}]
  %s5 = inlined_call_operand.vmem [shape: f32[32,32], index: 5, kind: input, shape index: {}]
  %s6 = inlined_call_operand.vmem [shape: f32[1,32], index: 6, kind: input, shape index: {}]
  %s7 = inlined_call_operand.vmem [shape: f32[1,32], index: 7, kind: input, shape index: {}]
  %s8 = inlined_call_operand.vmem [shape: f32[1,32], index: 8, kind: input, shape index: {}]
  %s9 = inlined_call_operand.vmem [shape: f32[32,96], index: 9, kind: input, shape index: {}]
  %s10 = inlined_call_operand.vmem [shape: f32[1,96], index: 10, kind: input, shape index: {}]
  %s11 = inlined_call_operand.vmem [shape: f32[32,32], index: 11, kind: input, shape index: {}]
  %s12 = inlined_call_operand.vmem [shape: f32[1,32], index: 12, kind: input, shape index: {}]
  %s13 = inlined_call_operand.vmem [shape: f32[1,32], index: 13, kind: input, shape index: {}]
  %s14 = inlined_call_operand.vmem [shape: f32[1,32], index: 14, kind: input, shape index: {}]
  %s15 = inlined_call_operand.vmem [shape: f32[32,128], index: 15, kind: input, shape index: {}]
  %s16 = inlined_call_operand.vmem [shape: f32[1,128], index: 16, kind: input, shape index: {}]
  %s17 = inlined_call_operand.vmem [shape: f32[128,32], index: 17, kind: input, shape index: {}]
  %s18 = inlined_call_operand.vmem [shape: f32[1,32], index: 18, kind: input, shape index: {}]
  %s19 = inlined_call_operand.hbm [shape: f32[16,32], index: 19, kind: output, shape index: {}]
  %s20 = sld [smem:[#allocation0]]
  $region98: #{tpu_custom_call.1} parent=0
    _
  %s22 = ssub.s32 1, %s20
  %s23 = scalar_select 0, %s22, %s20
  $region1: #{tpu_custom_call.1} parent=0
    #allocation3 [shape = 'u8[8192]{0}', space=vmem, size = 0x2000, scoped, tag = 'input window, operand 0, single buffered']
    #allocation4 [shape = 's32[1]{0}', space=sflag, size = 0x4, scoped, tag = 'scoped memory for tpu_custom_call.1']
    #allocation5 [shape = 's32[1]{0}', space=sflag, size = 0x4, scoped, tag = 'scoped memory for tpu_custom_call.1']
    #allocation6 [shape = 'u8[8192]{0}', space=vmem, size = 0x2000, scoped, tag = 'input window, operand 3, single buffered']
    #allocation7 [shape = 's32[1]{0}', space=sflag, size = 0x4, scoped, tag = 'scoped memory for tpu_custom_call.1']
    #allocation8 [shape = 'u8[8192]{0}', space=vmem, size = 0x2000, scoped, tag = 'input window, operand 4, single buffered']
    #allocation9 [shape = 'u8[8192]{0}', space=vmem, size = 0x2000, scoped, tag = 'output window, operand 0, single buffered']
    %24 = vsyncpa [#allocation4], 0
    %25 = vsyncpa [#allocation7], 0
    %26 = vsyncpa [#allocation5], 0
    // Predicated region
    $region2: #{tpu_custom_call.1} parent=1 // pred_check
      _
    $region3: #{tpu_custom_call.1} parent=1 // pred_check_branch
      %28 = sbr.rel (0) target = $region5
    $region4: #{tpu_custom_call.1} parent=1 // pred_region
      %s30 = ssub.s32 256, 256
      %31 = vsyncadd [#allocation4], %s30
      %s32 = sshll.u32 [#allocation3], 4
      %s33 = int_to_ptr.vmem [resolvable:$true] %s32
      %38 = dma.hbm_to_vmem [thread:$0]  %s0, 256, %s33, [#allocation4], 128, 128, 8
    $region5: #{tpu_custom_call.1} parent=1 // pred_fallthru
      _
    // Predicated region
    $region6: #{tpu_custom_call.1} parent=1 // pred_check
      _
    $region7: #{tpu_custom_call.1} parent=1 // pred_check_branch
      %40 = sbr.rel (0) target = $region9
    $region8: #{tpu_custom_call.1} parent=1 // pred_region
      _
    $region9: #{tpu_custom_call.1} parent=1 // pred_fallthru
      _
    // Predicated region
    $region10: #{tpu_custom_call.1} parent=1 // pred_check
      _
    $region11: #{tpu_custom_call.1} parent=1 // pred_check_branch
      %42 = sbr.rel (0) target = $region13
    $region12: #{tpu_custom_call.1} parent=1 // pred_region
      _
    $region13: #{tpu_custom_call.1} parent=1 // pred_fallthru
      _
    // Predicated region
    $region14: #{tpu_custom_call.1} parent=1 // pred_check
      _
    $region15: #{tpu_custom_call.1} parent=1 // pred_check_branch
      %44 = sbr.rel (0) target = $region17
    $region16: #{tpu_custom_call.1} parent=1 // pred_region
      %s46 = ssub.s32 256, 256
      %47 = vsyncadd [#allocation7], %s46
      %s48 = sshll.u32 [#allocation6], 4
      %s49 = int_to_ptr.vmem [resolvable:$true] %s48
      %54 = dma.hbm_to_vmem [thread:$0]  %s3, 256, %s49, [#allocation7], 128, 128, 8
    $region17: #{tpu_custom_call.1} parent=1 // pred_fallthru
      _
    // Predicated region
    $region18: #{tpu_custom_call.1} parent=1 // pred_check
      _
    $region19: #{tpu_custom_call.1} parent=1 // pred_check_branch
      %56 = sbr.rel (0) target = $region21
    $region20: #{tpu_custom_call.1} parent=1 // pred_region
      %s58 = ssub.s32 256, 256
      %59 = vsyncadd [#allocation7], %s58
      %s60 = sshll.u32 [#allocation8], 4
      %s61 = int_to_ptr.vmem [resolvable:$true] %s60
      %66 = dma.hbm_to_vmem [thread:$0]  %s4, 256, %s61, [#allocation7], 128, 128, 8
    $region21: #{tpu_custom_call.1} parent=1 // pred_fallthru
      _
    // Predicated region
    $region22: #{tpu_custom_call.1} parent=1 // pred_check
      _
    $region23: #{tpu_custom_call.1} parent=1 // pred_check_branch
      %68 = sbr.rel (0) target = $region25
    $region24: #{tpu_custom_call.1} parent=1 // pred_region
      _
    $region25: #{tpu_custom_call.1} parent=1 // pred_fallthru
      _
    // Predicated region
    $region26: #{tpu_custom_call.1} parent=1 // pred_check
      _
    $region27: #{tpu_custom_call.1} parent=1 // pred_check_branch
      %70 = sbr.rel (0) target = $region29
    $region28: #{tpu_custom_call.1} parent=1 // pred_region
      _
    $region29: #{tpu_custom_call.1} parent=1 // pred_fallthru
      _
    // Predicated region
    $region30: #{tpu_custom_call.1} parent=1 // pred_check
      _
    $region31: #{tpu_custom_call.1} parent=1 // pred_check_branch
      %72 = sbr.rel (0) target = $region33
    $region32: #{tpu_custom_call.1} parent=1 // pred_region
      _
    $region33: #{tpu_custom_call.1} parent=1 // pred_fallthru
      _
    // Predicated region
    $region34: #{tpu_custom_call.1} parent=1 // pred_check
      _
    $region35: #{tpu_custom_call.1} parent=1 // pred_check_branch
      %74 = sbr.rel (0) target = $region37
    $region36: #{tpu_custom_call.1} parent=1 // pred_region
      _
    $region37: #{tpu_custom_call.1} parent=1 // pred_fallthru
      _
    // Predicated region
    $region38: #{tpu_custom_call.1} parent=1 // pred_check
      _
    $region39: #{tpu_custom_call.1} parent=1 // pred_check_branch
      %76 = sbr.rel (0) target = $region41
    $region40: #{tpu_custom_call.1} parent=1 // pred_region
      _
    $region41: #{tpu_custom_call.1} parent=1 // pred_fallthru
      _
    // Predicated region
    $region42: #{tpu_custom_call.1} parent=1 // pred_check
      _
    $region43: #{tpu_custom_call.1} parent=1 // pred_check_branch
      %78 = sbr.rel (0) target = $region45
    $region44: #{tpu_custom_call.1} parent=1 // pred_region
      _
    $region45: #{tpu_custom_call.1} parent=1 // pred_fallthru
      _
    // Predicated region
    $region46: #{tpu_custom_call.1} parent=1 // pred_check
      _
    $region47: #{tpu_custom_call.1} parent=1 // pred_check_branch
      %80 = sbr.rel (0) target = $region49
    $region48: #{tpu_custom_call.1} parent=1 // pred_region
      _
    $region49: #{tpu_custom_call.1} parent=1 // pred_fallthru
      _
    // Predicated region
    $region50: #{tpu_custom_call.1} parent=1 // pred_check
      _
    $region51: #{tpu_custom_call.1} parent=1 // pred_check_branch
      %82 = sbr.rel (0) target = $region53
    $region52: #{tpu_custom_call.1} parent=1 // pred_region
      _
    $region53: #{tpu_custom_call.1} parent=1 // pred_fallthru
      _
    // Predicated region
    $region54: #{tpu_custom_call.1} parent=1 // pred_check
      _
    $region55: #{tpu_custom_call.1} parent=1 // pred_check_branch
      %84 = sbr.rel (0) target = $region57
    $region56: #{tpu_custom_call.1} parent=1 // pred_region
      _
    $region57: #{tpu_custom_call.1} parent=1 // pred_fallthru
      _
    // Predicated region
    $region58: #{tpu_custom_call.1} parent=1 // pred_check
      _
    $region59: #{tpu_custom_call.1} parent=1 // pred_check_branch
      %86 = sbr.rel (0) target = $region61
    $region60: #{tpu_custom_call.1} parent=1 // pred_region
      _
    $region61: #{tpu_custom_call.1} parent=1 // pred_fallthru
      _
    // Predicated region
    $region62: #{tpu_custom_call.1} parent=1 // pred_check
      _
    $region63: #{tpu_custom_call.1} parent=1 // pred_check_branch
      %88 = sbr.rel (0) target = $region65
    $region64: #{tpu_custom_call.1} parent=1 // pred_region
      _
    $region65: #{tpu_custom_call.1} parent=1 // pred_fallthru
      _
    // Predicated region
    $region66: #{tpu_custom_call.1} parent=1 // pred_check
      _
    $region67: #{tpu_custom_call.1} parent=1 // pred_check_branch
      %90 = sbr.rel (0) target = $region69
    $region68: #{tpu_custom_call.1} parent=1 // pred_region
      _
    $region69: #{tpu_custom_call.1} parent=1 // pred_fallthru
      _
    // Predicated region
    $region70: #{tpu_custom_call.1} parent=1 // pred_check
      _
    $region71: #{tpu_custom_call.1} parent=1 // pred_check_branch
      %92 = sbr.rel (0) target = $region73
    $region72: #{tpu_custom_call.1} parent=1 // pred_region
      _
    $region73: #{tpu_custom_call.1} parent=1 // pred_fallthru
      _
    // Predicated region
    $region74: #{tpu_custom_call.1} parent=1 // pred_check
      _
    $region75: #{tpu_custom_call.1} parent=1 // pred_check_branch
      %94 = sbr.rel (0) target = $region77
    $region76: #{tpu_custom_call.1} parent=1 // pred_region
      _
    $region77: #{tpu_custom_call.1} parent=1 // pred_fallthru
      _
    // Predicated region
    $region78: #{tpu_custom_call.1} parent=1 // pred_check
      _
    $region79: #{tpu_custom_call.1} parent=1 // pred_check_branch
      %96 = sbr.rel (0) target = $region81
    $region80: #{tpu_custom_call.1} parent=1 // pred_region
      %97 = dma.done [#allocation4], 256
    $region81: #{tpu_custom_call.1} parent=1 // pred_fallthru
      _
    // Predicated region
    $region82: #{tpu_custom_call.1} parent=1 // pred_check
      _
    $region83: #{tpu_custom_call.1} parent=1 // pred_check_branch
      %99 = sbr.rel (0) target = $region85
    $region84: #{tpu_custom_call.1} parent=1 // pred_region
      %100 = dma.done [#allocation7], 256
    $region85: #{tpu_custom_call.1} parent=1 // pred_fallthru
      _
    // Predicated region
    $region86: #{tpu_custom_call.1} parent=1 // pred_check
      _
    $region87: #{tpu_custom_call.1} parent=1 // pred_check_branch
      %102 = sbr.rel (0) target = $region89
    $region88: #{tpu_custom_call.1} parent=1 // pred_region
      %103 = dma.done [#allocation7], 256
    $region89: #{tpu_custom_call.1} parent=1 // pred_fallthru
      _
    %v104 = vld [vmem:[#allocation3] sm:$0xff]
    %v105 = vld [vmem:[#allocation3 + $0x8] sm:$0xff]
    %v106 = vld [vmem:[%s1] sm:$0xff]
    %v107 = vld [vmem:[%s1 + $0x8] sm:$0xff]
    %v108 = vld [vmem:[%s1 + $0x10] sm:$0xff]
    %v109 = vld [vmem:[%s1 + $0x18] sm:$0xff]
    %v110 = vld [vmem:[%s2] sm:$0x1]
    %v112 = vlaneseq
    %v113 = vshrl.u32 %v112, 7
    %v114 = vsub.s32 0, %v113
    %v115 = vrot.slane %v110, %v114
    %vm117 = vcmask 261120
    %v119 = vsel %vm117, %v104, 0
    %v122 = vsel %vm117, %v105, 0
    %124 = vmatprep.subr.mxu0 0.0
    %125 = vmatpush1.msra.mxu0 %v106
    %126 = vmatprep.subr.mxu0 0.0
    %127 = vmatpush1.msra.mxu0 %v107
    %128 = vmatprep.subr.mxu0 0.0
    %129 = vmatpush1.msra.mxu0 %v108
    %130 = vmatprep.subr.mxu0 0.0
    %131 = vmatpush1.msra.mxu0 %v109
    %132 = vmatprep.subr.mxu0 0.0
    %133 = vmatpush1.msra.mxu0 0.0
    %134 = vmatprep.subr.mxu0 0.0
    %135 = vmatpush1.msra.mxu0 0.0
    %136 = vmatprep.subr.mxu0 0.0
    %137 = vmatpush1.msra.mxu0 0.0
    %138 = vmatprep.subr.mxu0 0.0
    %139 = vmatpush1.msra.mxu0 0.0
    %140 = vmatprep.subr.mxu0 0.0
    %141 = vmatpush1.msra.mxu0 0.0
    %142 = vmatprep.subr.mxu0 0.0
    %143 = vmatpush1.msra.mxu0 0.0
    %144 = vmatprep.subr.mxu0 0.0
    %145 = vmatpush1.msra.mxu0 0.0
    %146 = vmatprep.subr.mxu0 0.0
    %147 = vmatpush1.msra.mxu0 0.0
    %148 = vmatprep.subr.mxu0 0.0
    %149 = vmatpush1.msra.mxu0 0.0
    %150 = vmatprep.subr.mxu0 0.0
    %151 = vmatpush1.msra.mxu0 0.0
    %152 = vmatprep.subr.mxu0 0.0
    %153 = vmatpush1.msra.mxu0 0.0
    %154 = vmatprep.subr.mxu0 0.0
    %155 = vmatpush1.msra.mxu0 0.0
    %156 = vmatprep.subr.mxu0 0.0
    %157 = vmatpush1.msra.mxu0 0.0
    %158 = vmatprep.subr.mxu0 0.0
    %159 = vmatpush1.msra.mxu0 0.0
    %160 = vmatprep.subr.mxu0 0.0
    %161 = vmatpush1.msra.mxu0 0.0
    %162 = vmatprep.subr.mxu0 0.0
    %163 = vmatpush1.msra.mxu0 0.0
    %164 = vmatprep.subr.mxu0 0.0
    %165 = vmatpush1.msra.mxu0 0.0
    %166 = vmatprep.subr.mxu0 0.0
    %167 = vmatpush1.msra.mxu0 0.0
    %168 = vmatprep.subr.mxu0 0.0
    %169 = vmatpush1.msra.mxu0 0.0
    %170 = vmatprep.subr.mxu0 0.0
    %171 = vmatpush1.msra.mxu0 0.0
    %172 = vmatprep.subr.mxu0 0.0
    %173 = vmatpush1.msra.mxu0 0.0
    %174 = vmatprep.subr.mxu0 0.0
    %175 = vmatpush1.msra.mxu0 0.0
    %176 = vmatprep.subr.mxu0 0.0
    %177 = vmatpush1.msra.mxu0 0.0
    %178 = vmatprep.subr.mxu0 0.0
    %179 = vmatpush1.msra.mxu0 0.0
    %180 = vmatprep.subr.mxu0 0.0
    %181 = vmatpush1.msra.mxu0 0.0
    %182 = vmatprep.subr.mxu0 0.0
    %183 = vmatpush1.msra.mxu0 0.0
    %184 = vmatprep.subr.mxu0 0.0
    %185 = vmatpush1.msra.mxu0 0.0
    %186 = vmatprep.subr.mxu0 0.0
    %187 = vmatpush1.msra.mxu0 0.0
    %188 = vmatprep.mubr.f32.mxu0 0.0
    %189 = vmatmul.mubr.f32.gmra.mrb[0].mxu0 %v119
    %v190 = vpop.f32.mrb[0].mxu0
    %v191 = vadd.f32 %v115, %v190
    %v192 = vpop.f32.mrb[0].mxu0
    %193 = vmatprep.mubr.f32.mxu0 0.0
    %194 = vmatmul.mubr.f32.gmra.mrb[0].mxu0 %v122
    %v195 = vpop.f32.mrb[0].mxu0
    %v196 = vadd.f32 %v115, %v195
    %v197 = vpop.f32.mrb[0].mxu0
    %198 = vdwg.mxu0
    %v199 = vld [vmem:[#allocation6] sm:$0xff]
    %v200 = vld [vmem:[#allocation6 + $0x8] sm:$0xff]
    %v201 = vld [vmem:[#allocation8] sm:$0xff]
    %v202 = vld [vmem:[#allocation8 + $0x8] sm:$0xff]
    %vm203 = vcmask 130048
    %v205 = vsel %vm203, 0.0, 0
    %207 = vmatprep.subr.mxu0 0.0
    %208 = vmatpush1.msra.mxu0 %v199
    %209 = vmatprep.subr.mxu0 0.0
    %210 = vmatpush1.msra.mxu0 %v200
    %211 = vmatprep.subr.mxu0 0.0
    %212 = vmatpush1.msra.mxu0 0.0
    %213 = vmatprep.subr.mxu0 0.0
    %214 = vmatpush1.msra.mxu0 0.0
    %215 = vmatprep.subr.mxu0 0.0
    %216 = vmatpush1.msra.mxu0 0.0
    %217 = vmatprep.subr.mxu0 0.0
    %218 = vmatpush1.msra.mxu0 0.0
    %219 = vmatprep.subr.mxu0 0.0
    %220 = vmatpush1.msra.mxu0 0.0
    %221 = vmatprep.subr.mxu0 0.0
    %222 = vmatpush1.msra.mxu0 0.0
    %223 = vmatprep.subr.mxu0 0.0
    %224 = vmatpush1.msra.mxu0 0.0
    %225 = vmatprep.subr.mxu0 0.0
    %226 = vmatpush1.msra.mxu0 0.0
    %227 = vmatprep.subr.mxu0 0.0
    %228 = vmatpush1.msra.mxu0 0.0
    %229 = vmatprep.subr.mxu0 0.0
    %230 = vmatpush1.msra.mxu0 0.0
    %231 = vmatprep.subr.mxu0 0.0
    %232 = vmatpush1.msra.mxu0 0.0
    %233 = vmatprep.subr.mxu0 0.0
    %234 = vmatpush1.msra.mxu0 0.0
    %235 = vmatprep.subr.mxu0 0.0
    %236 = vmatpush1.msra.mxu0 0.0
    %237 = vmatprep.subr.mxu0 0.0
    %238 = vmatpush1.msra.mxu0 0.0
    %239 = vmatprep.subr.mxu0 0.0
    %240 = vmatpush1.msra.mxu0 0.0
    %241 = vmatprep.subr.mxu0 0.0
    %242 = vmatpush1.msra.mxu0 0.0
    %243 = vmatprep.subr.mxu0 0.0
    %244 = vmatpush1.msra.mxu0 0.0
    %245 = vmatprep.subr.mxu0 0.0
    %246 = vmatpush1.msra.mxu0 0.0
    %247 = vmatprep.subr.mxu0 0.0
    %248 = vmatpush1.msra.mxu0 0.0
    %249 = vmatprep.subr.mxu0 0.0
    %250 = vmatpush1.msra.mxu0 0.0
    %251 = vmatprep.subr.mxu0 0.0
    %252 = vmatpush1.msra.mxu0 0.0
    %253 = vmatprep.subr.mxu0 0.0
    %254 = vmatpush1.msra.mxu0 0.0
    %255 = vmatprep.subr.mxu0 0.0
    %256 = vmatpush1.msra.mxu0 0.0
    %257 = vmatprep.subr.mxu0 0.0
    %258 = vmatpush1.msra.mxu0 0.0
    %259 = vmatprep.subr.mxu0 0.0
    %260 = vmatpush1.msra.mxu0 0.0
    %261 = vmatprep.subr.mxu0 0.0
    %262 = vmatpush1.msra.mxu0 0.0
    %263 = vmatprep.subr.mxu0 0.0
    %264 = vmatpush1.msra.mxu0 0.0
    %265 = vmatprep.subr.mxu0 0.0
    %266 = vmatpush1.msra.mxu0 0.0
    %267 = vmatprep.subr.mxu0 0.0
    %268 = vmatpush1.msra.mxu0 0.0
    %269 = vmatprep.subr.mxu0 0.0
    %270 = vmatpush1.msra.mxu0 0.0
    %271 = vmatprep.mubr.f32.mxu0 0.0
    %272 = vmatmul.mubr.f32.gmra.mrb[0].mxu0 %v205
    %v273 = vpop.f32.mrb[0].mxu0
    %v274 = vadd.f32 0.0, %v273
    %v275 = vpop.f32.mrb[0].mxu0
    %276 = vdwg.mxu0
    %v278 = vrot.slane %v274, 1
    %v281 = vadd.f32 %v191, %v274
    %v282 = vadd.f32 %v196, %v278
    %283 = vmatprep.subr.mxu0 0.0
    %284 = vmatpush1.msra.mxu0 %v201
    %285 = vmatprep.subr.mxu0 0.0
    %286 = vmatpush1.msra.mxu0 %v202
    %287 = vmatprep.subr.mxu0 0.0
    %288 = vmatpush1.msra.mxu0 0.0
    %289 = vmatprep.subr.mxu0 0.0
    %290 = vmatpush1.msra.mxu0 0.0
    %291 = vmatprep.subr.mxu0 0.0
    %292 = vmatpush1.msra.mxu0 0.0
    %293 = vmatprep.subr.mxu0 0.0
    %294 = vmatpush1.msra.mxu0 0.0
    %295 = vmatprep.subr.mxu0 0.0
    %296 = vmatpush1.msra.mxu0 0.0
    %297 = vmatprep.subr.mxu0 0.0
    %298 = vmatpush1.msra.mxu0 0.0
    %299 = vmatprep.subr.mxu0 0.0
    %300 = vmatpush1.msra.mxu0 0.0
    %301 = vmatprep.subr.mxu0 0.0
    %302 = vmatpush1.msra.mxu0 0.0
    %303 = vmatprep.subr.mxu0 0.0
    %304 = vmatpush1.msra.mxu0 0.0
    %305 = vmatprep.subr.mxu0 0.0
    %306 = vmatpush1.msra.mxu0 0.0
    %307 = vmatprep.subr.mxu0 0.0
    %308 = vmatpush1.msra.mxu0 0.0
    %309 = vmatprep.subr.mxu0 0.0
    %310 = vmatpush1.msra.mxu0 0.0
    %311 = vmatprep.subr.mxu0 0.0
    %312 = vmatpush1.msra.mxu0 0.0
    %313 = vmatprep.subr.mxu0 0.0
    %314 = vmatpush1.msra.mxu0 0.0
    %315 = vmatprep.subr.mxu0 0.0
    %316 = vmatpush1.msra.mxu0 0.0
    %317 = vmatprep.subr.mxu0 0.0
    %318 = vmatpush1.msra.mxu0 0.0
    %319 = vmatprep.subr.mxu0 0.0
    %320 = vmatpush1.msra.mxu0 0.0
    %321 = vmatprep.subr.mxu0 0.0
    %322 = vmatpush1.msra.mxu0 0.0
    %323 = vmatprep.subr.mxu0 0.0
    %324 = vmatpush1.msra.mxu0 0.0
    %325 = vmatprep.subr.mxu0 0.0
    %326 = vmatpush1.msra.mxu0 0.0
    %327 = vmatprep.subr.mxu0 0.0
    %328 = vmatpush1.msra.mxu0 0.0
    %329 = vmatprep.subr.mxu0 0.0
    %330 = vmatpush1.msra.mxu0 0.0
    %331 = vmatprep.subr.mxu0 0.0
    %332 = vmatpush1.msra.mxu0 0.0
    %333 = vmatprep.subr.mxu0 0.0
    %334 = vmatpush1.msra.mxu0 0.0
    %335 = vmatprep.subr.mxu0 0.0
    %336 = vmatpush1.msra.mxu0 0.0
    %337 = vmatprep.subr.mxu0 0.0
    %338 = vmatpush1.msra.mxu0 0.0
    %339 = vmatprep.subr.mxu0 0.0
    %340 = vmatpush1.msra.mxu0 0.0
    %341 = vmatprep.subr.mxu0 0.0
    %342 = vmatpush1.msra.mxu0 0.0
    %343 = vmatprep.subr.mxu0 0.0
    %344 = vmatpush1.msra.mxu0 0.0
    %345 = vmatprep.subr.mxu0 0.0
    %346 = vmatpush1.msra.mxu0 0.0
    %347 = vmatprep.mubr.f32.mxu0 0.0
    %348 = vmatmul.mubr.f32.gmra.mrb[0].mxu0 %v205
    %v349 = vpop.f32.mrb[0].mxu0
    %v350 = vadd.f32 0.0, %v349
    %v351 = vpop.f32.mrb[0].mxu0
    %352 = vdwg.mxu0
    %v354 = vrot.slane %v350, 1
    %v355 = vrot.slane %v350, 2
    %356 = vrot.lane.b32.xlu0 %v354, 64
    %v357 = vpop.permute.xlu0 %356
    %358 = vrot.lane.b32.xlu0 %v355, 64
    %v359 = vpop.permute.xlu0 %358
    %v362 = vadd.f32 %v191, %v357
    %v363 = vadd.f32 %v196, %v359
    %v364 = vsub.f32 0.0, %v281
    %v365 = vsub.f32 0.0, %v282
    %v366 = vmul.f32 %v364, 1.442695
    %v367 = vpow.pop %v366
    %v368 = vmul.f32 %v365, 1.442695
    %v369 = vpow.pop %v368
    %v370 = vadd.f32 %v367, 1.0
    %v371 = vadd.f32 %v369, 1.0
    %v372 = vrcp.pop %v370
    %v373 = vmul.f32 1.0, %v372
    %v374 = vrcp.pop %v371
    %v375 = vmul.f32 1.0, %v374
    %v376 = vtanh.pop %v281
    %v377 = vtanh.pop %v282
    %v378 = vmul.f32 %v373, 0.0
    %v379 = vmul.f32 %v375, 0.0
    %382 = vrot.lane.b32.xlu0 %v376, 96
    %v383 = vpop.permute.xlu0 %382
    %384 = vrot.lane.b32.xlu0 %v377, 96
    %v385 = vpop.permute.xlu0 %384
    %v388 = vmul.f32 %v373, %v383
    %v389 = vmul.f32 %v375, %v385
    %392 = vrot.lane.b32.xlu0 %v388, 16
    %v393 = vpop.permute.xlu0 %392
    %394 = vrot.lane.b32.xlu0 %v389, 16
    %v395 = vpop.permute.xlu0 %394
    %v398 = vadd.f32 %v378, %v393
    %v399 = vadd.f32 %v379, %v395
    %v400 = vtanh.pop %v398
    %v401 = vtanh.pop %v399
    %404 = vrot.lane.b32.xlu0 %v400, 32
    %v405 = vpop.permute.xlu0 %404
    %406 = vrot.lane.b32.xlu0 %v401, 32
    %v407 = vpop.permute.xlu0 %406
    %v410 = vmul.f32 %v373, %v405
    %v411 = vmul.f32 %v375, %v407
    %v412 = vsub.f32 0.0, %v362
    %v413 = vsub.f32 0.0, %v363
    %v414 = vmul.f32 %v412, 1.442695
    %v415 = vpow.pop %v414
    %v416 = vmul.f32 %v413, 1.442695
    %v417 = vpow.pop %v416
    %v418 = vadd.f32 %v415, 1.0
    %v419 = vadd.f32 %v417, 1.0
    %v420 = vrcp.pop %v418
    %v421 = vmul.f32 1.0, %v420
    %v422 = vrcp.pop %v419
    %v423 = vmul.f32 1.0, %v422
    %v424 = vtanh.pop %v362
    %v425 = vtanh.pop %v363
    %v426 = vmul.f32 %v421, 0.0
    %v427 = vmul.f32 %v423, 0.0
    %430 = vrot.lane.b32.xlu0 %v424, 96
    %v431 = vpop.permute.xlu0 %430
    %432 = vrot.lane.b32.xlu0 %v425, 96
    %v433 = vpop.permute.xlu0 %432
    %v436 = vmul.f32 %v421, %v431
    %v437 = vmul.f32 %v423, %v433
    %440 = vrot.lane.b32.xlu0 %v436, 16
    %v441 = vpop.permute.xlu0 %440
    %442 = vrot.lane.b32.xlu0 %v437, 16
    %v443 = vpop.permute.xlu0 %442
    %v446 = vadd.f32 %v426, %v441
    %v447 = vadd.f32 %v427, %v443
    %v448 = vtanh.pop %v446
    %v449 = vtanh.pop %v447
    %452 = vrot.lane.b32.xlu0 %v448, 32
    %v453 = vpop.permute.xlu0 %452
    %454 = vrot.lane.b32.xlu0 %v449, 32
    %v455 = vpop.permute.xlu0 %454
    %v458 = vmul.f32 %v421, %v453
    %v459 = vmul.f32 %v423, %v455
    %462 = vrot.lane.b32.xlu0 %v410, 80
    %v463 = vpop.permute.xlu0 %462
    %464 = vrot.lane.b32.xlu0 %v411, 80
    %v465 = vpop.permute.xlu0 %464
    %vm468 = vcmask 122880
    %469 = vst.msk [vmem:[#allocation2] sm:$0x1] %vm468, %v463
    %470 = vst.msk [vmem:[#allocation2 + $0x8] sm:$0x1] %vm468, %v465
    %473 = vrot.lane.b32.xlu0 %v458, 32
    %v474 = vpop.permute.xlu0 %473
    %475 = vrot.lane.b32.xlu0 %v459, 32
    %v476 = vpop.permute.xlu0 %475
    %vm479 = vcmask 261255
    %480 = vst.msk [vmem:[#allocation2] sm:$0x80] %vm479, %v474
    %481 = vst.msk [vmem:[#allocation2 + $0x8] sm:$0x80] %vm479, %v476
    %v482 = vrot.slane %v411, 7
    %vm483 = vcmask 1041409
    %v484 = vsel %vm483, %v482, %v410
    %485 = vrot.lane.b32.xlu0 %v484, 80
    %v486 = vpop.permute.xlu0 %485
    %v487 = vsel %vm203, %v486, 0
    %489 = vmatprep.subr.mxu0 0.0
    %490 = vmatpush1.msra.mxu0 %v199
    %491 = vmatprep.subr.mxu0 0.0
    %492 = vmatpush1.msra.mxu0 %v200
    %493 = vmatprep.subr.mxu0 0.0
    %494 = vmatpush1.msra.mxu0 0.0
    %495 = vmatprep.subr.mxu0 0.0
    %496 = vmatpush1.msra.mxu0 0.0
    %497 = vmatprep.subr.mxu0 0.0
    %498 = vmatpush1.msra.mxu0 0.0
    %499 = vmatprep.subr.mxu0 0.0
    %500 = vmatpush1.msra.mxu0 0.0
    %501 = vmatprep.subr.mxu0 0.0
    %502 = vmatpush1.msra.mxu0 0.0
    %503 = vmatprep.subr.mxu0 0.0
    %504 = vmatpush1.msra.mxu0 0.0
    %505 = vmatprep.subr.mxu0 0.0
    %506 = vmatpush1.msra.mxu0 0.0
    %507 = vmatprep.subr.mxu0 0.0
    %508 = vmatpush1.msra.mxu0 0.0
    %509 = vmatprep.subr.mxu0 0.0
    %510 = vmatpush1.msra.mxu0 0.0
    %511 = vmatprep.subr.mxu0 0.0
    %512 = vmatpush1.msra.mxu0 0.0
    %513 = vmatprep.subr.mxu0 0.0
    %514 = vmatpush1.msra.mxu0 0.0
    %515 = vmatprep.subr.mxu0 0.0
    %516 = vmatpush1.msra.mxu0 0.0
    %517 = vmatprep.subr.mxu0 0.0
    %518 = vmatpush1.msra.mxu0 0.0
    %519 = vmatprep.subr.mxu0 0.0
    %520 = vmatpush1.msra.mxu0 0.0
    %521 = vmatprep.subr.mxu0 0.0
    %522 = vmatpush1.msra.mxu0 0.0
    %523 = vmatprep.subr.mxu0 0.0
    %524 = vmatpush1.msra.mxu0 0.0
    %525 = vmatprep.subr.mxu0 0.0
    %526 = vmatpush1.msra.mxu0 0.0
    %527 = vmatprep.subr.mxu0 0.0
    %528 = vmatpush1.msra.mxu0 0.0
    %529 = vmatprep.subr.mxu0 0.0
    %530 = vmatpush1.msra.mxu0 0.0
    %531 = vmatprep.subr.mxu0 0.0
    %532 = vmatpush1.msra.mxu0 0.0
    %533 = vmatprep.subr.mxu0 0.0
    %534 = vmatpush1.msra.mxu0 0.0
    %535 = vmatprep.subr.mxu0 0.0
    %536 = vmatpush1.msra.mxu0 0.0
    %537 = vmatprep.subr.mxu0 0.0
    %538 = vmatpush1.msra.mxu0 0.0
    %539 = vmatprep.subr.mxu0 0.0
    %540 = vmatpush1.msra.mxu0 0.0
    %541 = vmatprep.subr.mxu0 0.0
    %542 = vmatpush1.msra.mxu0 0.0
    %543 = vmatprep.subr.mxu0 0.0
    %544 = vmatpush1.msra.mxu0 0.0
    %545 = vmatprep.subr.mxu0 0.0
    %546 = vmatpush1.msra.mxu0 0.0
    %547 = vmatprep.subr.mxu0 0.0
    %548 = vmatpush1.msra.mxu0 0.0
    %549 = vmatprep.subr.mxu0 0.0
    %550 = vmatpush1.msra.mxu0 0.0
    %551 = vmatprep.subr.mxu0 0.0
    %552 = vmatpush1.msra.mxu0 0.0
    %553 = vmatprep.mubr.f32.mxu0 0.0
    %554 = vmatmul.mubr.f32.gmra.mrb[0].mxu0 %v487
    %v555 = vpop.f32.mrb[0].mxu0
    %v556 = vadd.f32 0.0, %v555
    %v557 = vpop.f32.mrb[0].mxu0
    %558 = vdwg.mxu0
    %v560 = vrot.slane %v556, 7
    %v563 = vadd.f32 %v191, %v560
    %v564 = vadd.f32 %v196, %v556
    %v565 = vrot.slane %v458, 7
    %v566 = vrot.slane %v459, 6
    %v567 = vsel %vm483, %v566, %v565
    %568 = vrot.lane.b32.xlu0 %v567, 16
    %v569 = vpop.permute.xlu0 %568
    %v570 = vsel %vm203, %v569, 0
    %572 = vmatprep.subr.mxu0 0.0
    %573 = vmatpush1.msra.mxu0 %v201
    %574 = vmatprep.subr.mxu0 0.0
    %575 = vmatpush1.msra.mxu0 %v202
    %576 = vmatprep.subr.mxu0 0.0
    %577 = vmatpush1.msra.mxu0 0.0
    %578 = vmatprep.subr.mxu0 0.0
    %579 = vmatpush1.msra.mxu0 0.0
    %580 = vmatprep.subr.mxu0 0.0
    %581 = vmatpush1.msra.mxu0 0.0
    %582 = vmatprep.subr.mxu0 0.0
    %583 = vmatpush1.msra.mxu0 0.0
    %584 = vmatprep.subr.mxu0 0.0
    %585 = vmatpush1.msra.mxu0 0.0
    %586 = vmatprep.subr.mxu0 0.0
    %587 = vmatpush1.msra.mxu0 0.0
    %588 = vmatprep.subr.mxu0 0.0
    %589 = vmatpush1.msra.mxu0 0.0
    %590 = vmatprep.subr.mxu0 0.0
    %591 = vmatpush1.msra.mxu0 0.0
    %592 = vmatprep.subr.mxu0 0.0
    %593 = vmatpush1.msra.mxu0 0.0
    %594 = vmatprep.subr.mxu0 0.0
    %595 = vmatpush1.msra.mxu0 0.0
    %596 = vmatprep.subr.mxu0 0.0
    %597 = vmatpush1.msra.mxu0 0.0
    %598 = vmatprep.subr.mxu0 0.0
    %599 = vmatpush1.msra.mxu0 0.0
    %600 = vmatprep.subr.mxu0 0.0
    %601 = vmatpush1.msra.mxu0 0.0
    %602 = vmatprep.subr.mxu0 0.0
    %603 = vmatpush1.msra.mxu0 0.0
    %604 = vmatprep.subr.mxu0 0.0
    %605 = vmatpush1.msra.mxu0 0.0
    %606 = vmatprep.subr.mxu0 0.0
    %607 = vmatpush1.msra.mxu0 0.0
    %608 = vmatprep.subr.mxu0 0.0
    %609 = vmatpush1.msra.mxu0 0.0
    %610 = vmatprep.subr.mxu0 0.0
    %611 = vmatpush1.msra.mxu0 0.0
    %612 = vmatprep.subr.mxu0 0.0
    %613 = vmatpush1.msra.mxu0 0.0
    %614 = vmatprep.subr.mxu0 0.0
    %615 = vmatpush1.msra.mxu0 0.0
    %616 = vmatprep.subr.mxu0 0.0
    %617 = vmatpush1.msra.mxu0 0.0
    %618 = vmatprep.subr.mxu0 0.0
    %619 = vmatpush1.msra.mxu0 0.0
    %620 = vmatprep.subr.mxu0 0.0
    %621 = vmatpush1.msra.mxu0 0.0
    %622 = vmatprep.subr.mxu0 0.0
    %623 = vmatpush1.msra.mxu0 0.0
    %624 = vmatprep.subr.mxu0 0.0
    %625 = vmatpush1.msra.mxu0 0.0
    %626 = vmatprep.subr.mxu0 0.0
    %627 = vmatpush1.msra.mxu0 0.0
    %628 = vmatprep.subr.mxu0 0.0
    %629 = vmatpush1.msra.mxu0 0.0
    %630 = vmatprep.subr.mxu0 0.0
    %631 = vmatpush1.msra.mxu0 0.0
    %632 = vmatprep.subr.mxu0 0.0
    %633 = vmatpush1.msra.mxu0 0.0
    %634 = vmatprep.subr.mxu0 0.0
    %635 = vmatpush1.msra.mxu0 0.0
    %636 = vmatprep.mubr.f32.mxu0 0.0
    %637 = vmatmul.mubr.f32.gmra.mrb[0].mxu0 %v570
    %v638 = vpop.f32.mrb[0].mxu0
    %v639 = vadd.f32 0.0, %v638
    %v640 = vpop.f32.mrb[0].mxu0
    %641 = vdwg.mxu0
    %v643 = vrot.slane %v639, 2
    %v644 = vrot.slane %v639, 3
    %645 = vrot.lane.b32.xlu0 %v643, 64
    %v646 = vpop.permute.xlu0 %645
    %647 = vrot.lane.b32.xlu0 %v644, 64
    %v648 = vpop.permute.xlu0 %647
    %v651 = vadd.f32 %v191, %v646
    %v652 = vadd.f32 %v196, %v648
    %v653 = vsub.f32 0.0, %v563
    %v654 = vsub.f32 0.0, %v564
    %v655 = vmul.f32 %v653, 1.442695
    %v656 = vpow.pop %v655
    %v657 = vmul.f32 %v654, 1.442695
    %v658 = vpow.pop %v657
    %v659 = vadd.f32 %v656, 1.0
    %v660 = vadd.f32 %v658, 1.0
    %v661 = vrcp.pop %v659
    %v662 = vmul.f32 1.0, %v661
    %v663 = vrcp.pop %v660
    %v664 = vmul.f32 1.0, %v663
    %v665 = vtanh.pop %v563
    %v666 = vtanh.pop %v564
    %v669 = vrot.slane %v398, 7
    %v670 = vrot.slane %v399, 7
    %v673 = vmul.f32 %v662, %v669
    %v674 = vmul.f32 %v664, %v670
    %677 = vrot.lane.b32.xlu0 %v665, 96
    %v678 = vpop.permute.xlu0 %677
    %679 = vrot.lane.b32.xlu0 %v666, 96
    %v680 = vpop.permute.xlu0 %679
    %v683 = vmul.f32 %v662, %v678
    %v684 = vmul.f32 %v664, %v680
    %687 = vrot.lane.b32.xlu0 %v683, 16
    %v688 = vpop.permute.xlu0 %687
    %689 = vrot.lane.b32.xlu0 %v684, 16
    %v690 = vpop.permute.xlu0 %689
    %v693 = vadd.f32 %v673, %v688
    %v694 = vadd.f32 %v674, %v690
    %v695 = vtanh.pop %v693
    %v696 = vtanh.pop %v694
    %699 = vrot.lane.b32.xlu0 %v695, 32
    %v700 = vpop.permute.xlu0 %699
    %701 = vrot.lane.b32.xlu0 %v696, 32
    %v702 = vpop.permute.xlu0 %701
    %v705 = vmul.f32 %v662, %v700
    %v706 = vmul.f32 %v664, %v702
    %v707 = vsub.f32 0.0, %v651
    %v708 = vsub.f32 0.0, %v652
    %v709 = vmul.f32 %v707, 1.442695
    %v710 = vpow.pop %v709
    %v711 = vmul.f32 %v708, 1.442695
    %v712 = vpow.pop %v711
    %v713 = vadd.f32 %v710, 1.0
    %v714 = vadd.f32 %v712, 1.0
    %v715 = vrcp.pop %v713
    %v716 = vmul.f32 1.0, %v715
    %v717 = vrcp.pop %v714
    %v718 = vmul.f32 1.0, %v717
    %v719 = vtanh.pop %v651
    %v720 = vtanh.pop %v652
    %v723 = vrot.slane %v446, 1
    %v724 = vrot.slane %v447, 1
    %v727 = vmul.f32 %v716, %v723
    %v728 = vmul.f32 %v718, %v724
    %731 = vrot.lane.b32.xlu0 %v719, 96
    %v732 = vpop.permute.xlu0 %731
    %733 = vrot.lane.b32.xlu0 %v720, 96
    %v734 = vpop.permute.xlu0 %733
    %v737 = vmul.f32 %v716, %v732
    %v738 = vmul.f32 %v718, %v734
    %741 = vrot.lane.b32.xlu0 %v737, 16
    %v742 = vpop.permute.xlu0 %741
    %743 = vrot.lane.b32.xlu0 %v738, 16
    %v744 = vpop.permute.xlu0 %743
    %v747 = vadd.f32 %v727, %v742
    %v748 = vadd.f32 %v728, %v744
    %v749 = vtanh.pop %v747
    %v750 = vtanh.pop %v748
    %753 = vrot.lane.b32.xlu0 %v749, 32
    %v754 = vpop.permute.xlu0 %753
    %755 = vrot.lane.b32.xlu0 %v750, 32
    %v756 = vpop.permute.xlu0 %755
    %v759 = vmul.f32 %v716, %v754
    %v760 = vmul.f32 %v718, %v756
    %763 = vrot.lane.b32.xlu0 %v705, 80
    %v764 = vpop.permute.xlu0 %763
    %765 = vrot.lane.b32.xlu0 %v706, 80
    %v766 = vpop.permute.xlu0 %765
    %vm769 = vcmask 123905
    %770 = vst.msk [vmem:[#allocation2] sm:$0x2] %vm769, %v764
    %771 = vst.msk [vmem:[#allocation2 + $0x8] sm:$0x2] %vm769, %v766
    %774 = vrot.lane.b32.xlu0 %v759, 32
    %v775 = vpop.permute.xlu0 %774
    %776 = vrot.lane.b32.xlu0 %v760, 32
    %v777 = vpop.permute.xlu0 %776
    %vm780 = vcmask 260230
    %781 = vst.msk [vmem:[#allocation2] sm:$0x40] %vm780, %v775
    %782 = vst.msk [vmem:[#allocation2 + $0x8] sm:$0x40] %vm780, %v777
    %v783 = vrot.slane %v705, 1
    %v784 = vsel %vm483, %v706, %v783
    %785 = vrot.lane.b32.xlu0 %v784, 80
    %v786 = vpop.permute.xlu0 %785
    %v787 = vsel %vm203, %v786, 0
    %789 = vmatprep.subr.mxu0 0.0
    %790 = vmatpush1.msra.mxu0 %v199
    %791 = vmatprep.subr.mxu0 0.0
    %792 = vmatpush1.msra.mxu0 %v200
    %793 = vmatprep.subr.mxu0 0.0
    %794 = vmatpush1.msra.mxu0 0.0
    %795 = vmatprep.subr.mxu0 0.0
    %796 = vmatpush1.msra.mxu0 0.0
    %797 = vmatprep.subr.mxu0 0.0
    %798 = vmatpush1.msra.mxu0 0.0
    %799 = vmatprep.subr.mxu0 0.0
    %800 = vmatpush1.msra.mxu0 0.0
    %801 = vmatprep.subr.mxu0 0.0
    %802 = vmatpush1.msra.mxu0 0.0
    %803 = vmatprep.subr.mxu0 0.0
    %804 = vmatpush1.msra.mxu0 0.0
    %805 = vmatprep.subr.mxu0 0.0
    %806 = vmatpush1.msra.mxu0 0.0
    %807 = vmatprep.subr.mxu0 0.0
    %808 = vmatpush1.msra.mxu0 0.0
    %809 = vmatprep.subr.mxu0 0.0
    %810 = vmatpush1.msra.mxu0 0.0
    %811 = vmatprep.subr.mxu0 0.0
    %812 = vmatpush1.msra.mxu0 0.0
    %813 = vmatprep.subr.mxu0 0.0
    %814 = vmatpush1.msra.mxu0 0.0
    %815 = vmatprep.subr.mxu0 0.0
    %816 = vmatpush1.msra.mxu0 0.0
    %817 = vmatprep.subr.mxu0 0.0
    %818 = vmatpush1.msra.mxu0 0.0
    %819 = vmatprep.subr.mxu0 0.0
    %820 = vmatpush1.msra.mxu0 0.0
    %821 = vmatprep.subr.mxu0 0.0
    %822 = vmatpush1.msra.mxu0 0.0
    %823 = vmatprep.subr.mxu0 0.0
    %824 = vmatpush1.msra.mxu0 0.0
    %825 = vmatprep.subr.mxu0 0.0
    %826 = vmatpush1.msra.mxu0 0.0
    %827 = vmatprep.subr.mxu0 0.0
    %828 = vmatpush1.msra.mxu0 0.0
    %829 = vmatprep.subr.mxu0 0.0
    %830 = vmatpush1.msra.mxu0 0.0
    %831 = vmatprep.subr.mxu0 0.0
    %832 = vmatpush1.msra.mxu0 0.0
    %833 = vmatprep.subr.mxu0 0.0
    %834 = vmatpush1.msra.mxu0 0.0
    %835 = vmatprep.subr.mxu0 0.0
    %836 = vmatpush1.msra.mxu0 0.0
    %837 = vmatprep.subr.mxu0 0.0
    %838 = vmatpush1.msra.mxu0 0.0
    %839 = vmatprep.subr.mxu0 0.0
    %840 = vmatpush1.msra.mxu0 0.0
    %841 = vmatprep.subr.mxu0 0.0
    %842 = vmatpush1.msra.mxu0 0.0
    %843 = vmatprep.subr.mxu0 0.0
    %844 = vmatpush1.msra.mxu0 0.0
    %845 = vmatprep.subr.mxu0 0.0
    %846 = vmatpush1.msra.mxu0 0.0
    %847 = vmatprep.subr.mxu0 0.0
    %848 = vmatpush1.msra.mxu0 0.0
    %849 = vmatprep.subr.mxu0 0.0
    %850 = vmatpush1.msra.mxu0 0.0
    %851 = vmatprep.subr.mxu0 0.0
    %852 = vmatpush1.msra.mxu0 0.0
    %853 = vmatprep.mubr.f32.mxu0 0.0
    %854 = vmatmul.mubr.f32.gmra.mrb[0].mxu0 %v787
    %v855 = vpop.f32.mrb[0].mxu0
    %v856 = vadd.f32 0.0, %v855
    %v857 = vpop.f32.mrb[0].mxu0
    %858 = vdwg.mxu0
    %v860 = vrot.slane %v856, 6
    %v861 = vrot.slane %v856, 7
    %v864 = vadd.f32 %v191, %v860
    %v865 = vadd.f32 %v196, %v861
    %v866 = vrot.slane %v759, 6
    %v867 = vrot.slane %v760, 5
    %v868 = vsel %vm483, %v867, %v866
    %869 = vrot.lane.b32.xlu0 %v868, 16
    %v870 = vpop.permute.xlu0 %869
    %v871 = vsel %vm203, %v870, 0
    %873 = vmatprep.subr.mxu0 0.0
    %874 = vmatpush1.msra.mxu0 %v201
    %875 = vmatprep.subr.mxu0 0.0
    %876 = vmatpush1.msra.mxu0 %v202
    %877 = vmatprep.subr.mxu0 0.0
    %878 = vmatpush1.msra.mxu0 0.0
    %879 = vmatprep.subr.mxu0 0.0
    %880 = vmatpush1.msra.mxu0 0.0
    %881 = vmatprep.subr.mxu0 0.0
    %882 = vmatpush1.msra.mxu0 0.0
    %883 = vmatprep.subr.mxu0 0.0
    %884 = vmatpush1.msra.mxu0 0.0
    %885 = vmatprep.subr.mxu0 0.0
    %886 = vmatpush1.msra.mxu0 0.0
    %887 = vmatprep.subr.mxu0 0.0
    %888 = vmatpush1.msra.mxu0 0.0
    %889 = vmatprep.subr.mxu0 0.0
    %890 = vmatpush1.msra.mxu0 0.0
    %891 = vmatprep.subr.mxu0 0.0
    %892 = vmatpush1.msra.mxu0 0.0
    %893 = vmatprep.subr.mxu0 0.0
    %894 = vmatpush1.msra.mxu0 0.0
    %895 = vmatprep.subr.mxu0 0.0
    %896 = vmatpush1.msra.mxu0 0.0
    %897 = vmatprep.subr.mxu0 0.0
    %898 = vmatpush1.msra.mxu0 0.0
    %899 = vmatprep.subr.mxu0 0.0
    %900 = vmatpush1.msra.mxu0 0.0
    %901 = vmatprep.subr.mxu0 0.0
    %902 = vmatpush1.msra.mxu0 0.0
    %903 = vmatprep.subr.mxu0 0.0
    %904 = vmatpush1.msra.mxu0 0.0
    %905 = vmatprep.subr.mxu0 0.0
    %906 = vmatpush1.msra.mxu0 0.0
    %907 = vmatprep.subr.mxu0 0.0
    %908 = vmatpush1.msra.mxu0 0.0
    %909 = vmatprep.subr.mxu0 0.0
    %910 = vmatpush1.msra.mxu0 0.0
    %911 = vmatprep.subr.mxu0 0.0
    %912 = vmatpush1.msra.mxu0 0.0
    %913 = vmatprep.subr.mxu0 0.0
    %914 = vmatpush1.msra.mxu0 0.0
    %915 = vmatprep.subr.mxu0 0.0
    %916 = vmatpush1.msra.mxu0 0.0
    %917 = vmatprep.subr.mxu0 0.0
    %918 = vmatpush1.msra.mxu0 0.0
    %919 = vmatprep.subr.mxu0 0.0
    %920 = vmatpush1.msra.mxu0 0.0
    %921 = vmatprep.subr.mxu0 0.0
    %922 = vmatpush1.msra.mxu0 0.0
    %923 = vmatprep.subr.mxu0 0.0
    %924 = vmatpush1.msra.mxu0 0.0
    %925 = vmatprep.subr.mxu0 0.0
    %926 = vmatpush1.msra.mxu0 0.0
    %927 = vmatprep.subr.mxu0 0.0
    %928 = vmatpush1.msra.mxu0 0.0
    %929 = vmatprep.subr.mxu0 0.0
    %930 = vmatpush1.msra.mxu0 0.0
    %931 = vmatprep.subr.mxu0 0.0
    %932 = vmatpush1.msra.mxu0 0.0
    %933 = vmatprep.subr.mxu0 0.0
    %934 = vmatpush1.msra.mxu0 0.0
    %935 = vmatprep.subr.mxu0 0.0
    %936 = vmatpush1.msra.mxu0 0.0
    %937 = vmatprep.mubr.f32.mxu0 0.0
    %938 = vmatmul.mubr.f32.gmra.mrb[0].mxu0 %v871
    %v939 = vpop.f32.mrb[0].mxu0
    %v940 = vadd.f32 0.0, %v939
    %v941 = vpop.f32.mrb[0].mxu0
    %942 = vdwg.mxu0
    %v944 = vrot.slane %v940, 3
    %v945 = vrot.slane %v940, 4
    %946 = vrot.lane.b32.xlu0 %v944, 64
    %v947 = vpop.permute.xlu0 %946
    %948 = vrot.lane.b32.xlu0 %v945, 64
    %v949 = vpop.permute.xlu0 %948
    %v952 = vadd.f32 %v191, %v947
    %v953 = vadd.f32 %v196, %v949
    %v954 = vsub.f32 0.0, %v864
    %v955 = vsub.f32 0.0, %v865
    %v956 = vmul.f32 %v954, 1.442695
    %v957 = vpow.pop %v956
    %v958 = vmul.f32 %v955, 1.442695
    %v959 = vpow.pop %v958
    %v960 = vadd.f32 %v957, 1.0
    %v961 = vadd.f32 %v959, 1.0
    %v962 = vrcp.pop %v960
    %v963 = vmul.f32 1.0, %v962
    %v964 = vrcp.pop %v961
    %v965 = vmul.f32 1.0, %v964
    %v966 = vtanh.pop %v864
    %v967 = vtanh.pop %v865
    %v970 = vrot.slane %v693, 7
    %v971 = vrot.slane %v694, 7
    %v974 = vmul.f32 %v963, %v970
    %v975 = vmul.f32 %v965, %v971
    %978 = vrot.lane.b32.xlu0 %v966, 96
    %v979 = vpop.permute.xlu0 %978
    %980 = vrot.lane.b32.xlu0 %v967, 96
    %v981 = vpop.permute.xlu0 %980
    %v984 = vmul.f32 %v963, %v979
    %v985 = vmul.f32 %v965, %v981
    %988 = vrot.lane.b32.xlu0 %v984, 16
    %v989 = vpop.permute.xlu0 %988
    %990 = vrot.lane.b32.xlu0 %v985, 16
    %v991 = vpop.permute.xlu0 %990
    %v994 = vadd.f32 %v974, %v989
    %v995 = vadd.f32 %v975, %v991
    %v996 = vtanh.pop %v994
    %v997 = vtanh.pop %v995
    %1000 = vrot.lane.b32.xlu0 %v996, 32
    %v1001 = vpop.permute.xlu0 %1000
    %1002 = vrot.lane.b32.xlu0 %v997, 32
    %v1003 = vpop.permute.xlu0 %1002
    %v1006 = vmul.f32 %v963, %v1001
    %v1007 = vmul.f32 %v965, %v1003
    %v1008 = vsub.f32 0.0, %v952
    %v1009 = vsub.f32 0.0, %v953
    %v1010 = vmul.f32 %v1008, 1.442695
    %v1011 = vpow.pop %v1010
    %v1012 = vmul.f32 %v1009, 1.442695
    %v1013 = vpow.pop %v1012
    %v1014 = vadd.f32 %v1011, 1.0
    %v1015 = vadd.f32 %v1013, 1.0
    %v1016 = vrcp.pop %v1014
    %v1017 = vmul.f32 1.0, %v1016
    %v1018 = vrcp.pop %v1015
    %v1019 = vmul.f32 1.0, %v1018
    %v1020 = vtanh.pop %v952
    %v1021 = vtanh.pop %v953
    %v1024 = vrot.slane %v747, 1
    %v1025 = vrot.slane %v748, 1
    %v1028 = vmul.f32 %v1017, %v1024
    %v1029 = vmul.f32 %v1019, %v1025
    %1032 = vrot.lane.b32.xlu0 %v1020, 96
    %v1033 = vpop.permute.xlu0 %1032
    %1034 = vrot.lane.b32.xlu0 %v1021, 96
    %v1035 = vpop.permute.xlu0 %1034
    %v1038 = vmul.f32 %v1017, %v1033
    %v1039 = vmul.f32 %v1019, %v1035
    %1042 = vrot.lane.b32.xlu0 %v1038, 16
    %v1043 = vpop.permute.xlu0 %1042
    %1044 = vrot.lane.b32.xlu0 %v1039, 16
    %v1045 = vpop.permute.xlu0 %1044
    %v1048 = vadd.f32 %v1028, %v1043
    %v1049 = vadd.f32 %v1029, %v1045
    %v1050 = vtanh.pop %v1048
    %v1051 = vtanh.pop %v1049
    %1054 = vrot.lane.b32.xlu0 %v1050, 32
    %v1055 = vpop.permute.xlu0 %1054
    %1056 = vrot.lane.b32.xlu0 %v1051, 32
    %v1057 = vpop.permute.xlu0 %1056
    %v1060 = vmul.f32 %v1017, %v1055
    %v1061 = vmul.f32 %v1019, %v1057
    %1064 = vrot.lane.b32.xlu0 %v1006, 80
    %v1065 = vpop.permute.xlu0 %1064
    %1066 = vrot.lane.b32.xlu0 %v1007, 80
    %v1067 = vpop.permute.xlu0 %1066
    %vm1070 = vcmask 124930
    %1071 = vst.msk [vmem:[#allocation2] sm:$0x4] %vm1070, %v1065
    %1072 = vst.msk [vmem:[#allocation2 + $0x8] sm:$0x4] %vm1070, %v1067
    %1075 = vrot.lane.b32.xlu0 %v1060, 32
    %v1076 = vpop.permute.xlu0 %1075
    %1077 = vrot.lane.b32.xlu0 %v1061, 32
    %v1078 = vpop.permute.xlu0 %1077
    %vm1081 = vcmask 259205
    %1082 = vst.msk [vmem:[#allocation2] sm:$0x20] %vm1081, %v1076
    %1083 = vst.msk [vmem:[#allocation2 + $0x8] sm:$0x20] %vm1081, %v1078
    %v1084 = vrot.slane %v1006, 2
    %v1085 = vrot.slane %v1007, 1
    %v1086 = vsel %vm483, %v1085, %v1084
    %1087 = vrot.lane.b32.xlu0 %v1086, 80
    %v1088 = vpop.permute.xlu0 %1087
    %v1089 = vsel %vm203, %v1088, 0
    %1091 = vmatprep.subr.mxu0 0.0
    %1092 = vmatpush1.msra.mxu0 %v199
    %1093 = vmatprep.subr.mxu0 0.0
    %1094 = vmatpush1.msra.mxu0 %v200
    %1095 = vmatprep.subr.mxu0 0.0
    %1096 = vmatpush1.msra.mxu0 0.0
    %1097 = vmatprep.subr.mxu0 0.0
    %1098 = vmatpush1.msra.mxu0 0.0
    %1099 = vmatprep.subr.mxu0 0.0
    %1100 = vmatpush1.msra.mxu0 0.0
    %1101 = vmatprep.subr.mxu0 0.0
    %1102 = vmatpush1.msra.mxu0 0.0
    %1103 = vmatprep.subr.mxu0 0.0
    %1104 = vmatpush1.msra.mxu0 0.0
    %1105 = vmatprep.subr.mxu0 0.0
    %1106 = vmatpush1.msra.mxu0 0.0
    %1107 = vmatprep.subr.mxu0 0.0
    %1108 = vmatpush1.msra.mxu0 0.0
    %1109 = vmatprep.subr.mxu0 0.0
    %1110 = vmatpush1.msra.mxu0 0.0
    %1111 = vmatprep.subr.mxu0 0.0
    %1112 = vmatpush1.msra.mxu0 0.0
    %1113 = vmatprep.subr.mxu0 0.0
    %1114 = vmatpush1.msra.mxu0 0.0
    %1115 = vmatprep.subr.mxu0 0.0
    %1116 = vmatpush1.msra.mxu0 0.0
    %1117 = vmatprep.subr.mxu0 0.0
    %1118 = vmatpush1.msra.mxu0 0.0
    %1119 = vmatprep.subr.mxu0 0.0
    %1120 = vmatpush1.msra.mxu0 0.0
    %1121 = vmatprep.subr.mxu0 0.0
    %1122 = vmatpush1.msra.mxu0 0.0
    %1123 = vmatprep.subr.mxu0 0.0
    %1124 = vmatpush1.msra.mxu0 0.0
    %1125 = vmatprep.subr.mxu0 0.0
    %1126 = vmatpush1.msra.mxu0 0.0
    %1127 = vmatprep.subr.mxu0 0.0
    %1128 = vmatpush1.msra.mxu0 0.0
    %1129 = vmatprep.subr.mxu0 0.0
    %1130 = vmatpush1.msra.mxu0 0.0
    %1131 = vmatprep.subr.mxu0 0.0
    %1132 = vmatpush1.msra.mxu0 0.0
    %1133 = vmatprep.subr.mxu0 0.0
    %1134 = vmatpush1.msra.mxu0 0.0
    %1135 = vmatprep.subr.mxu0 0.0
    %1136 = vmatpush1.msra.mxu0 0.0
    %1137 = vmatprep.subr.mxu0 0.0
    %1138 = vmatpush1.msra.mxu0 0.0
    %1139 = vmatprep.subr.mxu0 0.0
    %1140 = vmatpush1.msra.mxu0 0.0
    %1141 = vmatprep.subr.mxu0 0.0
    %1142 = vmatpush1.msra.mxu0 0.0
    %1143 = vmatprep.subr.mxu0 0.0
    %1144 = vmatpush1.msra.mxu0 0.0
    %1145 = vmatprep.subr.mxu0 0.0
    %1146 = vmatpush1.msra.mxu0 0.0
    %1147 = vmatprep.subr.mxu0 0.0
    %1148 = vmatpush1.msra.mxu0 0.0
    %1149 = vmatprep.subr.mxu0 0.0
    %1150 = vmatpush1.msra.mxu0 0.0
    %1151 = vmatprep.subr.mxu0 0.0
    %1152 = vmatpush1.msra.mxu0 0.0
    %1153 = vmatprep.subr.mxu0 0.0
    %1154 = vmatpush1.msra.mxu0 0.0
    %1155 = vmatprep.mubr.f32.mxu0 0.0
    %1156 = vmatmul.mubr.f32.gmra.mrb[0].mxu0 %v1089
    %v1157 = vpop.f32.mrb[0].mxu0
    %v1158 = vadd.f32 0.0, %v1157
    %v1159 = vpop.f32.mrb[0].mxu0
    %1160 = vdwg.mxu0
    %v1162 = vrot.slane %v1158, 5
    %v1163 = vrot.slane %v1158, 6
    %v1166 = vadd.f32 %v191, %v1162
    %v1167 = vadd.f32 %v196, %v1163
    %v1168 = vrot.slane %v1060, 5
    %v1169 = vrot.slane %v1061, 4
    %v1170 = vsel %vm483, %v1169, %v1168
    %1171 = vrot.lane.b32.xlu0 %v1170, 16
    %v1172 = vpop.permute.xlu0 %1171
    %v1173 = vsel %vm203, %v1172, 0
    %1175 = vmatprep.subr.mxu0 0.0
    %1176 = vmatpush1.msra.mxu0 %v201
    %1177 = vmatprep.subr.mxu0 0.0
    %1178 = vmatpush1.msra.mxu0 %v202
    %1179 = vmatprep.subr.mxu0 0.0
    %1180 = vmatpush1.msra.mxu0 0.0
    %1181 = vmatprep.subr.mxu0 0.0
    %1182 = vmatpush1.msra.mxu0 0.0
    %1183 = vmatprep.subr.mxu0 0.0
    %1184 = vmatpush1.msra.mxu0 0.0
    %1185 = vmatprep.subr.mxu0 0.0
    %1186 = vmatpush1.msra.mxu0 0.0
    %1187 = vmatprep.subr.mxu0 0.0
    %1188 = vmatpush1.msra.mxu0 0.0
    %1189 = vmatprep.subr.mxu0 0.0
    %1190 = vmatpush1.msra.mxu0 0.0
    %1191 = vmatprep.subr.mxu0 0.0
    %1192 = vmatpush1.msra.mxu0 0.0
    %1193 = vmatprep.subr.mxu0 0.0
    %1194 = vmatpush1.msra.mxu0 0.0
    %1195 = vmatprep.subr.mxu0 0.0
    %1196 = vmatpush1.msra.mxu0 0.0
    %1197 = vmatprep.subr.mxu0 0.0
    %1198 = vmatpush1.msra.mxu0 0.0
    %1199 = vmatprep.subr.mxu0 0.0
    %1200 = vmatpush1.msra.mxu0 0.0
    %1201 = vmatprep.subr.mxu0 0.0
    %1202 = vmatpush1.msra.mxu0 0.0
    %1203 = vmatprep.subr.mxu0 0.0
    %1204 = vmatpush1.msra.mxu0 0.0
    %1205 = vmatprep.subr.mxu0 0.0
    %1206 = vmatpush1.msra.mxu0 0.0
    %1207 = vmatprep.subr.mxu0 0.0
    %1208 = vmatpush1.msra.mxu0 0.0
    %1209 = vmatprep.subr.mxu0 0.0
    %1210 = vmatpush1.msra.mxu0 0.0
    %1211 = vmatprep.subr.mxu0 0.0
    %1212 = vmatpush1.msra.mxu0 0.0
    %1213 = vmatprep.subr.mxu0 0.0
    %1214 = vmatpush1.msra.mxu0 0.0
    %1215 = vmatprep.subr.mxu0 0.0
    %1216 = vmatpush1.msra.mxu0 0.0
    %1217 = vmatprep.subr.mxu0 0.0
    %1218 = vmatpush1.msra.mxu0 0.0
    %1219 = vmatprep.subr.mxu0 0.0
    %1220 = vmatpush1.msra.mxu0 0.0
    %1221 = vmatprep.subr.mxu0 0.0
    %1222 = vmatpush1.msra.mxu0 0.0
    %1223 = vmatprep.subr.mxu0 0.0
    %1224 = vmatpush1.msra.mxu0 0.0
    %1225 = vmatprep.subr.mxu0 0.0
    %1226 = vmatpush1.msra.mxu0 0.0
    %1227 = vmatprep.subr.mxu0 0.0
    %1228 = vmatpush1.msra.mxu0 0.0
    %1229 = vmatprep.subr.mxu0 0.0
    %1230 = vmatpush1.msra.mxu0 0.0
    %1231 = vmatprep.subr.mxu0 0.0
    %1232 = vmatpush1.msra.mxu0 0.0
    %1233 = vmatprep.subr.mxu0 0.0
    %1234 = vmatpush1.msra.mxu0 0.0
    %1235 = vmatprep.subr.mxu0 0.0
    %1236 = vmatpush1.msra.mxu0 0.0
    %1237 = vmatprep.subr.mxu0 0.0
    %1238 = vmatpush1.msra.mxu0 0.0
    %1239 = vmatprep.mubr.f32.mxu0 0.0
    %1240 = vmatmul.mubr.f32.gmra.mrb[0].mxu0 %v1173
    %v1241 = vpop.f32.mrb[0].mxu0
    %v1242 = vadd.f32 0.0, %v1241
    %v1243 = vpop.f32.mrb[0].mxu0
    %1244 = vdwg.mxu0
    %v1246 = vrot.slane %v1242, 4
    %v1247 = vrot.slane %v1242, 5
    %1248 = vrot.lane.b32.xlu0 %v1246, 64
    %v1249 = vpop.permute.xlu0 %1248
    %1250 = vrot.lane.b32.xlu0 %v1247, 64
    %v1251 = vpop.permute.xlu0 %1250
    %v1254 = vadd.f32 %v191, %v1249
    %v1255 = vadd.f32 %v196, %v1251
    %v1256 = vsub.f32 0.0, %v1166
    %v1257 = vsub.f32 0.0, %v1167
    %v1258 = vmul.f32 %v1256, 1.442695
    %v1259 = vpow.pop %v1258
    %v1260 = vmul.f32 %v1257, 1.442695
    %v1261 = vpow.pop %v1260
    %v1262 = vadd.f32 %v1259, 1.0
    %v1263 = vadd.f32 %v1261, 1.0
    %v1264 = vrcp.pop %v1262
    %v1265 = vmul.f32 1.0, %v1264
    %v1266 = vrcp.pop %v1263
    %v1267 = vmul.f32 1.0, %v1266
    %v1268 = vtanh.pop %v1166
    %v1269 = vtanh.pop %v1167
    %v1272 = vrot.slane %v994, 7
    %v1273 = vrot.slane %v995, 7
    %v1276 = vmul.f32 %v1265, %v1272
    %v1277 = vmul.f32 %v1267, %v1273
    %1280 = vrot.lane.b32.xlu0 %v1268, 96
    %v1281 = vpop.permute.xlu0 %1280
    %1282 = vrot.lane.b32.xlu0 %v1269, 96
    %v1283 = vpop.permute.xlu0 %1282
    %v1286 = vmul.f32 %v1265, %v1281
    %v1287 = vmul.f32 %v1267, %v1283
    %1290 = vrot.lane.b32.xlu0 %v1286, 16
    %v1291 = vpop.permute.xlu0 %1290
    %1292 = vrot.lane.b32.xlu0 %v1287, 16
    %v1293 = vpop.permute.xlu0 %1292
    %v1296 = vadd.f32 %v1276, %v1291
    %v1297 = vadd.f32 %v1277, %v1293
    %v1298 = vtanh.pop %v1296
    %v1299 = vtanh.pop %v1297
    %1302 = vrot.lane.b32.xlu0 %v1298, 32
    %v1303 = vpop.permute.xlu0 %1302
    %1304 = vrot.lane.b32.xlu0 %v1299, 32
    %v1305 = vpop.permute.xlu0 %1304
    %v1308 = vmul.f32 %v1265, %v1303
    %v1309 = vmul.f32 %v1267, %v1305
    %v1310 = vsub.f32 0.0, %v1254
    %v1311 = vsub.f32 0.0, %v1255
    %v1312 = vmul.f32 %v1310, 1.442695
    %v1313 = vpow.pop %v1312
    %v1314 = vmul.f32 %v1311, 1.442695
    %v1315 = vpow.pop %v1314
    %v1316 = vadd.f32 %v1313, 1.0
    %v1317 = vadd.f32 %v1315, 1.0
    %v1318 = vrcp.pop %v1316
    %v1319 = vmul.f32 1.0, %v1318
    %v1320 = vrcp.pop %v1317
    %v1321 = vmul.f32 1.0, %v1320
    %v1322 = vtanh.pop %v1254
    %v1323 = vtanh.pop %v1255
    %v1326 = vrot.slane %v1048, 1
    %v1327 = vrot.slane %v1049, 1
    %v1330 = vmul.f32 %v1319, %v1326
    %v1331 = vmul.f32 %v1321, %v1327
    %1334 = vrot.lane.b32.xlu0 %v1322, 96
    %v1335 = vpop.permute.xlu0 %1334
    %1336 = vrot.lane.b32.xlu0 %v1323, 96
    %v1337 = vpop.permute.xlu0 %1336
    %v1340 = vmul.f32 %v1319, %v1335
    %v1341 = vmul.f32 %v1321, %v1337
    %1344 = vrot.lane.b32.xlu0 %v1340, 16
    %v1345 = vpop.permute.xlu0 %1344
    %1346 = vrot.lane.b32.xlu0 %v1341, 16
    %v1347 = vpop.permute.xlu0 %1346
    %v1350 = vadd.f32 %v1330, %v1345
    %v1351 = vadd.f32 %v1331, %v1347
    %v1352 = vtanh.pop %v1350
    %v1353 = vtanh.pop %v1351
    %1356 = vrot.lane.b32.xlu0 %v1352, 32
    %v1357 = vpop.permute.xlu0 %1356
    %1358 = vrot.lane.b32.xlu0 %v1353, 32
    %v1359 = vpop.permute.xlu0 %1358
    %v1362 = vmul.f32 %v1319, %v1357
    %v1363 = vmul.f32 %v1321, %v1359
    %1366 = vrot.lane.b32.xlu0 %v1308, 80
    %v1367 = vpop.permute.xlu0 %1366
    %1368 = vrot.lane.b32.xlu0 %v1309, 80
    %v1369 = vpop.permute.xlu0 %1368
    %vm1372 = vcmask 125955
    %1373 = vst.msk [vmem:[#allocation2] sm:$0x8] %vm1372, %v1367
    %1374 = vst.msk [vmem:[#allocation2 + $0x8] sm:$0x8] %vm1372, %v1369
    %1377 = vrot.lane.b32.xlu0 %v1362, 32
    %v1378 = vpop.permute.xlu0 %1377
    %1379 = vrot.lane.b32.xlu0 %v1363, 32
    %v1380 = vpop.permute.xlu0 %1379
    %vm1383 = vcmask 258180
    %1384 = vst.msk [vmem:[#allocation2] sm:$0x10] %vm1383, %v1378
    %1385 = vst.msk [vmem:[#allocation2 + $0x8] sm:$0x10] %vm1383, %v1380
    %v1386 = vrot.slane %v1308, 3
    %v1387 = vrot.slane %v1309, 2
    %v1388 = vsel %vm483, %v1387, %v1386
    %1389 = vrot.lane.b32.xlu0 %v1388, 80
    %v1390 = vpop.permute.xlu0 %1389
    %v1391 = vsel %vm203, %v1390, 0
    %1393 = vmatprep.subr.mxu0 0.0
    %1394 = vmatpush1.msra.mxu0 %v199
    %1395 = vmatprep.subr.mxu0 0.0
    %1396 = vmatpush1.msra.mxu0 %v200
    %1397 = vmatprep.subr.mxu0 0.0
    %1398 = vmatpush1.msra.mxu0 0.0
    %1399 = vmatprep.subr.mxu0 0.0
    %1400 = vmatpush1.msra.mxu0 0.0
    %1401 = vmatprep.subr.mxu0 0.0
    %1402 = vmatpush1.msra.mxu0 0.0
    %1403 = vmatprep.subr.mxu0 0.0
    %1404 = vmatpush1.msra.mxu0 0.0
    %1405 = vmatprep.subr.mxu0 0.0
    %1406 = vmatpush1.msra.mxu0 0.0
    %1407 = vmatprep.subr.mxu0 0.0
    %1408 = vmatpush1.msra.mxu0 0.0
    %1409 = vmatprep.subr.mxu0 0.0
    %1410 = vmatpush1.msra.mxu0 0.0
    %1411 = vmatprep.subr.mxu0 0.0
    %1412 = vmatpush1.msra.mxu0 0.0
    %1413 = vmatprep.subr.mxu0 0.0
    %1414 = vmatpush1.msra.mxu0 0.0
    %1415 = vmatprep.subr.mxu0 0.0
    %1416 = vmatpush1.msra.mxu0 0.0
    %1417 = vmatprep.subr.mxu0 0.0
    %1418 = vmatpush1.msra.mxu0 0.0
    %1419 = vmatprep.subr.mxu0 0.0
    %1420 = vmatpush1.msra.mxu0 0.0
    %1421 = vmatprep.subr.mxu0 0.0
    %1422 = vmatpush1.msra.mxu0 0.0
    %1423 = vmatprep.subr.mxu0 0.0
    %1424 = vmatpush1.msra.mxu0 0.0
    %1425 = vmatprep.subr.mxu0 0.0
    %1426 = vmatpush1.msra.mxu0 0.0
    %1427 = vmatprep.subr.mxu0 0.0
    %1428 = vmatpush1.msra.mxu0 0.0
    %1429 = vmatprep.subr.mxu0 0.0
    %1430 = vmatpush1.msra.mxu0 0.0
    %1431 = vmatprep.subr.mxu0 0.0
    %1432 = vmatpush1.msra.mxu0 0.0
    %1433 = vmatprep.subr.mxu0 0.0
    %1434 = vmatpush1.msra.mxu0 0.0
    %1435 = vmatprep.subr.mxu0 0.0
    %1436 = vmatpush1.msra.mxu0 0.0
    %1437 = vmatprep.subr.mxu0 0.0
    %1438 = vmatpush1.msra.mxu0 0.0
    %1439 = vmatprep.subr.mxu0 0.0
    %1440 = vmatpush1.msra.mxu0 0.0
    %1441 = vmatprep.subr.mxu0 0.0
    %1442 = vmatpush1.msra.mxu0 0.0
    %1443 = vmatprep.subr.mxu0 0.0
    %1444 = vmatpush1.msra.mxu0 0.0
    %1445 = vmatprep.subr.mxu0 0.0
    %1446 = vmatpush1.msra.mxu0 0.0
    %1447 = vmatprep.subr.mxu0 0.0
    %1448 = vmatpush1.msra.mxu0 0.0
    %1449 = vmatprep.subr.mxu0 0.0
    %1450 = vmatpush1.msra.mxu0 0.0
    %1451 = vmatprep.subr.mxu0 0.0
    %1452 = vmatpush1.msra.mxu0 0.0
    %1453 = vmatprep.subr.mxu0 0.0
    %1454 = vmatpush1.msra.mxu0 0.0
    %1455 = vmatprep.subr.mxu0 0.0
    %1456 = vmatpush1.msra.mxu0 0.0
    %1457 = vmatprep.mubr.f32.mxu0 0.0
    %1458 = vmatmul.mubr.f32.gmra.mrb[0].mxu0 %v1391
    %v1459 = vpop.f32.mrb[0].mxu0
    %v1460 = vadd.f32 0.0, %v1459
    %v1461 = vpop.f32.mrb[0].mxu0
    %1462 = vdwg.mxu0
    %v1464 = vrot.slane %v1460, 4
    %v1465 = vrot.slane %v1460, 5
    %v1468 = vadd.f32 %v191, %v1464
    %v1469 = vadd.f32 %v196, %v1465
    %v1470 = vrot.slane %v1362, 4
    %v1471 = vrot.slane %v1363, 3
    %v1472 = vsel %vm483, %v1471, %v1470
    %1473 = vrot.lane.b32.xlu0 %v1472, 16
    %v1474 = vpop.permute.xlu0 %1473
    %v1475 = vsel %vm203, %v1474, 0
    %1477 = vmatprep.subr.mxu0 0.0
    %1478 = vmatpush1.msra.mxu0 %v201
    %1479 = vmatprep.subr.mxu0 0.0
    %1480 = vmatpush1.msra.mxu0 %v202
    %1481 = vmatprep.subr.mxu0 0.0
    %1482 = vmatpush1.msra.mxu0 0.0
    %1483 = vmatprep.subr.mxu0 0.0
    %1484 = vmatpush1.msra.mxu0 0.0
    %1485 = vmatprep.subr.mxu0 0.0
    %1486 = vmatpush1.msra.mxu0 0.0
    %1487 = vmatprep.subr.mxu0 0.0
    %1488 = vmatpush1.msra.mxu0 0.0
    %1489 = vmatprep.subr.mxu0 0.0
    %1490 = vmatpush1.msra.mxu0 0.0
    %1491 = vmatprep.subr.mxu0 0.0
    %1492 = vmatpush1.msra.mxu0 0.0
    %1493 = vmatprep.subr.mxu0 0.0
    %1494 = vmatpush1.msra.mxu0 0.0
    %1495 = vmatprep.subr.mxu0 0.0
    %1496 = vmatpush1.msra.mxu0 0.0
    %1497 = vmatprep.subr.mxu0 0.0
    %1498 = vmatpush1.msra.mxu0 0.0
    %1499 = vmatprep.subr.mxu0 0.0
    %1500 = vmatpush1.msra.mxu0 0.0
    %1501 = vmatprep.subr.mxu0 0.0
    %1502 = vmatpush1.msra.mxu0 0.0
    %1503 = vmatprep.subr.mxu0 0.0
    %1504 = vmatpush1.msra.mxu0 0.0
    %1505 = vmatprep.subr.mxu0 0.0
    %1506 = vmatpush1.msra.mxu0 0.0
    %1507 = vmatprep.subr.mxu0 0.0
    %1508 = vmatpush1.msra.mxu0 0.0
    %1509 = vmatprep.subr.mxu0 0.0
    %1510 = vmatpush1.msra.mxu0 0.0
    %1511 = vmatprep.subr.mxu0 0.0
    %1512 = vmatpush1.msra.mxu0 0.0
    %1513 = vmatprep.subr.mxu0 0.0
    %1514 = vmatpush1.msra.mxu0 0.0
    %1515 = vmatprep.subr.mxu0 0.0
    %1516 = vmatpush1.msra.mxu0 0.0
    %1517 = vmatprep.subr.mxu0 0.0
    %1518 = vmatpush1.msra.mxu0 0.0
    %1519 = vmatprep.subr.mxu0 0.0
    %1520 = vmatpush1.msra.mxu0 0.0
    %1521 = vmatprep.subr.mxu0 0.0
    %1522 = vmatpush1.msra.mxu0 0.0
    %1523 = vmatprep.subr.mxu0 0.0
    %1524 = vmatpush1.msra.mxu0 0.0
    %1525 = vmatprep.subr.mxu0 0.0
    %1526 = vmatpush1.msra.mxu0 0.0
    %1527 = vmatprep.subr.mxu0 0.0
    %1528 = vmatpush1.msra.mxu0 0.0
    %1529 = vmatprep.subr.mxu0 0.0
    %1530 = vmatpush1.msra.mxu0 0.0
    %1531 = vmatprep.subr.mxu0 0.0
    %1532 = vmatpush1.msra.mxu0 0.0
    %1533 = vmatprep.subr.mxu0 0.0
    %1534 = vmatpush1.msra.mxu0 0.0
    %1535 = vmatprep.subr.mxu0 0.0
    %1536 = vmatpush1.msra.mxu0 0.0
    %1537 = vmatprep.subr.mxu0 0.0
    %1538 = vmatpush1.msra.mxu0 0.0
    %1539 = vmatprep.subr.mxu0 0.0
    %1540 = vmatpush1.msra.mxu0 0.0
    %1541 = vmatprep.mubr.f32.mxu0 0.0
    %1542 = vmatmul.mubr.f32.gmra.mrb[0].mxu0 %v1475
    %v1543 = vpop.f32.mrb[0].mxu0
    %v1544 = vadd.f32 0.0, %v1543
    %v1545 = vpop.f32.mrb[0].mxu0
    %1546 = vdwg.mxu0
    %v1548 = vrot.slane %v1544, 5
    %v1549 = vrot.slane %v1544, 6
    %1550 = vrot.lane.b32.xlu0 %v1548, 64
    %v1551 = vpop.permute.xlu0 %1550
    %1552 = vrot.lane.b32.xlu0 %v1549, 64
    %v1553 = vpop.permute.xlu0 %1552
    %v1556 = vadd.f32 %v191, %v1551
    %v1557 = vadd.f32 %v196, %v1553
    %v1558 = vsub.f32 0.0, %v1468
    %v1559 = vsub.f32 0.0, %v1469
    %v1560 = vmul.f32 %v1558, 1.442695
    %v1561 = vpow.pop %v1560
    %v1562 = vmul.f32 %v1559, 1.442695
    %v1563 = vpow.pop %v1562
    %v1564 = vadd.f32 %v1561, 1.0
    %v1565 = vadd.f32 %v1563, 1.0
    %v1566 = vrcp.pop %v1564
    %v1567 = vmul.f32 1.0, %v1566
    %v1568 = vrcp.pop %v1565
    %v1569 = vmul.f32 1.0, %v1568
    %v1570 = vtanh.pop %v1468
    %v1571 = vtanh.pop %v1469
    %v1574 = vrot.slane %v1296, 7
    %v1575 = vrot.slane %v1297, 7
    %v1578 = vmul.f32 %v1567, %v1574
    %v1579 = vmul.f32 %v1569, %v1575
    %1582 = vrot.lane.b32.xlu0 %v1570, 96
    %v1583 = vpop.permute.xlu0 %1582
    %1584 = vrot.lane.b32.xlu0 %v1571, 96
    %v1585 = vpop.permute.xlu0 %1584
    %v1588 = vmul.f32 %v1567, %v1583
    %v1589 = vmul.f32 %v1569, %v1585
    %1592 = vrot.lane.b32.xlu0 %v1588, 16
    %v1593 = vpop.permute.xlu0 %1592
    %1594 = vrot.lane.b32.xlu0 %v1589, 16
    %v1595 = vpop.permute.xlu0 %1594
    %v1598 = vadd.f32 %v1578, %v1593
    %v1599 = vadd.f32 %v1579, %v1595
    %v1600 = vtanh.pop %v1598
    %v1601 = vtanh.pop %v1599
    %1604 = vrot.lane.b32.xlu0 %v1600, 32
    %v1605 = vpop.permute.xlu0 %1604
    %1606 = vrot.lane.b32.xlu0 %v1601, 32
    %v1607 = vpop.permute.xlu0 %1606
    %v1610 = vmul.f32 %v1567, %v1605
    %v1611 = vmul.f32 %v1569, %v1607
    %v1612 = vsub.f32 0.0, %v1556
    %v1613 = vsub.f32 0.0, %v1557
    %v1614 = vmul.f32 %v1612, 1.442695
    %v1615 = vpow.pop %v1614
    %v1616 = vmul.f32 %v1613, 1.442695
    %v1617 = vpow.pop %v1616
    %v1618 = vadd.f32 %v1615, 1.0
    %v1619 = vadd.f32 %v1617, 1.0
    %v1620 = vrcp.pop %v1618
    %v1621 = vmul.f32 1.0, %v1620
    %v1622 = vrcp.pop %v1619
    %v1623 = vmul.f32 1.0, %v1622
    %v1624 = vtanh.pop %v1556
    %v1625 = vtanh.pop %v1557
    %v1628 = vrot.slane %v1350, 1
    %v1629 = vrot.slane %v1351, 1
    %v1632 = vmul.f32 %v1621, %v1628
    %v1633 = vmul.f32 %v1623, %v1629
    %1636 = vrot.lane.b32.xlu0 %v1624, 96
    %v1637 = vpop.permute.xlu0 %1636
    %1638 = vrot.lane.b32.xlu0 %v1625, 96
    %v1639 = vpop.permute.xlu0 %1638
    %v1642 = vmul.f32 %v1621, %v1637
    %v1643 = vmul.f32 %v1623, %v1639
    %1646 = vrot.lane.b32.xlu0 %v1642, 16
    %v1647 = vpop.permute.xlu0 %1646
    %1648 = vrot.lane.b32.xlu0 %v1643, 16
    %v1649 = vpop.permute.xlu0 %1648
    %v1652 = vadd.f32 %v1632, %v1647
    %v1653 = vadd.f32 %v1633, %v1649
    %v1654 = vtanh.pop %v1652
    %v1655 = vtanh.pop %v1653
    %1658 = vrot.lane.b32.xlu0 %v1654, 32
    %v1659 = vpop.permute.xlu0 %1658
    %1660 = vrot.lane.b32.xlu0 %v1655, 32
    %v1661 = vpop.permute.xlu0 %1660
    %v1664 = vmul.f32 %v1621, %v1659
    %v1665 = vmul.f32 %v1623, %v1661
    %1668 = vrot.lane.b32.xlu0 %v1610, 80
    %v1669 = vpop.permute.xlu0 %1668
    %1670 = vrot.lane.b32.xlu0 %v1611, 80
    %v1671 = vpop.permute.xlu0 %1670
    %vm1674 = vcmask 126980
    %1675 = vst.msk [vmem:[#allocation2] sm:$0x10] %vm1674, %v1669
    %1676 = vst.msk [vmem:[#allocation2 + $0x8] sm:$0x10] %vm1674, %v1671
    %1679 = vrot.lane.b32.xlu0 %v1664, 32
    %v1680 = vpop.permute.xlu0 %1679
    %1681 = vrot.lane.b32.xlu0 %v1665, 32
    %v1682 = vpop.permute.xlu0 %1681
    %vm1685 = vcmask 257155
    %1686 = vst.msk [vmem:[#allocation2] sm:$0x8] %vm1685, %v1680
    %1687 = vst.msk [vmem:[#allocation2 + $0x8] sm:$0x8] %vm1685, %v1682
    %v1688 = vrot.slane %v1610, 4
    %v1689 = vrot.slane %v1611, 3
    %v1690 = vsel %vm483, %v1689, %v1688
    %1691 = vrot.lane.b32.xlu0 %v1690, 80
    %v1692 = vpop.permute.xlu0 %1691
    %v1693 = vsel %vm203, %v1692, 0
    %1695 = vmatprep.subr.mxu0 0.0
    %1696 = vmatpush1.msra.mxu0 %v199
    %1697 = vmatprep.subr.mxu0 0.0
    %1698 = vmatpush1.msra.mxu0 %v200
    %1699 = vmatprep.subr.mxu0 0.0
    %1700 = vmatpush1.msra.mxu0 0.0
    %1701 = vmatprep.subr.mxu0 0.0
    %1702 = vmatpush1.msra.mxu0 0.0
    %1703 = vmatprep.subr.mxu0 0.0
    %1704 = vmatpush1.msra.mxu0 0.0
    %1705 = vmatprep.subr.mxu0 0.0
    %1706 = vmatpush1.msra.mxu0 0.0
    %1707 = vmatprep.subr.mxu0 0.0
    %1708 = vmatpush1.msra.mxu0 0.0
    %1709 = vmatprep.subr.mxu0 0.0
    %1710 = vmatpush1.msra.mxu0 0.0
    %1711 = vmatprep.subr.mxu0 0.0
    %1712 = vmatpush1.msra.mxu0 0.0
    %1713 = vmatprep.subr.mxu0 0.0
    %1714 = vmatpush1.msra.mxu0 0.0
    %1715 = vmatprep.subr.mxu0 0.0
    %1716 = vmatpush1.msra.mxu0 0.0
    %1717 = vmatprep.subr.mxu0 0.0
    %1718 = vmatpush1.msra.mxu0 0.0
    %1719 = vmatprep.subr.mxu0 0.0
    %1720 = vmatpush1.msra.mxu0 0.0
    %1721 = vmatprep.subr.mxu0 0.0
    %1722 = vmatpush1.msra.mxu0 0.0
    %1723 = vmatprep.subr.mxu0 0.0
    %1724 = vmatpush1.msra.mxu0 0.0
    %1725 = vmatprep.subr.mxu0 0.0
    %1726 = vmatpush1.msra.mxu0 0.0
    %1727 = vmatprep.subr.mxu0 0.0
    %1728 = vmatpush1.msra.mxu0 0.0
    %1729 = vmatprep.subr.mxu0 0.0
    %1730 = vmatpush1.msra.mxu0 0.0
    %1731 = vmatprep.subr.mxu0 0.0
    %1732 = vmatpush1.msra.mxu0 0.0
    %1733 = vmatprep.subr.mxu0 0.0
    %1734 = vmatpush1.msra.mxu0 0.0
    %1735 = vmatprep.subr.mxu0 0.0
    %1736 = vmatpush1.msra.mxu0 0.0
    %1737 = vmatprep.subr.mxu0 0.0
    %1738 = vmatpush1.msra.mxu0 0.0
    %1739 = vmatprep.subr.mxu0 0.0
    %1740 = vmatpush1.msra.mxu0 0.0
    %1741 = vmatprep.subr.mxu0 0.0
    %1742 = vmatpush1.msra.mxu0 0.0
    %1743 = vmatprep.subr.mxu0 0.0
    %1744 = vmatpush1.msra.mxu0 0.0
    %1745 = vmatprep.subr.mxu0 0.0
    %1746 = vmatpush1.msra.mxu0 0.0
    %1747 = vmatprep.subr.mxu0 0.0
    %1748 = vmatpush1.msra.mxu0 0.0
    %1749 = vmatprep.subr.mxu0 0.0
    %1750 = vmatpush1.msra.mxu0 0.0
    %1751 = vmatprep.subr.mxu0 0.0
    %1752 = vmatpush1.msra.mxu0 0.0
    %1753 = vmatprep.subr.mxu0 0.0
    %1754 = vmatpush1.msra.mxu0 0.0
    %1755 = vmatprep.subr.mxu0 0.0
    %1756 = vmatpush1.msra.mxu0 0.0
    %1757 = vmatprep.subr.mxu0 0.0
    %1758 = vmatpush1.msra.mxu0 0.0
    %1759 = vmatprep.mubr.f32.mxu0 0.0
    %1760 = vmatmul.mubr.f32.gmra.mrb[0].mxu0 %v1693
    %v1761 = vpop.f32.mrb[0].mxu0
    %v1762 = vadd.f32 0.0, %v1761
    %v1763 = vpop.f32.mrb[0].mxu0
    %1764 = vdwg.mxu0
    %v1766 = vrot.slane %v1762, 3
    %v1767 = vrot.slane %v1762, 4
    %v1770 = vadd.f32 %v191, %v1766
    %v1771 = vadd.f32 %v196, %v1767
    %v1772 = vrot.slane %v1664, 3
    %v1773 = vrot.slane %v1665, 2
    %v1774 = vsel %vm483, %v1773, %v1772
    %1775 = vrot.lane.b32.xlu0 %v1774, 16
    %v1776 = vpop.permute.xlu0 %1775
    %v1777 = vsel %vm203, %v1776, 0
    %1779 = vmatprep.subr.mxu0 0.0
    %1780 = vmatpush1.msra.mxu0 %v201
    %1781 = vmatprep.subr.mxu0 0.0
    %1782 = vmatpush1.msra.mxu0 %v202
    %1783 = vmatprep.subr.mxu0 0.0
    %1784 = vmatpush1.msra.mxu0 0.0
    %1785 = vmatprep.subr.mxu0 0.0
    %1786 = vmatpush1.msra.mxu0 0.0
    %1787 = vmatprep.subr.mxu0 0.0
    %1788 = vmatpush1.msra.mxu0 0.0
    %1789 = vmatprep.subr.mxu0 0.0
    %1790 = vmatpush1.msra.mxu0 0.0
    %1791 = vmatprep.subr.mxu0 0.0
    %1792 = vmatpush1.msra.mxu0 0.0
    %1793 = vmatprep.subr.mxu0 0.0
    %1794 = vmatpush1.msra.mxu0 0.0
    %1795 = vmatprep.subr.mxu0 0.0
    %1796 = vmatpush1.msra.mxu0 0.0
    %1797 = vmatprep.subr.mxu0 0.0
    %1798 = vmatpush1.msra.mxu0 0.0
    %1799 = vmatprep.subr.mxu0 0.0
    %1800 = vmatpush1.msra.mxu0 0.0
    %1801 = vmatprep.subr.mxu0 0.0
    %1802 = vmatpush1.msra.mxu0 0.0
    %1803 = vmatprep.subr.mxu0 0.0
    %1804 = vmatpush1.msra.mxu0 0.0
    %1805 = vmatprep.subr.mxu0 0.0
    %1806 = vmatpush1.msra.mxu0 0.0
    %1807 = vmatprep.subr.mxu0 0.0
    %1808 = vmatpush1.msra.mxu0 0.0
    %1809 = vmatprep.subr.mxu0 0.0
    %1810 = vmatpush1.msra.mxu0 0.0
    %1811 = vmatprep.subr.mxu0 0.0
    %1812 = vmatpush1.msra.mxu0 0.0
    %1813 = vmatprep.subr.mxu0 0.0
    %1814 = vmatpush1.msra.mxu0 0.0
    %1815 = vmatprep.subr.mxu0 0.0
    %1816 = vmatpush1.msra.mxu0 0.0
    %1817 = vmatprep.subr.mxu0 0.0
    %1818 = vmatpush1.msra.mxu0 0.0
    %1819 = vmatprep.subr.mxu0 0.0
    %1820 = vmatpush1.msra.mxu0 0.0
    %1821 = vmatprep.subr.mxu0 0.0
    %1822 = vmatpush1.msra.mxu0 0.0
    %1823 = vmatprep.subr.mxu0 0.0
    %1824 = vmatpush1.msra.mxu0 0.0
    %1825 = vmatprep.subr.mxu0 0.0
    %1826 = vmatpush1.msra.mxu0 0.0
    %1827 = vmatprep.subr.mxu0 0.0
    %1828 = vmatpush1.msra.mxu0 0.0
    %1829 = vmatprep.subr.mxu0 0.0
    %1830 = vmatpush1.msra.mxu0 0.0
    %1831 = vmatprep.subr.mxu0 0.0
    %1832 = vmatpush1.msra.mxu0 0.0
    %1833 = vmatprep.subr.mxu0 0.0
    %1834 = vmatpush1.msra.mxu0 0.0
    %1835 = vmatprep.subr.mxu0 0.0
    %1836 = vmatpush1.msra.mxu0 0.0
    %1837 = vmatprep.subr.mxu0 0.0
    %1838 = vmatpush1.msra.mxu0 0.0
    %1839 = vmatprep.subr.mxu0 0.0
    %1840 = vmatpush1.msra.mxu0 0.0
    %1841 = vmatprep.subr.mxu0 0.0
    %1842 = vmatpush1.msra.mxu0 0.0
    %1843 = vmatprep.mubr.f32.mxu0 0.0
    %1844 = vmatmul.mubr.f32.gmra.mrb[0].mxu0 %v1777
    %v1845 = vpop.f32.mrb[0].mxu0
    %v1846 = vadd.f32 0.0, %v1845
    %v1847 = vpop.f32.mrb[0].mxu0
    %1848 = vdwg.mxu0
    %v1850 = vrot.slane %v1846, 6
    %v1851 = vrot.slane %v1846, 7
    %1852 = vrot.lane.b32.xlu0 %v1850, 64
    %v1853 = vpop.permute.xlu0 %1852
    %1854 = vrot.lane.b32.xlu0 %v1851, 64
    %v1855 = vpop.permute.xlu0 %1854
    %v1858 = vadd.f32 %v191, %v1853
    %v1859 = vadd.f32 %v196, %v1855
    %v1860 = vsub.f32 0.0, %v1770
    %v1861 = vsub.f32 0.0, %v1771
    %v1862 = vmul.f32 %v1860, 1.442695
    %v1863 = vpow.pop %v1862
    %v1864 = vmul.f32 %v1861, 1.442695
    %v1865 = vpow.pop %v1864
    %v1866 = vadd.f32 %v1863, 1.0
    %v1867 = vadd.f32 %v1865, 1.0
    %v1868 = vrcp.pop %v1866
    %v1869 = vmul.f32 1.0, %v1868
    %v1870 = vrcp.pop %v1867
    %v1871 = vmul.f32 1.0, %v1870
    %v1872 = vtanh.pop %v1770
    %v1873 = vtanh.pop %v1771
    %v1876 = vrot.slane %v1598, 7
    %v1877 = vrot.slane %v1599, 7
    %v1880 = vmul.f32 %v1869, %v1876
    %v1881 = vmul.f32 %v1871, %v1877
    %1884 = vrot.lane.b32.xlu0 %v1872, 96
    %v1885 = vpop.permute.xlu0 %1884
    %1886 = vrot.lane.b32.xlu0 %v1873, 96
    %v1887 = vpop.permute.xlu0 %1886
    %v1890 = vmul.f32 %v1869, %v1885
    %v1891 = vmul.f32 %v1871, %v1887
    %1894 = vrot.lane.b32.xlu0 %v1890, 16
    %v1895 = vpop.permute.xlu0 %1894
    %1896 = vrot.lane.b32.xlu0 %v1891, 16
    %v1897 = vpop.permute.xlu0 %1896
    %v1900 = vadd.f32 %v1880, %v1895
    %v1901 = vadd.f32 %v1881, %v1897
    %v1902 = vtanh.pop %v1900
    %v1903 = vtanh.pop %v1901
    %1906 = vrot.lane.b32.xlu0 %v1902, 32
    %v1907 = vpop.permute.xlu0 %1906
    %1908 = vrot.lane.b32.xlu0 %v1903, 32
    %v1909 = vpop.permute.xlu0 %1908
    %v1912 = vmul.f32 %v1869, %v1907
    %v1913 = vmul.f32 %v1871, %v1909
    %v1914 = vsub.f32 0.0, %v1858
    %v1915 = vsub.f32 0.0, %v1859
    %v1916 = vmul.f32 %v1914, 1.442695
    %v1917 = vpow.pop %v1916
    %v1918 = vmul.f32 %v1915, 1.442695
    %v1919 = vpow.pop %v1918
    %v1920 = vadd.f32 %v1917, 1.0
    %v1921 = vadd.f32 %v1919, 1.0
    %v1922 = vrcp.pop %v1920
    %v1923 = vmul.f32 1.0, %v1922
    %v1924 = vrcp.pop %v1921
    %v1925 = vmul.f32 1.0, %v1924
    %v1926 = vtanh.pop %v1858
    %v1927 = vtanh.pop %v1859
    %v1930 = vrot.slane %v1652, 1
    %v1931 = vrot.slane %v1653, 1
    %v1934 = vmul.f32 %v1923, %v1930
    %v1935 = vmul.f32 %v1925, %v1931
    %1938 = vrot.lane.b32.xlu0 %v1926, 96
    %v1939 = vpop.permute.xlu0 %1938
    %1940 = vrot.lane.b32.xlu0 %v1927, 96
    %v1941 = vpop.permute.xlu0 %1940
    %v1944 = vmul.f32 %v1923, %v1939
    %v1945 = vmul.f32 %v1925, %v1941
    %1948 = vrot.lane.b32.xlu0 %v1944, 16
    %v1949 = vpop.permute.xlu0 %1948
    %1950 = vrot.lane.b32.xlu0 %v1945, 16
    %v1951 = vpop.permute.xlu0 %1950
    %v1954 = vadd.f32 %v1934, %v1949
    %v1955 = vadd.f32 %v1935, %v1951
    %v1956 = vtanh.pop %v1954
    %v1957 = vtanh.pop %v1955
    %1960 = vrot.lane.b32.xlu0 %v1956, 32
    %v1961 = vpop.permute.xlu0 %1960
    %1962 = vrot.lane.b32.xlu0 %v1957, 32
    %v1963 = vpop.permute.xlu0 %1962
    %v1966 = vmul.f32 %v1923, %v1961
    %v1967 = vmul.f32 %v1925, %v1963
    %1970 = vrot.lane.b32.xlu0 %v1912, 80
    %v1971 = vpop.permute.xlu0 %1970
    %1972 = vrot.lane.b32.xlu0 %v1913, 80
    %v1973 = vpop.permute.xlu0 %1972
    %vm1976 = vcmask 128005
    %1977 = vst.msk [vmem:[#allocation2] sm:$0x20] %vm1976, %v1971
    %1978 = vst.msk [vmem:[#allocation2 + $0x8] sm:$0x20] %vm1976, %v1973
    %1981 = vrot.lane.b32.xlu0 %v1966, 32
    %v1982 = vpop.permute.xlu0 %1981
    %1983 = vrot.lane.b32.xlu0 %v1967, 32
    %v1984 = vpop.permute.xlu0 %1983
    %vm1987 = vcmask 256130
    %1988 = vst.msk [vmem:[#allocation2] sm:$0x4] %vm1987, %v1982
    %1989 = vst.msk [vmem:[#allocation2 + $0x8] sm:$0x4] %vm1987, %v1984
    %v1990 = vrot.slane %v1912, 5
    %v1991 = vrot.slane %v1913, 4
    %v1992 = vsel %vm483, %v1991, %v1990
    %1993 = vrot.lane.b32.xlu0 %v1992, 80
    %v1994 = vpop.permute.xlu0 %1993
    %v1995 = vsel %vm203, %v1994, 0
    %1997 = vmatprep.subr.mxu0 0.0
    %1998 = vmatpush1.msra.mxu0 %v199
    %1999 = vmatprep.subr.mxu0 0.0
    %2000 = vmatpush1.msra.mxu0 %v200
    %2001 = vmatprep.subr.mxu0 0.0
    %2002 = vmatpush1.msra.mxu0 0.0
    %2003 = vmatprep.subr.mxu0 0.0
    %2004 = vmatpush1.msra.mxu0 0.0
    %2005 = vmatprep.subr.mxu0 0.0
    %2006 = vmatpush1.msra.mxu0 0.0
    %2007 = vmatprep.subr.mxu0 0.0
    %2008 = vmatpush1.msra.mxu0 0.0
    %2009 = vmatprep.subr.mxu0 0.0
    %2010 = vmatpush1.msra.mxu0 0.0
    %2011 = vmatprep.subr.mxu0 0.0
    %2012 = vmatpush1.msra.mxu0 0.0
    %2013 = vmatprep.subr.mxu0 0.0
    %2014 = vmatpush1.msra.mxu0 0.0
    %2015 = vmatprep.subr.mxu0 0.0
    %2016 = vmatpush1.msra.mxu0 0.0
    %2017 = vmatprep.subr.mxu0 0.0
    %2018 = vmatpush1.msra.mxu0 0.0
    %2019 = vmatprep.subr.mxu0 0.0
    %2020 = vmatpush1.msra.mxu0 0.0
    %2021 = vmatprep.subr.mxu0 0.0
    %2022 = vmatpush1.msra.mxu0 0.0
    %2023 = vmatprep.subr.mxu0 0.0
    %2024 = vmatpush1.msra.mxu0 0.0
    %2025 = vmatprep.subr.mxu0 0.0
    %2026 = vmatpush1.msra.mxu0 0.0
    %2027 = vmatprep.subr.mxu0 0.0
    %2028 = vmatpush1.msra.mxu0 0.0
    %2029 = vmatprep.subr.mxu0 0.0
    %2030 = vmatpush1.msra.mxu0 0.0
    %2031 = vmatprep.subr.mxu0 0.0
    %2032 = vmatpush1.msra.mxu0 0.0
    %2033 = vmatprep.subr.mxu0 0.0
    %2034 = vmatpush1.msra.mxu0 0.0
    %2035 = vmatprep.subr.mxu0 0.0
    %2036 = vmatpush1.msra.mxu0 0.0
    %2037 = vmatprep.subr.mxu0 0.0
    %2038 = vmatpush1.msra.mxu0 0.0
    %2039 = vmatprep.subr.mxu0 0.0
    %2040 = vmatpush1.msra.mxu0 0.0
    %2041 = vmatprep.subr.mxu0 0.0
    %2042 = vmatpush1.msra.mxu0 0.0
    %2043 = vmatprep.subr.mxu0 0.0
    %2044 = vmatpush1.msra.mxu0 0.0
    %2045 = vmatprep.subr.mxu0 0.0
    %2046 = vmatpush1.msra.mxu0 0.0
    %2047 = vmatprep.subr.mxu0 0.0
    %2048 = vmatpush1.msra.mxu0 0.0
    %2049 = vmatprep.subr.mxu0 0.0
    %2050 = vmatpush1.msra.mxu0 0.0
    %2051 = vmatprep.subr.mxu0 0.0
    %2052 = vmatpush1.msra.mxu0 0.0
    %2053 = vmatprep.subr.mxu0 0.0
    %2054 = vmatpush1.msra.mxu0 0.0
    %2055 = vmatprep.subr.mxu0 0.0
    %2056 = vmatpush1.msra.mxu0 0.0
    %2057 = vmatprep.subr.mxu0 0.0
    %2058 = vmatpush1.msra.mxu0 0.0
    %2059 = vmatprep.subr.mxu0 0.0
    %2060 = vmatpush1.msra.mxu0 0.0
    %2061 = vmatprep.mubr.f32.mxu0 0.0
    %2062 = vmatmul.mubr.f32.gmra.mrb[0].mxu0 %v1995
    %v2063 = vpop.f32.mrb[0].mxu0
    %v2064 = vadd.f32 0.0, %v2063
    %v2065 = vpop.f32.mrb[0].mxu0
    %2066 = vdwg.mxu0
    %v2068 = vrot.slane %v2064, 2
    %v2069 = vrot.slane %v2064, 3
    %v2072 = vadd.f32 %v191, %v2068
    %v2073 = vadd.f32 %v196, %v2069
    %v2074 = vrot.slane %v1966, 2
    %v2075 = vrot.slane %v1967, 1
    %v2076 = vsel %vm483, %v2075, %v2074
    %2077 = vrot.lane.b32.xlu0 %v2076, 16
    %v2078 = vpop.permute.xlu0 %2077
    %v2079 = vsel %vm203, %v2078, 0
    %2081 = vmatprep.subr.mxu0 0.0
    %2082 = vmatpush1.msra.mxu0 %v201
    %2083 = vmatprep.subr.mxu0 0.0
    %2084 = vmatpush1.msra.mxu0 %v202
    %2085 = vmatprep.subr.mxu0 0.0
    %2086 = vmatpush1.msra.mxu0 0.0
    %2087 = vmatprep.subr.mxu0 0.0
    %2088 = vmatpush1.msra.mxu0 0.0
    %2089 = vmatprep.subr.mxu0 0.0
    %2090 = vmatpush1.msra.mxu0 0.0
    %2091 = vmatprep.subr.mxu0 0.0
    %2092 = vmatpush1.msra.mxu0 0.0
    %2093 = vmatprep.subr.mxu0 0.0
    %2094 = vmatpush1.msra.mxu0 0.0
    %2095 = vmatprep.subr.mxu0 0.0
    %2096 = vmatpush1.msra.mxu0 0.0
    %2097 = vmatprep.subr.mxu0 0.0
    %2098 = vmatpush1.msra.mxu0 0.0
    %2099 = vmatprep.subr.mxu0 0.0
    %2100 = vmatpush1.msra.mxu0 0.0
    %2101 = vmatprep.subr.mxu0 0.0
    %2102 = vmatpush1.msra.mxu0 0.0
    %2103 = vmatprep.subr.mxu0 0.0
    %2104 = vmatpush1.msra.mxu0 0.0
    %2105 = vmatprep.subr.mxu0 0.0
    %2106 = vmatpush1.msra.mxu0 0.0
    %2107 = vmatprep.subr.mxu0 0.0
    %2108 = vmatpush1.msra.mxu0 0.0
    %2109 = vmatprep.subr.mxu0 0.0
    %2110 = vmatpush1.msra.mxu0 0.0
    %2111 = vmatprep.subr.mxu0 0.0
    %2112 = vmatpush1.msra.mxu0 0.0
    %2113 = vmatprep.subr.mxu0 0.0
    %2114 = vmatpush1.msra.mxu0 0.0
    %2115 = vmatprep.subr.mxu0 0.0
    %2116 = vmatpush1.msra.mxu0 0.0
    %2117 = vmatprep.subr.mxu0 0.0
    %2118 = vmatpush1.msra.mxu0 0.0
    %2119 = vmatprep.subr.mxu0 0.0
    %2120 = vmatpush1.msra.mxu0 0.0
    %2121 = vmatprep.subr.mxu0 0.0
    %2122 = vmatpush1.msra.mxu0 0.0
    %2123 = vmatprep.subr.mxu0 0.0
    %2124 = vmatpush1.msra.mxu0 0.0
    %2125 = vmatprep.subr.mxu0 0.0
    %2126 = vmatpush1.msra.mxu0 0.0
    %2127 = vmatprep.subr.mxu0 0.0
    %2128 = vmatpush1.msra.mxu0 0.0
    %2129 = vmatprep.subr.mxu0 0.0
    %2130 = vmatpush1.msra.mxu0 0.0
    %2131 = vmatprep.subr.mxu0 0.0
    %2132 = vmatpush1.msra.mxu0 0.0
    %2133 = vmatprep.subr.mxu0 0.0
    %2134 = vmatpush1.msra.mxu0 0.0
    %2135 = vmatprep.subr.mxu0 0.0
    %2136 = vmatpush1.msra.mxu0 0.0
    %2137 = vmatprep.subr.mxu0 0.0
    %2138 = vmatpush1.msra.mxu0 0.0
    %2139 = vmatprep.subr.mxu0 0.0
    %2140 = vmatpush1.msra.mxu0 0.0
    %2141 = vmatprep.subr.mxu0 0.0
    %2142 = vmatpush1.msra.mxu0 0.0
    %2143 = vmatprep.subr.mxu0 0.0
    %2144 = vmatpush1.msra.mxu0 0.0
    %2145 = vmatprep.mubr.f32.mxu0 0.0
    %2146 = vmatmul.mubr.f32.gmra.mrb[0].mxu0 %v2079
    %v2147 = vpop.f32.mrb[0].mxu0
    %v2148 = vadd.f32 0.0, %v2147
    %v2149 = vpop.f32.mrb[0].mxu0
    %2150 = vdwg.mxu0
    %v2152 = vrot.slane %v2148, 7
    %2153 = vrot.lane.b32.xlu0 %v2152, 64
    %v2154 = vpop.permute.xlu0 %2153
    %2155 = vrot.lane.b32.xlu0 %v2148, 64
    %v2156 = vpop.permute.xlu0 %2155
    %v2159 = vadd.f32 %v191, %v2154
    %v2160 = vadd.f32 %v196, %v2156
    %v2161 = vsub.f32 0.0, %v2072
    %v2162 = vsub.f32 0.0, %v2073
    %v2163 = vmul.f32 %v2161, 1.442695
    %v2164 = vpow.pop %v2163
    %v2165 = vmul.f32 %v2162, 1.442695
    %v2166 = vpow.pop %v2165
    %v2167 = vadd.f32 %v2164, 1.0
    %v2168 = vadd.f32 %v2166, 1.0
    %v2169 = vrcp.pop %v2167
    %v2170 = vmul.f32 1.0, %v2169
    %v2171 = vrcp.pop %v2168
    %v2172 = vmul.f32 1.0, %v2171
    %v2173 = vtanh.pop %v2072
    %v2174 = vtanh.pop %v2073
    %v2177 = vrot.slane %v1900, 7
    %v2178 = vrot.slane %v1901, 7
    %v2181 = vmul.f32 %v2170, %v2177
    %v2182 = vmul.f32 %v2172, %v2178
    %2185 = vrot.lane.b32.xlu0 %v2173, 96
    %v2186 = vpop.permute.xlu0 %2185
    %2187 = vrot.lane.b32.xlu0 %v2174, 96
    %v2188 = vpop.permute.xlu0 %2187
    %v2191 = vmul.f32 %v2170, %v2186
    %v2192 = vmul.f32 %v2172, %v2188
    %2195 = vrot.lane.b32.xlu0 %v2191, 16
    %v2196 = vpop.permute.xlu0 %2195
    %2197 = vrot.lane.b32.xlu0 %v2192, 16
    %v2198 = vpop.permute.xlu0 %2197
    %v2201 = vadd.f32 %v2181, %v2196
    %v2202 = vadd.f32 %v2182, %v2198
    %v2203 = vtanh.pop %v2201
    %v2204 = vtanh.pop %v2202
    %2207 = vrot.lane.b32.xlu0 %v2203, 32
    %v2208 = vpop.permute.xlu0 %2207
    %2209 = vrot.lane.b32.xlu0 %v2204, 32
    %v2210 = vpop.permute.xlu0 %2209
    %v2213 = vmul.f32 %v2170, %v2208
    %v2214 = vmul.f32 %v2172, %v2210
    %v2215 = vsub.f32 0.0, %v2159
    %v2216 = vsub.f32 0.0, %v2160
    %v2217 = vmul.f32 %v2215, 1.442695
    %v2218 = vpow.pop %v2217
    %v2219 = vmul.f32 %v2216, 1.442695
    %v2220 = vpow.pop %v2219
    %v2221 = vadd.f32 %v2218, 1.0
    %v2222 = vadd.f32 %v2220, 1.0
    %v2223 = vrcp.pop %v2221
    %v2224 = vmul.f32 1.0, %v2223
    %v2225 = vrcp.pop %v2222
    %v2226 = vmul.f32 1.0, %v2225
    %v2227 = vtanh.pop %v2159
    %v2228 = vtanh.pop %v2160
    %v2231 = vrot.slane %v1954, 1
    %v2232 = vrot.slane %v1955, 1
    %v2235 = vmul.f32 %v2224, %v2231
    %v2236 = vmul.f32 %v2226, %v2232
    %2239 = vrot.lane.b32.xlu0 %v2227, 96
    %v2240 = vpop.permute.xlu0 %2239
    %2241 = vrot.lane.b32.xlu0 %v2228, 96
    %v2242 = vpop.permute.xlu0 %2241
    %v2245 = vmul.f32 %v2224, %v2240
    %v2246 = vmul.f32 %v2226, %v2242
    %2249 = vrot.lane.b32.xlu0 %v2245, 16
    %v2250 = vpop.permute.xlu0 %2249
    %2251 = vrot.lane.b32.xlu0 %v2246, 16
    %v2252 = vpop.permute.xlu0 %2251
    %v2255 = vadd.f32 %v2235, %v2250
    %v2256 = vadd.f32 %v2236, %v2252
    %v2257 = vtanh.pop %v2255
    %v2258 = vtanh.pop %v2256
    %2261 = vrot.lane.b32.xlu0 %v2257, 32
    %v2262 = vpop.permute.xlu0 %2261
    %2263 = vrot.lane.b32.xlu0 %v2258, 32
    %v2264 = vpop.permute.xlu0 %2263
    %v2267 = vmul.f32 %v2224, %v2262
    %v2268 = vmul.f32 %v2226, %v2264
    %2271 = vrot.lane.b32.xlu0 %v2213, 80
    %v2272 = vpop.permute.xlu0 %2271
    %2273 = vrot.lane.b32.xlu0 %v2214, 80
    %v2274 = vpop.permute.xlu0 %2273
    %vm2277 = vcmask 129030
    %2278 = vst.msk [vmem:[#allocation2] sm:$0x40] %vm2277, %v2272
    %2279 = vst.msk [vmem:[#allocation2 + $0x8] sm:$0x40] %vm2277, %v2274
    %2282 = vrot.lane.b32.xlu0 %v2267, 32
    %v2283 = vpop.permute.xlu0 %2282
    %2284 = vrot.lane.b32.xlu0 %v2268, 32
    %v2285 = vpop.permute.xlu0 %2284
    %vm2288 = vcmask 255105
    %2289 = vst.msk [vmem:[#allocation2] sm:$0x2] %vm2288, %v2283
    %2290 = vst.msk [vmem:[#allocation2 + $0x8] sm:$0x2] %vm2288, %v2285
    %v2291 = vrot.slane %v2213, 6
    %v2292 = vrot.slane %v2214, 5
    %v2293 = vsel %vm483, %v2292, %v2291
    %2294 = vrot.lane.b32.xlu0 %v2293, 80
    %v2295 = vpop.permute.xlu0 %2294
    %v2296 = vsel %vm203, %v2295, 0
    %2298 = vmatprep.subr.mxu0 0.0
    %2299 = vmatpush1.msra.mxu0 %v199
    %2300 = vmatprep.subr.mxu0 0.0
    %2301 = vmatpush1.msra.mxu0 %v200
    %2302 = vmatprep.subr.mxu0 0.0
    %2303 = vmatpush1.msra.mxu0 0.0
    %2304 = vmatprep.subr.mxu0 0.0
    %2305 = vmatpush1.msra.mxu0 0.0
    %2306 = vmatprep.subr.mxu0 0.0
    %2307 = vmatpush1.msra.mxu0 0.0
    %2308 = vmatprep.subr.mxu0 0.0
    %2309 = vmatpush1.msra.mxu0 0.0
    %2310 = vmatprep.subr.mxu0 0.0
    %2311 = vmatpush1.msra.mxu0 0.0
    %2312 = vmatprep.subr.mxu0 0.0
    %2313 = vmatpush1.msra.mxu0 0.0
    %2314 = vmatprep.subr.mxu0 0.0
    %2315 = vmatpush1.msra.mxu0 0.0
    %2316 = vmatprep.subr.mxu0 0.0
    %2317 = vmatpush1.msra.mxu0 0.0
    %2318 = vmatprep.subr.mxu0 0.0
    %2319 = vmatpush1.msra.mxu0 0.0
    %2320 = vmatprep.subr.mxu0 0.0
    %2321 = vmatpush1.msra.mxu0 0.0
    %2322 = vmatprep.subr.mxu0 0.0
    %2323 = vmatpush1.msra.mxu0 0.0
    %2324 = vmatprep.subr.mxu0 0.0
    %2325 = vmatpush1.msra.mxu0 0.0
    %2326 = vmatprep.subr.mxu0 0.0
    %2327 = vmatpush1.msra.mxu0 0.0
    %2328 = vmatprep.subr.mxu0 0.0
    %2329 = vmatpush1.msra.mxu0 0.0
    %2330 = vmatprep.subr.mxu0 0.0
    %2331 = vmatpush1.msra.mxu0 0.0
    %2332 = vmatprep.subr.mxu0 0.0
    %2333 = vmatpush1.msra.mxu0 0.0
    %2334 = vmatprep.subr.mxu0 0.0
    %2335 = vmatpush1.msra.mxu0 0.0
    %2336 = vmatprep.subr.mxu0 0.0
    %2337 = vmatpush1.msra.mxu0 0.0
    %2338 = vmatprep.subr.mxu0 0.0
    %2339 = vmatpush1.msra.mxu0 0.0
    %2340 = vmatprep.subr.mxu0 0.0
    %2341 = vmatpush1.msra.mxu0 0.0
    %2342 = vmatprep.subr.mxu0 0.0
    %2343 = vmatpush1.msra.mxu0 0.0
    %2344 = vmatprep.subr.mxu0 0.0
    %2345 = vmatpush1.msra.mxu0 0.0
    %2346 = vmatprep.subr.mxu0 0.0
    %2347 = vmatpush1.msra.mxu0 0.0
    %2348 = vmatprep.subr.mxu0 0.0
    %2349 = vmatpush1.msra.mxu0 0.0
    %2350 = vmatprep.subr.mxu0 0.0
    %2351 = vmatpush1.msra.mxu0 0.0
    %2352 = vmatprep.subr.mxu0 0.0
    %2353 = vmatpush1.msra.mxu0 0.0
    %2354 = vmatprep.subr.mxu0 0.0
    %2355 = vmatpush1.msra.mxu0 0.0
    %2356 = vmatprep.subr.mxu0 0.0
    %2357 = vmatpush1.msra.mxu0 0.0
    %2358 = vmatprep.subr.mxu0 0.0
    %2359 = vmatpush1.msra.mxu0 0.0
    %2360 = vmatprep.subr.mxu0 0.0
    %2361 = vmatpush1.msra.mxu0 0.0
    %2362 = vmatprep.mubr.f32.mxu0 0.0
    %2363 = vmatmul.mubr.f32.gmra.mrb[0].mxu0 %v2296
    %v2364 = vpop.f32.mrb[0].mxu0
    %v2365 = vadd.f32 0.0, %v2364
    %v2366 = vpop.f32.mrb[0].mxu0
    %2367 = vdwg.mxu0
    %v2369 = vrot.slane %v2365, 1
    %v2370 = vrot.slane %v2365, 2
    %v2373 = vadd.f32 %v191, %v2369
    %v2374 = vadd.f32 %v196, %v2370
    %v2375 = vrot.slane %v2267, 1
    %v2376 = vsel %vm483, %v2268, %v2375
    %2377 = vrot.lane.b32.xlu0 %v2376, 16
    %v2378 = vpop.permute.xlu0 %2377
    %v2379 = vsel %vm203, %v2378, 0
    %2381 = vmatprep.subr.mxu0 0.0
    %2382 = vmatpush1.msra.mxu0 %v201
    %2383 = vmatprep.subr.mxu0 0.0
    %2384 = vmatpush1.msra.mxu0 %v202
    %2385 = vmatprep.subr.mxu0 0.0
    %2386 = vmatpush1.msra.mxu0 0.0
    %2387 = vmatprep.subr.mxu0 0.0
    %2388 = vmatpush1.msra.mxu0 0.0
    %2389 = vmatprep.subr.mxu0 0.0
    %2390 = vmatpush1.msra.mxu0 0.0
    %2391 = vmatprep.subr.mxu0 0.0
    %2392 = vmatpush1.msra.mxu0 0.0
    %2393 = vmatprep.subr.mxu0 0.0
    %2394 = vmatpush1.msra.mxu0 0.0
    %2395 = vmatprep.subr.mxu0 0.0
    %2396 = vmatpush1.msra.mxu0 0.0
    %2397 = vmatprep.subr.mxu0 0.0
    %2398 = vmatpush1.msra.mxu0 0.0
    %2399 = vmatprep.subr.mxu0 0.0
    %2400 = vmatpush1.msra.mxu0 0.0
    %2401 = vmatprep.subr.mxu0 0.0
    %2402 = vmatpush1.msra.mxu0 0.0
    %2403 = vmatprep.subr.mxu0 0.0
    %2404 = vmatpush1.msra.mxu0 0.0
    %2405 = vmatprep.subr.mxu0 0.0
    %2406 = vmatpush1.msra.mxu0 0.0
    %2407 = vmatprep.subr.mxu0 0.0
    %2408 = vmatpush1.msra.mxu0 0.0
    %2409 = vmatprep.subr.mxu0 0.0
    %2410 = vmatpush1.msra.mxu0 0.0
    %2411 = vmatprep.subr.mxu0 0.0
    %2412 = vmatpush1.msra.mxu0 0.0
    %2413 = vmatprep.subr.mxu0 0.0
    %2414 = vmatpush1.msra.mxu0 0.0
    %2415 = vmatprep.subr.mxu0 0.0
    %2416 = vmatpush1.msra.mxu0 0.0
    %2417 = vmatprep.subr.mxu0 0.0
    %2418 = vmatpush1.msra.mxu0 0.0
    %2419 = vmatprep.subr.mxu0 0.0
    %2420 = vmatpush1.msra.mxu0 0.0
    %2421 = vmatprep.subr.mxu0 0.0
    %2422 = vmatpush1.msra.mxu0 0.0
    %2423 = vmatprep.subr.mxu0 0.0
    %2424 = vmatpush1.msra.mxu0 0.0
    %2425 = vmatprep.subr.mxu0 0.0
    %2426 = vmatpush1.msra.mxu0 0.0
    %2427 = vmatprep.subr.mxu0 0.0
    %2428 = vmatpush1.msra.mxu0 0.0
    %2429 = vmatprep.subr.mxu0 0.0
    %2430 = vmatpush1.msra.mxu0 0.0
    %2431 = vmatprep.subr.mxu0 0.0
    %2432 = vmatpush1.msra.mxu0 0.0
    %2433 = vmatprep.subr.mxu0 0.0
    %2434 = vmatpush1.msra.mxu0 0.0
    %2435 = vmatprep.subr.mxu0 0.0
    %2436 = vmatpush1.msra.mxu0 0.0
    %2437 = vmatprep.subr.mxu0 0.0
    %2438 = vmatpush1.msra.mxu0 0.0
    %2439 = vmatprep.subr.mxu0 0.0
    %2440 = vmatpush1.msra.mxu0 0.0
    %2441 = vmatprep.subr.mxu0 0.0
    %2442 = vmatpush1.msra.mxu0 0.0
    %2443 = vmatprep.subr.mxu0 0.0
    %2444 = vmatpush1.msra.mxu0 0.0
    %2445 = vmatprep.mubr.f32.mxu0 0.0
    %2446 = vmatmul.mubr.f32.gmra.mrb[0].mxu0 %v2379
    %v2447 = vpop.f32.mrb[0].mxu0
    %v2448 = vadd.f32 0.0, %v2447
    %v2449 = vpop.f32.mrb[0].mxu0
    %2450 = vdwg.mxu0
    %v2452 = vrot.slane %v2448, 1
    %2453 = vrot.lane.b32.xlu0 %v2448, 64
    %v2454 = vpop.permute.xlu0 %2453
    %2455 = vrot.lane.b32.xlu0 %v2452, 64
    %v2456 = vpop.permute.xlu0 %2455
    %v2459 = vadd.f32 %v191, %v2454
    %v2460 = vadd.f32 %v196, %v2456
    %v2461 = vsub.f32 0.0, %v2373
    %v2462 = vsub.f32 0.0, %v2374
    %v2463 = vmul.f32 %v2461, 1.442695
    %v2464 = vpow.pop %v2463
    %v2465 = vmul.f32 %v2462, 1.442695
    %v2466 = vpow.pop %v2465
    %v2467 = vadd.f32 %v2464, 1.0
    %v2468 = vadd.f32 %v2466, 1.0
    %v2469 = vrcp.pop %v2467
    %v2470 = vmul.f32 1.0, %v2469
    %v2471 = vrcp.pop %v2468
    %v2472 = vmul.f32 1.0, %v2471
    %v2473 = vtanh.pop %v2373
    %v2474 = vtanh.pop %v2374
    %v2477 = vrot.slane %v2201, 7
    %v2478 = vrot.slane %v2202, 7
    %v2481 = vmul.f32 %v2470, %v2477
    %v2482 = vmul.f32 %v2472, %v2478
    %2485 = vrot.lane.b32.xlu0 %v2473, 96
    %v2486 = vpop.permute.xlu0 %2485
    %2487 = vrot.lane.b32.xlu0 %v2474, 96
    %v2488 = vpop.permute.xlu0 %2487
    %v2491 = vmul.f32 %v2470, %v2486
    %v2492 = vmul.f32 %v2472, %v2488
    %2495 = vrot.lane.b32.xlu0 %v2491, 16
    %v2496 = vpop.permute.xlu0 %2495
    %2497 = vrot.lane.b32.xlu0 %v2492, 16
    %v2498 = vpop.permute.xlu0 %2497
    %v2501 = vadd.f32 %v2481, %v2496
    %v2502 = vadd.f32 %v2482, %v2498
    %v2503 = vtanh.pop %v2501
    %v2504 = vtanh.pop %v2502
    %2507 = vrot.lane.b32.xlu0 %v2503, 32
    %v2508 = vpop.permute.xlu0 %2507
    %2509 = vrot.lane.b32.xlu0 %v2504, 32
    %v2510 = vpop.permute.xlu0 %2509
    %v2513 = vmul.f32 %v2470, %v2508
    %v2514 = vmul.f32 %v2472, %v2510
    %v2515 = vsub.f32 0.0, %v2459
    %v2516 = vsub.f32 0.0, %v2460
    %v2517 = vmul.f32 %v2515, 1.442695
    %v2518 = vpow.pop %v2517
    %v2519 = vmul.f32 %v2516, 1.442695
    %v2520 = vpow.pop %v2519
    %v2521 = vadd.f32 %v2518, 1.0
    %v2522 = vadd.f32 %v2520, 1.0
    %v2523 = vrcp.pop %v2521
    %v2524 = vmul.f32 1.0, %v2523
    %v2525 = vrcp.pop %v2522
    %v2526 = vmul.f32 1.0, %v2525
    %v2527 = vtanh.pop %v2459
    %v2528 = vtanh.pop %v2460
    %v2531 = vrot.slane %v2255, 1
    %v2532 = vrot.slane %v2256, 1
    %v2535 = vmul.f32 %v2524, %v2531
    %v2536 = vmul.f32 %v2526, %v2532
    %2539 = vrot.lane.b32.xlu0 %v2527, 96
    %v2540 = vpop.permute.xlu0 %2539
    %2541 = vrot.lane.b32.xlu0 %v2528, 96
    %v2542 = vpop.permute.xlu0 %2541
    %v2545 = vmul.f32 %v2524, %v2540
    %v2546 = vmul.f32 %v2526, %v2542
    %2549 = vrot.lane.b32.xlu0 %v2545, 16
    %v2550 = vpop.permute.xlu0 %2549
    %2551 = vrot.lane.b32.xlu0 %v2546, 16
    %v2552 = vpop.permute.xlu0 %2551
    %v2555 = vadd.f32 %v2535, %v2550
    %v2556 = vadd.f32 %v2536, %v2552
    %v2557 = vtanh.pop %v2555
    %v2558 = vtanh.pop %v2556
    %2561 = vrot.lane.b32.xlu0 %v2557, 32
    %v2562 = vpop.permute.xlu0 %2561
    %2563 = vrot.lane.b32.xlu0 %v2558, 32
    %v2564 = vpop.permute.xlu0 %2563
    %v2567 = vmul.f32 %v2524, %v2562
    %v2568 = vmul.f32 %v2526, %v2564
    %2571 = vrot.lane.b32.xlu0 %v2513, 80
    %v2572 = vpop.permute.xlu0 %2571
    %2573 = vrot.lane.b32.xlu0 %v2514, 80
    %v2574 = vpop.permute.xlu0 %2573
    %vm2577 = vcmask 130055
    %2578 = vst.msk [vmem:[#allocation2] sm:$0x80] %vm2577, %v2572
    %2579 = vst.msk [vmem:[#allocation2 + $0x8] sm:$0x80] %vm2577, %v2574
    %2582 = vrot.lane.b32.xlu0 %v2567, 32
    %v2583 = vpop.permute.xlu0 %2582
    %2584 = vrot.lane.b32.xlu0 %v2568, 32
    %v2585 = vpop.permute.xlu0 %2584
    %vm2588 = vcmask 254080
    %2589 = vst.msk [vmem:[#allocation2] sm:$0x1] %vm2588, %v2583
    %2590 = vst.msk [vmem:[#allocation2 + $0x8] sm:$0x1] %vm2588, %v2585
    %v2591 = vld [vmem:[#allocation2] sm:$0xff]
    %v2592 = vld [vmem:[#allocation2 + $0x8] sm:$0xff]
    %v2593 = vld [vmem:[%s5] sm:$0xff]
    %v2594 = vld [vmem:[%s5 + $0x8] sm:$0xff]
    %v2595 = vld [vmem:[%s5 + $0x10] sm:$0xff]
    %v2596 = vld [vmem:[%s5 + $0x18] sm:$0xff]
    %v2597 = vld [vmem:[%s6] sm:$0x1]
    %v2599 = vlaneseq
    %v2600 = vshrl.u32 %v2599, 7
    %v2601 = vsub.s32 0, %v2600
    %v2602 = vrot.slane %v2597, %v2601
    %v2605 = vsel %vm117, %v2591, 0
    %v2608 = vsel %vm117, %v2592, 0
    %2610 = vmatprep.subr.mxu0 0.0
    %2611 = vmatpush1.msra.mxu0 %v2593
    %2612 = vmatprep.subr.mxu0 0.0
    %2613 = vmatpush1.msra.mxu0 %v2594
    %2614 = vmatprep.subr.mxu0 0.0
    %2615 = vmatpush1.msra.mxu0 %v2595
    %2616 = vmatprep.subr.mxu0 0.0
    %2617 = vmatpush1.msra.mxu0 %v2596
    %2618 = vmatprep.subr.mxu0 0.0
    %2619 = vmatpush1.msra.mxu0 0.0
    %2620 = vmatprep.subr.mxu0 0.0
    %2621 = vmatpush1.msra.mxu0 0.0
    %2622 = vmatprep.subr.mxu0 0.0
    %2623 = vmatpush1.msra.mxu0 0.0
    %2624 = vmatprep.subr.mxu0 0.0
    %2625 = vmatpush1.msra.mxu0 0.0
    %2626 = vmatprep.subr.mxu0 0.0
    %2627 = vmatpush1.msra.mxu0 0.0
    %2628 = vmatprep.subr.mxu0 0.0
    %2629 = vmatpush1.msra.mxu0 0.0
    %2630 = vmatprep.subr.mxu0 0.0
    %2631 = vmatpush1.msra.mxu0 0.0
    %2632 = vmatprep.subr.mxu0 0.0
    %2633 = vmatpush1.msra.mxu0 0.0
    %2634 = vmatprep.subr.mxu0 0.0
    %2635 = vmatpush1.msra.mxu0 0.0
    %2636 = vmatprep.subr.mxu0 0.0
    %2637 = vmatpush1.msra.mxu0 0.0
    %2638 = vmatprep.subr.mxu0 0.0
    %2639 = vmatpush1.msra.mxu0 0.0
    %2640 = vmatprep.subr.mxu0 0.0
    %2641 = vmatpush1.msra.mxu0 0.0
    %2642 = vmatprep.subr.mxu0 0.0
    %2643 = vmatpush1.msra.mxu0 0.0
    %2644 = vmatprep.subr.mxu0 0.0
    %2645 = vmatpush1.msra.mxu0 0.0
    %2646 = vmatprep.subr.mxu0 0.0
    %2647 = vmatpush1.msra.mxu0 0.0
    %2648 = vmatprep.subr.mxu0 0.0
    %2649 = vmatpush1.msra.mxu0 0.0
    %2650 = vmatprep.subr.mxu0 0.0
    %2651 = vmatpush1.msra.mxu0 0.0
    %2652 = vmatprep.subr.mxu0 0.0
    %2653 = vmatpush1.msra.mxu0 0.0
    %2654 = vmatprep.subr.mxu0 0.0
    %2655 = vmatpush1.msra.mxu0 0.0
    %2656 = vmatprep.subr.mxu0 0.0
    %2657 = vmatpush1.msra.mxu0 0.0
    %2658 = vmatprep.subr.mxu0 0.0
    %2659 = vmatpush1.msra.mxu0 0.0
    %2660 = vmatprep.subr.mxu0 0.0
    %2661 = vmatpush1.msra.mxu0 0.0
    %2662 = vmatprep.subr.mxu0 0.0
    %2663 = vmatpush1.msra.mxu0 0.0
    %2664 = vmatprep.subr.mxu0 0.0
    %2665 = vmatpush1.msra.mxu0 0.0
    %2666 = vmatprep.subr.mxu0 0.0
    %2667 = vmatpush1.msra.mxu0 0.0
    %2668 = vmatprep.subr.mxu0 0.0
    %2669 = vmatpush1.msra.mxu0 0.0
    %2670 = vmatprep.subr.mxu0 0.0
    %2671 = vmatpush1.msra.mxu0 0.0
    %2672 = vmatprep.subr.mxu0 0.0
    %2673 = vmatpush1.msra.mxu0 0.0
    %2674 = vmatprep.mubr.f32.mxu0 0.0
    %2675 = vmatmul.mubr.f32.gmra.mrb[0].mxu0 %v2605
    %v2676 = vpop.f32.mrb[0].mxu0
    %v2677 = vadd.f32 %v2602, %v2676
    %v2678 = vpop.f32.mrb[0].mxu0
    %2679 = vmatprep.mubr.f32.mxu0 0.0
    %2680 = vmatmul.mubr.f32.gmra.mrb[0].mxu0 %v2608
    %v2681 = vpop.f32.mrb[0].mxu0
    %v2682 = vadd.f32 %v2602, %v2681
    %v2683 = vpop.f32.mrb[0].mxu0
    %2684 = vdwg.mxu0
    %v2685 = vadd.f32 %v104, %v2677
    %v2686 = vadd.f32 %v105, %v2682
    %v2687 = vld [vmem:[%s7] sm:$0x1]
    %v2688 = vld [vmem:[%s8] sm:$0x1]
    %v2689 = vsel %vm117, %v2685, 0.0
    %2690 = vadd.xlane.f32.xlu0 %v2689
    %v2691 = vpop.xlane.xlu0 %2690
    %v2692 = vsel %vm117, %v2686, 0.0
    %2693 = vadd.xlane.f32.xlu0 %v2692
    %v2694 = vpop.xlane.xlu0 %2693
    %v2695 = vrcp.pop 32.0
    %v2696 = vmul.f32 %v2691, %v2695
    %v2697 = vmul.f32 %v2694, %v2695
    %v2698 = vsub.f32 %v2685, %v2696
    %v2699 = vsub.f32 %v2686, %v2697
    %v2700 = vmul.f32 %v2698, %v2698
    %v2701 = vmul.f32 %v2699, %v2699
    %v2702 = vsel %vm117, %v2700, 0.0
    %2703 = vadd.xlane.f32.xlu0 %v2702
    %v2704 = vpop.xlane.xlu0 %2703
    %v2705 = vsel %vm117, %v2701, 0.0
    %2706 = vadd.xlane.f32.xlu0 %v2705
    %v2707 = vpop.xlane.xlu0 %2706
    %v2708 = vmul.f32 %v2704, %v2695
    %v2709 = vmul.f32 %v2707, %v2695
    %v2710 = vadd.f32 %v2708, 1e-05
    %v2711 = vadd.f32 %v2709, 1e-05
    %v2712 = vrsqrt.pop %v2710
    %v2713 = vrsqrt.pop %v2711
    %v2714 = vmul.f32 %v2698, %v2712
    %v2715 = vmul.f32 %v2699, %v2713
    %v2717 = vlaneseq
    %v2718 = vshrl.u32 %v2717, 7
    %v2719 = vsub.s32 0, %v2718
    %v2720 = vrot.slane %v2687, %v2719
    %v2722 = vmul.f32 %v2714, %v2720
    %v2723 = vmul.f32 %v2715, %v2720
    %v2725 = vlaneseq
    %v2726 = vshrl.u32 %v2725, 7
    %v2727 = vsub.s32 0, %v2726
    %v2728 = vrot.slane %v2688, %v2727
    %v2730 = vadd.f32 %v2722, %v2728
    %v2731 = vadd.f32 %v2723, %v2728
    %v2732 = vld [vmem:[%s9] sm:$0xff]
    %v2733 = vld [vmem:[%s9 + $0x8] sm:$0xff]
    %v2734 = vld [vmem:[%s9 + $0x10] sm:$0xff]
    %v2735 = vld [vmem:[%s9 + $0x18] sm:$0xff]
    %v2736 = vld [vmem:[%s10] sm:$0x1]
    %v2738 = vlaneseq
    %v2739 = vshrl.u32 %v2738, 7
    %v2740 = vsub.s32 0, %v2739
    %v2741 = vrot.slane %v2736, %v2740
    %v2744 = vsel %vm117, %v2730, 0
    %v2747 = vsel %vm117, %v2731, 0
    %2749 = vmatprep.subr.mxu0 0.0
    %2750 = vmatpush1.msra.mxu0 %v2732
    %2751 = vmatprep.subr.mxu0 0.0
    %2752 = vmatpush1.msra.mxu0 %v2733
    %2753 = vmatprep.subr.mxu0 0.0
    %2754 = vmatpush1.msra.mxu0 %v2734
    %2755 = vmatprep.subr.mxu0 0.0
    %2756 = vmatpush1.msra.mxu0 %v2735
    %2757 = vmatprep.subr.mxu0 0.0
    %2758 = vmatpush1.msra.mxu0 0.0
    %2759 = vmatprep.subr.mxu0 0.0
    %2760 = vmatpush1.msra.mxu0 0.0
    %2761 = vmatprep.subr.mxu0 0.0
    %2762 = vmatpush1.msra.mxu0 0.0
    %2763 = vmatprep.subr.mxu0 0.0
    %2764 = vmatpush1.msra.mxu0 0.0
    %2765 = vmatprep.subr.mxu0 0.0
    %2766 = vmatpush1.msra.mxu0 0.0
    %2767 = vmatprep.subr.mxu0 0.0
    %2768 = vmatpush1.msra.mxu0 0.0
    %2769 = vmatprep.subr.mxu0 0.0
    %2770 = vmatpush1.msra.mxu0 0.0
    %2771 = vmatprep.subr.mxu0 0.0
    %2772 = vmatpush1.msra.mxu0 0.0
    %2773 = vmatprep.subr.mxu0 0.0
    %2774 = vmatpush1.msra.mxu0 0.0
    %2775 = vmatprep.subr.mxu0 0.0
    %2776 = vmatpush1.msra.mxu0 0.0
    %2777 = vmatprep.subr.mxu0 0.0
    %2778 = vmatpush1.msra.mxu0 0.0
    %2779 = vmatprep.subr.mxu0 0.0
    %2780 = vmatpush1.msra.mxu0 0.0
    %2781 = vmatprep.subr.mxu0 0.0
    %2782 = vmatpush1.msra.mxu0 0.0
    %2783 = vmatprep.subr.mxu0 0.0
    %2784 = vmatpush1.msra.mxu0 0.0
    %2785 = vmatprep.subr.mxu0 0.0
    %2786 = vmatpush1.msra.mxu0 0.0
    %2787 = vmatprep.subr.mxu0 0.0
    %2788 = vmatpush1.msra.mxu0 0.0
    %2789 = vmatprep.subr.mxu0 0.0
    %2790 = vmatpush1.msra.mxu0 0.0
    %2791 = vmatprep.subr.mxu0 0.0
    %2792 = vmatpush1.msra.mxu0 0.0
    %2793 = vmatprep.subr.mxu0 0.0
    %2794 = vmatpush1.msra.mxu0 0.0
    %2795 = vmatprep.subr.mxu0 0.0
    %2796 = vmatpush1.msra.mxu0 0.0
    %2797 = vmatprep.subr.mxu0 0.0
    %2798 = vmatpush1.msra.mxu0 0.0
    %2799 = vmatprep.subr.mxu0 0.0
    %2800 = vmatpush1.msra.mxu0 0.0
    %2801 = vmatprep.subr.mxu0 0.0
    %2802 = vmatpush1.msra.mxu0 0.0
    %2803 = vmatprep.subr.mxu0 0.0
    %2804 = vmatpush1.msra.mxu0 0.0
    %2805 = vmatprep.subr.mxu0 0.0
    %2806 = vmatpush1.msra.mxu0 0.0
    %2807 = vmatprep.subr.mxu0 0.0
    %2808 = vmatpush1.msra.mxu0 0.0
    %2809 = vmatprep.subr.mxu0 0.0
    %2810 = vmatpush1.msra.mxu0 0.0
    %2811 = vmatprep.subr.mxu0 0.0
    %2812 = vmatpush1.msra.mxu0 0.0
    %2813 = vmatprep.mubr.f32.mxu0 0.0
    %2814 = vmatmul.mubr.f32.gmra.mrb[0].mxu0 %v2744
    %v2815 = vpop.f32.mrb[0].mxu0
    %v2816 = vadd.f32 %v2741, %v2815
    %v2817 = vpop.f32.mrb[0].mxu0
    %2818 = vmatprep.mubr.f32.mxu0 0.0
    %2819 = vmatmul.mubr.f32.gmra.mrb[0].mxu0 %v2747
    %v2820 = vpop.f32.mrb[0].mxu0
    %v2821 = vadd.f32 %v2741, %v2820
    %v2822 = vpop.f32.mrb[0].mxu0
    %2823 = vdwg.mxu0
    %v2824 = vld [vmem:[%s11] sm:$0xff]
    %v2825 = vld [vmem:[%s11 + $0x8] sm:$0xff]
    %v2826 = vld [vmem:[%s11 + $0x10] sm:$0xff]
    %v2827 = vld [vmem:[%s11 + $0x18] sm:$0xff]
    %2829 = vrot.lane.b32.xlu0 %v2816, 96
    %v2830 = vpop.permute.xlu0 %2829
    %vm2831 = vcmask 64512
    %v2832 = vsel %vm2831, %v2816, 0
    %v2834 = vsel %vm2831, %v2830, 0
    %2836 = vmatprep.subr.mxu0 0.0
    %2837 = vmatpush1.xpose.msra.mxu0 %v2834
    %2838 = vmatprep.subr.mxu0 0.0
    %2839 = vmatpush1.xpose.msra.mxu0 0.0
    %2840 = vmatprep.subr.mxu0 0.0
    %2841 = vmatpush1.xpose.msra.mxu0 0.0
    %2842 = vmatprep.subr.mxu0 0.0
    %2843 = vmatpush1.xpose.msra.mxu0 0.0
    %2844 = vmatprep.subr.mxu0 0.0
    %2845 = vmatpush1.xpose.msra.mxu0 0.0
    %2846 = vmatprep.subr.mxu0 0.0
    %2847 = vmatpush1.xpose.msra.mxu0 0.0
    %2848 = vmatprep.subr.mxu0 0.0
    %2849 = vmatpush1.xpose.msra.mxu0 0.0
    %2850 = vmatprep.subr.mxu0 0.0
    %2851 = vmatpush1.xpose.msra.mxu0 0.0
    %2852 = vmatprep.subr.mxu0 0.0
    %2853 = vmatpush1.xpose.msra.mxu0 0.0
    %2854 = vmatprep.subr.mxu0 0.0
    %2855 = vmatpush1.xpose.msra.mxu0 0.0
    %2856 = vmatprep.subr.mxu0 0.0
    %2857 = vmatpush1.xpose.msra.mxu0 0.0
    %2858 = vmatprep.subr.mxu0 0.0
    %2859 = vmatpush1.xpose.msra.mxu0 0.0
    %2860 = vmatprep.subr.mxu0 0.0
    %2861 = vmatpush1.xpose.msra.mxu0 0.0
    %2862 = vmatprep.subr.mxu0 0.0
    %2863 = vmatpush1.xpose.msra.mxu0 0.0
    %2864 = vmatprep.subr.mxu0 0.0
    %2865 = vmatpush1.xpose.msra.mxu0 0.0
    %2866 = vmatprep.subr.mxu0 0.0
    %2867 = vmatpush1.xpose.msra.mxu0 0.0
    %2868 = vmatprep.subr.mxu0 0.0
    %2869 = vmatpush1.xpose.msra.mxu0 0.0
    %2870 = vmatprep.subr.mxu0 0.0
    %2871 = vmatpush1.xpose.msra.mxu0 0.0
    %2872 = vmatprep.subr.mxu0 0.0
    %2873 = vmatpush1.xpose.msra.mxu0 0.0
    %2874 = vmatprep.subr.mxu0 0.0
    %2875 = vmatpush1.xpose.msra.mxu0 0.0
    %2876 = vmatprep.subr.mxu0 0.0
    %2877 = vmatpush1.xpose.msra.mxu0 0.0
    %2878 = vmatprep.subr.mxu0 0.0
    %2879 = vmatpush1.xpose.msra.mxu0 0.0
    %2880 = vmatprep.subr.mxu0 0.0
    %2881 = vmatpush1.xpose.msra.mxu0 0.0
    %2882 = vmatprep.subr.mxu0 0.0
    %2883 = vmatpush1.xpose.msra.mxu0 0.0
    %2884 = vmatprep.subr.mxu0 0.0
    %2885 = vmatpush1.xpose.msra.mxu0 0.0
    %2886 = vmatprep.subr.mxu0 0.0
    %2887 = vmatpush1.xpose.msra.mxu0 0.0
    %2888 = vmatprep.subr.mxu0 0.0
    %2889 = vmatpush1.xpose.msra.mxu0 0.0
    %2890 = vmatprep.subr.mxu0 0.0
    %2891 = vmatpush1.xpose.msra.mxu0 0.0
    %2892 = vmatprep.subr.mxu0 0.0
    %2893 = vmatpush1.xpose.msra.mxu0 0.0
    %2894 = vmatprep.subr.mxu0 0.0
    %2895 = vmatpush1.xpose.msra.mxu0 0.0
    %2896 = vmatprep.subr.mxu0 0.0
    %2897 = vmatpush1.xpose.msra.mxu0 0.0
    %2898 = vmatprep.subr.mxu0 0.0
    %2899 = vmatpush1.xpose.msra.mxu0 0.0
    %2900 = vmatprep.mubr.f32.mxu0 0.0
    %2901 = vmatmul.mubr.f32.gmra.mrb[0].mxu0 %v2832
    %v2902 = vpop.f32.mrb[0].mxu0
    %v2903 = vadd.f32 0.0, %v2902
    %v2904 = vpop.f32.mrb[0].mxu0
    %2905 = vdwg.mxu0
    %2907 = vrot.lane.b32.xlu0 %v2821, 96
    %v2908 = vpop.permute.xlu0 %2907
    %v2909 = vsel %vm2831, %v2821, 0
    %v2911 = vsel %vm2831, %v2908, 0
    %2913 = vmatprep.subr.mxu0 0.0
    %2914 = vmatpush1.xpose.msra.mxu0 %v2911
    %2915 = vmatprep.subr.mxu0 0.0
    %2916 = vmatpush1.xpose.msra.mxu0 0.0
    %2917 = vmatprep.subr.mxu0 0.0
    %2918 = vmatpush1.xpose.msra.mxu0 0.0
    %2919 = vmatprep.subr.mxu0 0.0
    %2920 = vmatpush1.xpose.msra.mxu0 0.0
    %2921 = vmatprep.subr.mxu0 0.0
    %2922 = vmatpush1.xpose.msra.mxu0 0.0
    %2923 = vmatprep.subr.mxu0 0.0
    %2924 = vmatpush1.xpose.msra.mxu0 0.0
    %2925 = vmatprep.subr.mxu0 0.0
    %2926 = vmatpush1.xpose.msra.mxu0 0.0
    %2927 = vmatprep.subr.mxu0 0.0
    %2928 = vmatpush1.xpose.msra.mxu0 0.0
    %2929 = vmatprep.subr.mxu0 0.0
    %2930 = vmatpush1.xpose.msra.mxu0 0.0
    %2931 = vmatprep.subr.mxu0 0.0
    %2932 = vmatpush1.xpose.msra.mxu0 0.0
    %2933 = vmatprep.subr.mxu0 0.0
    %2934 = vmatpush1.xpose.msra.mxu0 0.0
    %2935 = vmatprep.subr.mxu0 0.0
    %2936 = vmatpush1.xpose.msra.mxu0 0.0
    %2937 = vmatprep.subr.mxu0 0.0
    %2938 = vmatpush1.xpose.msra.mxu0 0.0
    %2939 = vmatprep.subr.mxu0 0.0
    %2940 = vmatpush1.xpose.msra.mxu0 0.0
    %2941 = vmatprep.subr.mxu0 0.0
    %2942 = vmatpush1.xpose.msra.mxu0 0.0
    %2943 = vmatprep.subr.mxu0 0.0
    %2944 = vmatpush1.xpose.msra.mxu0 0.0
    %2945 = vmatprep.subr.mxu0 0.0
    %2946 = vmatpush1.xpose.msra.mxu0 0.0
    %2947 = vmatprep.subr.mxu0 0.0
    %2948 = vmatpush1.xpose.msra.mxu0 0.0
    %2949 = vmatprep.subr.mxu0 0.0
    %2950 = vmatpush1.xpose.msra.mxu0 0.0
    %2951 = vmatprep.subr.mxu0 0.0
    %2952 = vmatpush1.xpose.msra.mxu0 0.0
    %2953 = vmatprep.subr.mxu0 0.0
    %2954 = vmatpush1.xpose.msra.mxu0 0.0
    %2955 = vmatprep.subr.mxu0 0.0
    %2956 = vmatpush1.xpose.msra.mxu0 0.0
    %2957 = vmatprep.subr.mxu0 0.0
    %2958 = vmatpush1.xpose.msra.mxu0 0.0
    %2959 = vmatprep.subr.mxu0 0.0
    %2960 = vmatpush1.xpose.msra.mxu0 0.0
    %2961 = vmatprep.subr.mxu0 0.0
    %2962 = vmatpush1.xpose.msra.mxu0 0.0
    %2963 = vmatprep.subr.mxu0 0.0
    %2964 = vmatpush1.xpose.msra.mxu0 0.0
    %2965 = vmatprep.subr.mxu0 0.0
    %2966 = vmatpush1.xpose.msra.mxu0 0.0
    %2967 = vmatprep.subr.mxu0 0.0
    %2968 = vmatpush1.xpose.msra.mxu0 0.0
    %2969 = vmatprep.subr.mxu0 0.0
    %2970 = vmatpush1.xpose.msra.mxu0 0.0
    %2971 = vmatprep.subr.mxu0 0.0
    %2972 = vmatpush1.xpose.msra.mxu0 0.0
    %2973 = vmatprep.subr.mxu0 0.0
    %2974 = vmatpush1.xpose.msra.mxu0 0.0
    %2975 = vmatprep.subr.mxu0 0.0
    %2976 = vmatpush1.xpose.msra.mxu0 0.0
    %2977 = vmatprep.mubr.f32.mxu0 0.0
    %2978 = vmatmul.mubr.f32.gmra.mrb[0].mxu0 %v2909
    %v2979 = vpop.f32.mrb[0].mxu0
    %v2980 = vadd.f32 0.0, %v2979
    %v2981 = vpop.f32.mrb[0].mxu0
    %2982 = vdwg.mxu0
    %v2983 = vmul.f32 %v2903, 0.35355338
    %v2984 = vmul.f32 %v2980, 0.35355338
    %v2985 = vsel %vm2831, %v2983, -inf
    %2986 = vmax.xlane.f32.xlu0 %v2985
    %v2987 = vpop.xlane.xlu0 %2986
    %v2988 = vsel %vm2831, %v2984, -inf
    %2989 = vmax.xlane.f32.xlu0 %v2988
    %v2990 = vpop.xlane.xlu0 %2989
    %v2991 = vsub.f32 %v2983, %v2987
    %v2992 = vsub.f32 %v2984, %v2990
    %v2993 = vmul.f32 %v2991, 1.442695
    %v2994 = vpow.pop %v2993
    %v2995 = vmul.f32 %v2992, 1.442695
    %v2996 = vpow.pop %v2995
    %v2997 = vsel %vm2831, %v2994, 0.0
    %2998 = vadd.xlane.f32.xlu0 %v2997
    %v2999 = vpop.xlane.xlu0 %2998
    %v3000 = vsel %vm2831, %v2996, 0.0
    %3001 = vadd.xlane.f32.xlu0 %v3000
    %v3002 = vpop.xlane.xlu0 %3001
    %v3003 = vrcp.pop %v2999
    %v3004 = vrcp.pop %v3002
    %v3005 = vmul.f32 %v2994, %v3003
    %v3006 = vmul.f32 %v2996, %v3004
    %3007 = vrot.lane.b32.xlu0 %v2816, 64
    %v3008 = vpop.permute.xlu0 %3007
    %v3011 = vsel %vm2831, %v3005, 0
    %3013 = vmatprep.subr.mxu0 0.0
    %3014 = vmatpush1.msra.mxu0 %v3008
    %3015 = vmatprep.subr.mxu0 0.0
    %3016 = vmatpush1.msra.mxu0 0.0
    %3017 = vmatprep.subr.mxu0 0.0
    %3018 = vmatpush1.msra.mxu0 0.0
    %3019 = vmatprep.subr.mxu0 0.0
    %3020 = vmatpush1.msra.mxu0 0.0
    %3021 = vmatprep.subr.mxu0 0.0
    %3022 = vmatpush1.msra.mxu0 0.0
    %3023 = vmatprep.subr.mxu0 0.0
    %3024 = vmatpush1.msra.mxu0 0.0
    %3025 = vmatprep.subr.mxu0 0.0
    %3026 = vmatpush1.msra.mxu0 0.0
    %3027 = vmatprep.subr.mxu0 0.0
    %3028 = vmatpush1.msra.mxu0 0.0
    %3029 = vmatprep.subr.mxu0 0.0
    %3030 = vmatpush1.msra.mxu0 0.0
    %3031 = vmatprep.subr.mxu0 0.0
    %3032 = vmatpush1.msra.mxu0 0.0
    %3033 = vmatprep.subr.mxu0 0.0
    %3034 = vmatpush1.msra.mxu0 0.0
    %3035 = vmatprep.subr.mxu0 0.0
    %3036 = vmatpush1.msra.mxu0 0.0
    %3037 = vmatprep.subr.mxu0 0.0
    %3038 = vmatpush1.msra.mxu0 0.0
    %3039 = vmatprep.subr.mxu0 0.0
    %3040 = vmatpush1.msra.mxu0 0.0
    %3041 = vmatprep.subr.mxu0 0.0
    %3042 = vmatpush1.msra.mxu0 0.0
    %3043 = vmatprep.subr.mxu0 0.0
    %3044 = vmatpush1.msra.mxu0 0.0
    %3045 = vmatprep.subr.mxu0 0.0
    %3046 = vmatpush1.msra.mxu0 0.0
    %3047 = vmatprep.subr.mxu0 0.0
    %3048 = vmatpush1.msra.mxu0 0.0
    %3049 = vmatprep.subr.mxu0 0.0
    %3050 = vmatpush1.msra.mxu0 0.0
    %3051 = vmatprep.subr.mxu0 0.0
    %3052 = vmatpush1.msra.mxu0 0.0
    %3053 = vmatprep.subr.mxu0 0.0
    %3054 = vmatpush1.msra.mxu0 0.0
    %3055 = vmatprep.subr.mxu0 0.0
    %3056 = vmatpush1.msra.mxu0 0.0
    %3057 = vmatprep.subr.mxu0 0.0
    %3058 = vmatpush1.msra.mxu0 0.0
    %3059 = vmatprep.subr.mxu0 0.0
    %3060 = vmatpush1.msra.mxu0 0.0
    %3061 = vmatprep.subr.mxu0 0.0
    %3062 = vmatpush1.msra.mxu0 0.0
    %3063 = vmatprep.subr.mxu0 0.0
    %3064 = vmatpush1.msra.mxu0 0.0
    %3065 = vmatprep.subr.mxu0 0.0
    %3066 = vmatpush1.msra.mxu0 0.0
    %3067 = vmatprep.subr.mxu0 0.0
    %3068 = vmatpush1.msra.mxu0 0.0
    %3069 = vmatprep.subr.mxu0 0.0
    %3070 = vmatpush1.msra.mxu0 0.0
    %3071 = vmatprep.subr.mxu0 0.0
    %3072 = vmatpush1.msra.mxu0 0.0
    %3073 = vmatprep.subr.mxu0 0.0
    %3074 = vmatpush1.msra.mxu0 0.0
    %3075 = vmatprep.subr.mxu0 0.0
    %3076 = vmatpush1.msra.mxu0 0.0
    %3077 = vmatprep.mubr.f32.mxu0 0.0
    %3078 = vmatmul.mubr.f32.gmra.mrb[0].mxu0 %v3011
    %v3079 = vpop.f32.mrb[0].mxu0
    %v3080 = vadd.f32 0.0, %v3079
    %v3081 = vpop.f32.mrb[0].mxu0
    %3082 = vdwg.mxu0
    %3083 = vrot.lane.b32.xlu0 %v2821, 64
    %v3084 = vpop.permute.xlu0 %3083
    %v3087 = vsel %vm2831, %v3006, 0
    %3089 = vmatprep.subr.mxu0 0.0
    %3090 = vmatpush1.msra.mxu0 %v3084
    %3091 = vmatprep.subr.mxu0 0.0
    %3092 = vmatpush1.msra.mxu0 0.0
    %3093 = vmatprep.subr.mxu0 0.0
    %3094 = vmatpush1.msra.mxu0 0.0
    %3095 = vmatprep.subr.mxu0 0.0
    %3096 = vmatpush1.msra.mxu0 0.0
    %3097 = vmatprep.subr.mxu0 0.0
    %3098 = vmatpush1.msra.mxu0 0.0
    %3099 = vmatprep.subr.mxu0 0.0
    %3100 = vmatpush1.msra.mxu0 0.0
    %3101 = vmatprep.subr.mxu0 0.0
    %3102 = vmatpush1.msra.mxu0 0.0
    %3103 = vmatprep.subr.mxu0 0.0
    %3104 = vmatpush1.msra.mxu0 0.0
    %3105 = vmatprep.subr.mxu0 0.0
    %3106 = vmatpush1.msra.mxu0 0.0
    %3107 = vmatprep.subr.mxu0 0.0
    %3108 = vmatpush1.msra.mxu0 0.0
    %3109 = vmatprep.subr.mxu0 0.0
    %3110 = vmatpush1.msra.mxu0 0.0
    %3111 = vmatprep.subr.mxu0 0.0
    %3112 = vmatpush1.msra.mxu0 0.0
    %3113 = vmatprep.subr.mxu0 0.0
    %3114 = vmatpush1.msra.mxu0 0.0
    %3115 = vmatprep.subr.mxu0 0.0
    %3116 = vmatpush1.msra.mxu0 0.0
    %3117 = vmatprep.subr.mxu0 0.0
    %3118 = vmatpush1.msra.mxu0 0.0
    %3119 = vmatprep.subr.mxu0 0.0
    %3120 = vmatpush1.msra.mxu0 0.0
    %3121 = vmatprep.subr.mxu0 0.0
    %3122 = vmatpush1.msra.mxu0 0.0
    %3123 = vmatprep.subr.mxu0 0.0
    %3124 = vmatpush1.msra.mxu0 0.0
    %3125 = vmatprep.subr.mxu0 0.0
    %3126 = vmatpush1.msra.mxu0 0.0
    %3127 = vmatprep.subr.mxu0 0.0
    %3128 = vmatpush1.msra.mxu0 0.0
    %3129 = vmatprep.subr.mxu0 0.0
    %3130 = vmatpush1.msra.mxu0 0.0
    %3131 = vmatprep.subr.mxu0 0.0
    %3132 = vmatpush1.msra.mxu0 0.0
    %3133 = vmatprep.subr.mxu0 0.0
    %3134 = vmatpush1.msra.mxu0 0.0
    %3135 = vmatprep.subr.mxu0 0.0
    %3136 = vmatpush1.msra.mxu0 0.0
    %3137 = vmatprep.subr.mxu0 0.0
    %3138 = vmatpush1.msra.mxu0 0.0
    %3139 = vmatprep.subr.mxu0 0.0
    %3140 = vmatpush1.msra.mxu0 0.0
    %3141 = vmatprep.subr.mxu0 0.0
    %3142 = vmatpush1.msra.mxu0 0.0
    %3143 = vmatprep.subr.mxu0 0.0
    %3144 = vmatpush1.msra.mxu0 0.0
    %3145 = vmatprep.subr.mxu0 0.0
    %3146 = vmatpush1.msra.mxu0 0.0
    %3147 = vmatprep.subr.mxu0 0.0
    %3148 = vmatpush1.msra.mxu0 0.0
    %3149 = vmatprep.subr.mxu0 0.0
    %3150 = vmatpush1.msra.mxu0 0.0
    %3151 = vmatprep.subr.mxu0 0.0
    %3152 = vmatpush1.msra.mxu0 0.0
    %3153 = vmatprep.mubr.f32.mxu0 0.0
    %3154 = vmatmul.mubr.f32.gmra.mrb[0].mxu0 %v3087
    %v3155 = vpop.f32.mrb[0].mxu0
    %v3156 = vadd.f32 0.0, %v3155
    %v3157 = vpop.f32.mrb[0].mxu0
    %3158 = vdwg.mxu0
    %3159 = vrot.lane.b32.xlu0 %v2816, 120
    %v3160 = vpop.permute.xlu0 %3159
    %3161 = vrot.lane.b32.xlu0 %v2816, 88
    %v3162 = vpop.permute.xlu0 %3161
    %v3163 = vsel %vm2831, %v3160, 0
    %v3165 = vsel %vm2831, %v3162, 0
    %3167 = vmatprep.subr.mxu0 0.0
    %3168 = vmatpush1.xpose.msra.mxu0 %v3165
    %3169 = vmatprep.subr.mxu0 0.0
    %3170 = vmatpush1.xpose.msra.mxu0 0.0
    %3171 = vmatprep.subr.mxu0 0.0
    %3172 = vmatpush1.xpose.msra.mxu0 0.0
    %3173 = vmatprep.subr.mxu0 0.0
    %3174 = vmatpush1.xpose.msra.mxu0 0.0
    %3175 = vmatprep.subr.mxu0 0.0
    %3176 = vmatpush1.xpose.msra.mxu0 0.0
    %3177 = vmatprep.subr.mxu0 0.0
    %3178 = vmatpush1.xpose.msra.mxu0 0.0
    %3179 = vmatprep.subr.mxu0 0.0
    %3180 = vmatpush1.xpose.msra.mxu0 0.0
    %3181 = vmatprep.subr.mxu0 0.0
    %3182 = vmatpush1.xpose.msra.mxu0 0.0
    %3183 = vmatprep.subr.mxu0 0.0
    %3184 = vmatpush1.xpose.msra.mxu0 0.0
    %3185 = vmatprep.subr.mxu0 0.0
    %3186 = vmatpush1.xpose.msra.mxu0 0.0
    %3187 = vmatprep.subr.mxu0 0.0
    %3188 = vmatpush1.xpose.msra.mxu0 0.0
    %3189 = vmatprep.subr.mxu0 0.0
    %3190 = vmatpush1.xpose.msra.mxu0 0.0
    %3191 = vmatprep.subr.mxu0 0.0
    %3192 = vmatpush1.xpose.msra.mxu0 0.0
    %3193 = vmatprep.subr.mxu0 0.0
    %3194 = vmatpush1.xpose.msra.mxu0 0.0
    %3195 = vmatprep.subr.mxu0 0.0
    %3196 = vmatpush1.xpose.msra.mxu0 0.0
    %3197 = vmatprep.subr.mxu0 0.0
    %3198 = vmatpush1.xpose.msra.mxu0 0.0
    %3199 = vmatprep.subr.mxu0 0.0
    %3200 = vmatpush1.xpose.msra.mxu0 0.0
    %3201 = vmatprep.subr.mxu0 0.0
    %3202 = vmatpush1.xpose.msra.mxu0 0.0
    %3203 = vmatprep.subr.mxu0 0.0
    %3204 = vmatpush1.xpose.msra.mxu0 0.0
    %3205 = vmatprep.subr.mxu0 0.0
    %3206 = vmatpush1.xpose.msra.mxu0 0.0
    %3207 = vmatprep.subr.mxu0 0.0
    %3208 = vmatpush1.xpose.msra.mxu0 0.0
    %3209 = vmatprep.subr.mxu0 0.0
    %3210 = vmatpush1.xpose.msra.mxu0 0.0
    %3211 = vmatprep.subr.mxu0 0.0
    %3212 = vmatpush1.xpose.msra.mxu0 0.0
    %3213 = vmatprep.subr.mxu0 0.0
    %3214 = vmatpush1.xpose.msra.mxu0 0.0
    %3215 = vmatprep.subr.mxu0 0.0
    %3216 = vmatpush1.xpose.msra.mxu0 0.0
    %3217 = vmatprep.subr.mxu0 0.0
    %3218 = vmatpush1.xpose.msra.mxu0 0.0
    %3219 = vmatprep.subr.mxu0 0.0
    %3220 = vmatpush1.xpose.msra.mxu0 0.0
    %3221 = vmatprep.subr.mxu0 0.0
    %3222 = vmatpush1.xpose.msra.mxu0 0.0
    %3223 = vmatprep.subr.mxu0 0.0
    %3224 = vmatpush1.xpose.msra.mxu0 0.0
    %3225 = vmatprep.subr.mxu0 0.0
    %3226 = vmatpush1.xpose.msra.mxu0 0.0
    %3227 = vmatprep.subr.mxu0 0.0
    %3228 = vmatpush1.xpose.msra.mxu0 0.0
    %3229 = vmatprep.subr.mxu0 0.0
    %3230 = vmatpush1.xpose.msra.mxu0 0.0
    %3231 = vmatprep.mubr.f32.mxu0 0.0
    %3232 = vmatmul.mubr.f32.gmra.mrb[0].mxu0 %v3163
    %v3233 = vpop.f32.mrb[0].mxu0
    %v3234 = vadd.f32 0.0, %v3233
    %v3235 = vpop.f32.mrb[0].mxu0
    %3236 = vdwg.mxu0
    %3237 = vrot.lane.b32.xlu0 %v2821, 120
    %v3238 = vpop.permute.xlu0 %3237
    %3239 = vrot.lane.b32.xlu0 %v2821, 88
    %v3240 = vpop.permute.xlu0 %3239
    %v3241 = vsel %vm2831, %v3238, 0
    %v3243 = vsel %vm2831, %v3240, 0
    %3245 = vmatprep.subr.mxu0 0.0
    %3246 = vmatpush1.xpose.msra.mxu0 %v3243
    %3247 = vmatprep.subr.mxu0 0.0
    %3248 = vmatpush1.xpose.msra.mxu0 0.0
    %3249 = vmatprep.subr.mxu0 0.0
    %3250 = vmatpush1.xpose.msra.mxu0 0.0
    %3251 = vmatprep.subr.mxu0 0.0
    %3252 = vmatpush1.xpose.msra.mxu0 0.0
    %3253 = vmatprep.subr.mxu0 0.0
    %3254 = vmatpush1.xpose.msra.mxu0 0.0
    %3255 = vmatprep.subr.mxu0 0.0
    %3256 = vmatpush1.xpose.msra.mxu0 0.0
    %3257 = vmatprep.subr.mxu0 0.0
    %3258 = vmatpush1.xpose.msra.mxu0 0.0
    %3259 = vmatprep.subr.mxu0 0.0
    %3260 = vmatpush1.xpose.msra.mxu0 0.0
    %3261 = vmatprep.subr.mxu0 0.0
    %3262 = vmatpush1.xpose.msra.mxu0 0.0
    %3263 = vmatprep.subr.mxu0 0.0
    %3264 = vmatpush1.xpose.msra.mxu0 0.0
    %3265 = vmatprep.subr.mxu0 0.0
    %3266 = vmatpush1.xpose.msra.mxu0 0.0
    %3267 = vmatprep.subr.mxu0 0.0
    %3268 = vmatpush1.xpose.msra.mxu0 0.0
    %3269 = vmatprep.subr.mxu0 0.0
    %3270 = vmatpush1.xpose.msra.mxu0 0.0
    %3271 = vmatprep.subr.mxu0 0.0
    %3272 = vmatpush1.xpose.msra.mxu0 0.0
    %3273 = vmatprep.subr.mxu0 0.0
    %3274 = vmatpush1.xpose.msra.mxu0 0.0
    %3275 = vmatprep.subr.mxu0 0.0
    %3276 = vmatpush1.xpose.msra.mxu0 0.0
    %3277 = vmatprep.subr.mxu0 0.0
    %3278 = vmatpush1.xpose.msra.mxu0 0.0
    %3279 = vmatprep.subr.mxu0 0.0
    %3280 = vmatpush1.xpose.msra.mxu0 0.0
    %3281 = vmatprep.subr.mxu0 0.0
    %3282 = vmatpush1.xpose.msra.mxu0 0.0
    %3283 = vmatprep.subr.mxu0 0.0
    %3284 = vmatpush1.xpose.msra.mxu0 0.0
    %3285 = vmatprep.subr.mxu0 0.0
    %3286 = vmatpush1.xpose.msra.mxu0 0.0
    %3287 = vmatprep.subr.mxu0 0.0
    %3288 = vmatpush1.xpose.msra.mxu0 0.0
    %3289 = vmatprep.subr.mxu0 0.0
    %3290 = vmatpush1.xpose.msra.mxu0 0.0
    %3291 = vmatprep.subr.mxu0 0.0
    %3292 = vmatpush1.xpose.msra.mxu0 0.0
    %3293 = vmatprep.subr.mxu0 0.0
    %3294 = vmatpush1.xpose.msra.mxu0 0.0
    %3295 = vmatprep.subr.mxu0 0.0
    %3296 = vmatpush1.xpose.msra.mxu0 0.0
    %3297 = vmatprep.subr.mxu0 0.0
    %3298 = vmatpush1.xpose.msra.mxu0 0.0
    %3299 = vmatprep.subr.mxu0 0.0
    %3300 = vmatpush1.xpose.msra.mxu0 0.0
    %3301 = vmatprep.subr.mxu0 0.0
    %3302 = vmatpush1.xpose.msra.mxu0 0.0
    %3303 = vmatprep.subr.mxu0 0.0
    %3304 = vmatpush1.xpose.msra.mxu0 0.0
    %3305 = vmatprep.subr.mxu0 0.0
    %3306 = vmatpush1.xpose.msra.mxu0 0.0
    %3307 = vmatprep.subr.mxu0 0.0
    %3308 = vmatpush1.xpose.msra.mxu0 0.0
    %3309 = vmatprep.mubr.f32.mxu0 0.0
    %3310 = vmatmul.mubr.f32.gmra.mrb[0].mxu0 %v3241
    %v3311 = vpop.f32.mrb[0].mxu0
    %v3312 = vadd.f32 0.0, %v3311
    %v3313 = vpop.f32.mrb[0].mxu0
    %3314 = vdwg.mxu0
    %v3315 = vmul.f32 %v3234, 0.35355338
    %v3316 = vmul.f32 %v3312, 0.35355338
    %v3317 = vsel %vm2831, %v3315, -inf
    %3318 = vmax.xlane.f32.xlu0 %v3317
    %v3319 = vpop.xlane.xlu0 %3318
    %v3320 = vsel %vm2831, %v3316, -inf
    %3321 = vmax.xlane.f32.xlu0 %v3320
    %v3322 = vpop.xlane.xlu0 %3321
    %v3323 = vsub.f32 %v3315, %v3319
    %v3324 = vsub.f32 %v3316, %v3322
    %v3325 = vmul.f32 %v3323, 1.442695
    %v3326 = vpow.pop %v3325
    %v3327 = vmul.f32 %v3324, 1.442695
    %v3328 = vpow.pop %v3327
    %v3329 = vsel %vm2831, %v3326, 0.0
    %3330 = vadd.xlane.f32.xlu0 %v3329
    %v3331 = vpop.xlane.xlu0 %3330
    %v3332 = vsel %vm2831, %v3328, 0.0
    %3333 = vadd.xlane.f32.xlu0 %v3332
    %v3334 = vpop.xlane.xlu0 %3333
    %v3335 = vrcp.pop %v3331
    %v3336 = vrcp.pop %v3334
    %v3337 = vmul.f32 %v3326, %v3335
    %v3338 = vmul.f32 %v3328, %v3336
    %3339 = vrot.lane.b32.xlu0 %v2816, 56
    %v3340 = vpop.permute.xlu0 %3339
    %v3343 = vsel %vm2831, %v3337, 0
    %3345 = vmatprep.subr.mxu0 0.0
    %3346 = vmatpush1.msra.mxu0 %v3340
    %3347 = vmatprep.subr.mxu0 0.0
    %3348 = vmatpush1.msra.mxu0 0.0
    %3349 = vmatprep.subr.mxu0 0.0
    %3350 = vmatpush1.msra.mxu0 0.0
    %3351 = vmatprep.subr.mxu0 0.0
    %3352 = vmatpush1.msra.mxu0 0.0
    %3353 = vmatprep.subr.mxu0 0.0
    %3354 = vmatpush1.msra.mxu0 0.0
    %3355 = vmatprep.subr.mxu0 0.0
    %3356 = vmatpush1.msra.mxu0 0.0
    %3357 = vmatprep.subr.mxu0 0.0
    %3358 = vmatpush1.msra.mxu0 0.0
    %3359 = vmatprep.subr.mxu0 0.0
    %3360 = vmatpush1.msra.mxu0 0.0
    %3361 = vmatprep.subr.mxu0 0.0
    %3362 = vmatpush1.msra.mxu0 0.0
    %3363 = vmatprep.subr.mxu0 0.0
    %3364 = vmatpush1.msra.mxu0 0.0
    %3365 = vmatprep.subr.mxu0 0.0
    %3366 = vmatpush1.msra.mxu0 0.0
    %3367 = vmatprep.subr.mxu0 0.0
    %3368 = vmatpush1.msra.mxu0 0.0
    %3369 = vmatprep.subr.mxu0 0.0
    %3370 = vmatpush1.msra.mxu0 0.0
    %3371 = vmatprep.subr.mxu0 0.0
    %3372 = vmatpush1.msra.mxu0 0.0
    %3373 = vmatprep.subr.mxu0 0.0
    %3374 = vmatpush1.msra.mxu0 0.0
    %3375 = vmatprep.subr.mxu0 0.0
    %3376 = vmatpush1.msra.mxu0 0.0
    %3377 = vmatprep.subr.mxu0 0.0
    %3378 = vmatpush1.msra.mxu0 0.0
    %3379 = vmatprep.subr.mxu0 0.0
    %3380 = vmatpush1.msra.mxu0 0.0
    %3381 = vmatprep.subr.mxu0 0.0
    %3382 = vmatpush1.msra.mxu0 0.0
    %3383 = vmatprep.subr.mxu0 0.0
    %3384 = vmatpush1.msra.mxu0 0.0
    %3385 = vmatprep.subr.mxu0 0.0
    %3386 = vmatpush1.msra.mxu0 0.0
    %3387 = vmatprep.subr.mxu0 0.0
    %3388 = vmatpush1.msra.mxu0 0.0
    %3389 = vmatprep.subr.mxu0 0.0
    %3390 = vmatpush1.msra.mxu0 0.0
    %3391 = vmatprep.subr.mxu0 0.0
    %3392 = vmatpush1.msra.mxu0 0.0
    %3393 = vmatprep.subr.mxu0 0.0
    %3394 = vmatpush1.msra.mxu0 0.0
    %3395 = vmatprep.subr.mxu0 0.0
    %3396 = vmatpush1.msra.mxu0 0.0
    %3397 = vmatprep.subr.mxu0 0.0
    %3398 = vmatpush1.msra.mxu0 0.0
    %3399 = vmatprep.subr.mxu0 0.0
    %3400 = vmatpush1.msra.mxu0 0.0
    %3401 = vmatprep.subr.mxu0 0.0
    %3402 = vmatpush1.msra.mxu0 0.0
    %3403 = vmatprep.subr.mxu0 0.0
    %3404 = vmatpush1.msra.mxu0 0.0
    %3405 = vmatprep.subr.mxu0 0.0
    %3406 = vmatpush1.msra.mxu0 0.0
    %3407 = vmatprep.subr.mxu0 0.0
    %3408 = vmatpush1.msra.mxu0 0.0
    %3409 = vmatprep.mubr.f32.mxu0 0.0
    %3410 = vmatmul.mubr.f32.gmra.mrb[0].mxu0 %v3343
    %v3411 = vpop.f32.mrb[0].mxu0
    %v3412 = vadd.f32 0.0, %v3411
    %v3413 = vpop.f32.mrb[0].mxu0
    %3414 = vdwg.mxu0
    %3415 = vrot.lane.b32.xlu0 %v2821, 56
    %v3416 = vpop.permute.xlu0 %3415
    %v3419 = vsel %vm2831, %v3338, 0
    %3421 = vmatprep.subr.mxu0 0.0
    %3422 = vmatpush1.msra.mxu0 %v3416
    %3423 = vmatprep.subr.mxu0 0.0
    %3424 = vmatpush1.msra.mxu0 0.0
    %3425 = vmatprep.subr.mxu0 0.0
    %3426 = vmatpush1.msra.mxu0 0.0
    %3427 = vmatprep.subr.mxu0 0.0
    %3428 = vmatpush1.msra.mxu0 0.0
    %3429 = vmatprep.subr.mxu0 0.0
    %3430 = vmatpush1.msra.mxu0 0.0
    %3431 = vmatprep.subr.mxu0 0.0
    %3432 = vmatpush1.msra.mxu0 0.0
    %3433 = vmatprep.subr.mxu0 0.0
    %3434 = vmatpush1.msra.mxu0 0.0
    %3435 = vmatprep.subr.mxu0 0.0
    %3436 = vmatpush1.msra.mxu0 0.0
    %3437 = vmatprep.subr.mxu0 0.0
    %3438 = vmatpush1.msra.mxu0 0.0
    %3439 = vmatprep.subr.mxu0 0.0
    %3440 = vmatpush1.msra.mxu0 0.0
    %3441 = vmatprep.subr.mxu0 0.0
    %3442 = vmatpush1.msra.mxu0 0.0
    %3443 = vmatprep.subr.mxu0 0.0
    %3444 = vmatpush1.msra.mxu0 0.0
    %3445 = vmatprep.subr.mxu0 0.0
    %3446 = vmatpush1.msra.mxu0 0.0
    %3447 = vmatprep.subr.mxu0 0.0
    %3448 = vmatpush1.msra.mxu0 0.0
    %3449 = vmatprep.subr.mxu0 0.0
    %3450 = vmatpush1.msra.mxu0 0.0
    %3451 = vmatprep.subr.mxu0 0.0
    %3452 = vmatpush1.msra.mxu0 0.0
    %3453 = vmatprep.subr.mxu0 0.0
    %3454 = vmatpush1.msra.mxu0 0.0
    %3455 = vmatprep.subr.mxu0 0.0
    %3456 = vmatpush1.msra.mxu0 0.0
    %3457 = vmatprep.subr.mxu0 0.0
    %3458 = vmatpush1.msra.mxu0 0.0
    %3459 = vmatprep.subr.mxu0 0.0
    %3460 = vmatpush1.msra.mxu0 0.0
    %3461 = vmatprep.subr.mxu0 0.0
    %3462 = vmatpush1.msra.mxu0 0.0
    %3463 = vmatprep.subr.mxu0 0.0
    %3464 = vmatpush1.msra.mxu0 0.0
    %3465 = vmatprep.subr.mxu0 0.0
    %3466 = vmatpush1.msra.mxu0 0.0
    %3467 = vmatprep.subr.mxu0 0.0
    %3468 = vmatpush1.msra.mxu0 0.0
    %3469 = vmatprep.subr.mxu0 0.0
    %3470 = vmatpush1.msra.mxu0 0.0
    %3471 = vmatprep.subr.mxu0 0.0
    %3472 = vmatpush1.msra.mxu0 0.0
    %3473 = vmatprep.subr.mxu0 0.0
    %3474 = vmatpush1.msra.mxu0 0.0
    %3475 = vmatprep.subr.mxu0 0.0
    %3476 = vmatpush1.msra.mxu0 0.0
    %3477 = vmatprep.subr.mxu0 0.0
    %3478 = vmatpush1.msra.mxu0 0.0
    %3479 = vmatprep.subr.mxu0 0.0
    %3480 = vmatpush1.msra.mxu0 0.0
    %3481 = vmatprep.subr.mxu0 0.0
    %3482 = vmatpush1.msra.mxu0 0.0
    %3483 = vmatprep.subr.mxu0 0.0
    %3484 = vmatpush1.msra.mxu0 0.0
    %3485 = vmatprep.mubr.f32.mxu0 0.0
    %3486 = vmatmul.mubr.f32.gmra.mrb[0].mxu0 %v3419
    %v3487 = vpop.f32.mrb[0].mxu0
    %v3488 = vadd.f32 0.0, %v3487
    %v3489 = vpop.f32.mrb[0].mxu0
    %3490 = vdwg.mxu0
    %v3492 = vsel %vm2831, %v3412, 0
    %v3495 = vsel %vm2831, %v3488, 0
    %3497 = vmatprep.subr.mxu0 0.0
    %3498 = vmatpush1.msra.mxu0 %v2825
    %3499 = vmatprep.subr.mxu0 0.0
    %3500 = vmatpush1.msra.mxu0 0.0
    %3501 = vmatprep.subr.mxu0 0.0
    %3502 = vmatpush1.msra.mxu0 0.0
    %3503 = vmatprep.subr.mxu0 0.0
    %3504 = vmatpush1.msra.mxu0 0.0
    %3505 = vmatprep.subr.mxu0 0.0
    %3506 = vmatpush1.msra.mxu0 0.0
    %3507 = vmatprep.subr.mxu0 0.0
    %3508 = vmatpush1.msra.mxu0 0.0
    %3509 = vmatprep.subr.mxu0 0.0
    %3510 = vmatpush1.msra.mxu0 0.0
    %3511 = vmatprep.subr.mxu0 0.0
    %3512 = vmatpush1.msra.mxu0 0.0
    %3513 = vmatprep.subr.mxu0 0.0
    %3514 = vmatpush1.msra.mxu0 0.0
    %3515 = vmatprep.subr.mxu0 0.0
    %3516 = vmatpush1.msra.mxu0 0.0
    %3517 = vmatprep.subr.mxu0 0.0
    %3518 = vmatpush1.msra.mxu0 0.0
    %3519 = vmatprep.subr.mxu0 0.0
    %3520 = vmatpush1.msra.mxu0 0.0
    %3521 = vmatprep.subr.mxu0 0.0
    %3522 = vmatpush1.msra.mxu0 0.0
    %3523 = vmatprep.subr.mxu0 0.0
    %3524 = vmatpush1.msra.mxu0 0.0
    %3525 = vmatprep.subr.mxu0 0.0
    %3526 = vmatpush1.msra.mxu0 0.0
    %3527 = vmatprep.subr.mxu0 0.0
    %3528 = vmatpush1.msra.mxu0 0.0
    %3529 = vmatprep.subr.mxu0 0.0
    %3530 = vmatpush1.msra.mxu0 0.0
    %3531 = vmatprep.subr.mxu0 0.0
    %3532 = vmatpush1.msra.mxu0 0.0
    %3533 = vmatprep.subr.mxu0 0.0
    %3534 = vmatpush1.msra.mxu0 0.0
    %3535 = vmatprep.subr.mxu0 0.0
    %3536 = vmatpush1.msra.mxu0 0.0
    %3537 = vmatprep.subr.mxu0 0.0
    %3538 = vmatpush1.msra.mxu0 0.0
    %3539 = vmatprep.subr.mxu0 0.0
    %3540 = vmatpush1.msra.mxu0 0.0
    %3541 = vmatprep.subr.mxu0 0.0
    %3542 = vmatpush1.msra.mxu0 0.0
    %3543 = vmatprep.subr.mxu0 0.0
    %3544 = vmatpush1.msra.mxu0 0.0
    %3545 = vmatprep.subr.mxu0 0.0
    %3546 = vmatpush1.msra.mxu0 0.0
    %3547 = vmatprep.subr.mxu0 0.0
    %3548 = vmatpush1.msra.mxu0 0.0
    %3549 = vmatprep.subr.mxu0 0.0
    %3550 = vmatpush1.msra.mxu0 0.0
    %3551 = vmatprep.subr.mxu0 0.0
    %3552 = vmatpush1.msra.mxu0 0.0
    %3553 = vmatprep.subr.mxu0 0.0
    %3554 = vmatpush1.msra.mxu0 0.0
    %3555 = vmatprep.subr.mxu0 0.0
    %3556 = vmatpush1.msra.mxu0 0.0
    %3557 = vmatprep.subr.mxu0 0.0
    %3558 = vmatpush1.msra.mxu0 0.0
    %3559 = vmatprep.subr.mxu0 0.0
    %3560 = vmatpush1.msra.mxu0 0.0
    %3561 = vmatprep.mubr.f32.mxu0 0.0
    %3562 = vmatmul.mubr.f32.gmra.mrb[0].mxu0 %v3492
    %v3563 = vpop.f32.mrb[0].mxu0
    %v3564 = vadd.f32 0.0, %v3563
    %v3565 = vpop.f32.mrb[0].mxu0
    %3566 = vmatprep.mubr.f32.mxu0 0.0
    %3567 = vmatmul.mubr.f32.gmra.mrb[0].mxu0 %v3495
    %v3568 = vpop.f32.mrb[0].mxu0
    %v3569 = vadd.f32 0.0, %v3568
    %v3570 = vpop.f32.mrb[0].mxu0
    %3571 = vdwg.mxu0
    %v3573 = vsel %vm2831, %v3080, 0
    %v3576 = vsel %vm2831, %v3156, 0
    %3578 = vmatprep.subr.mxu0 0.0
    %3579 = vmatpush1.msra.mxu0 %v2824
    %3580 = vmatprep.subr.mxu0 0.0
    %3581 = vmatpush1.msra.mxu0 0.0
    %3582 = vmatprep.subr.mxu0 0.0
    %3583 = vmatpush1.msra.mxu0 0.0
    %3584 = vmatprep.subr.mxu0 0.0
    %3585 = vmatpush1.msra.mxu0 0.0
    %3586 = vmatprep.subr.mxu0 0.0
    %3587 = vmatpush1.msra.mxu0 0.0
    %3588 = vmatprep.subr.mxu0 0.0
    %3589 = vmatpush1.msra.mxu0 0.0
    %3590 = vmatprep.subr.mxu0 0.0
    %3591 = vmatpush1.msra.mxu0 0.0
    %3592 = vmatprep.subr.mxu0 0.0
    %3593 = vmatpush1.msra.mxu0 0.0
    %3594 = vmatprep.subr.mxu0 0.0
    %3595 = vmatpush1.msra.mxu0 0.0
    %3596 = vmatprep.subr.mxu0 0.0
    %3597 = vmatpush1.msra.mxu0 0.0
    %3598 = vmatprep.subr.mxu0 0.0
    %3599 = vmatpush1.msra.mxu0 0.0
    %3600 = vmatprep.subr.mxu0 0.0
    %3601 = vmatpush1.msra.mxu0 0.0
    %3602 = vmatprep.subr.mxu0 0.0
    %3603 = vmatpush1.msra.mxu0 0.0
    %3604 = vmatprep.subr.mxu0 0.0
    %3605 = vmatpush1.msra.mxu0 0.0
    %3606 = vmatprep.subr.mxu0 0.0
    %3607 = vmatpush1.msra.mxu0 0.0
    %3608 = vmatprep.subr.mxu0 0.0
    %3609 = vmatpush1.msra.mxu0 0.0
    %3610 = vmatprep.subr.mxu0 0.0
    %3611 = vmatpush1.msra.mxu0 0.0
    %3612 = vmatprep.subr.mxu0 0.0
    %3613 = vmatpush1.msra.mxu0 0.0
    %3614 = vmatprep.subr.mxu0 0.0
    %3615 = vmatpush1.msra.mxu0 0.0
    %3616 = vmatprep.subr.mxu0 0.0
    %3617 = vmatpush1.msra.mxu0 0.0
    %3618 = vmatprep.subr.mxu0 0.0
    %3619 = vmatpush1.msra.mxu0 0.0
    %3620 = vmatprep.subr.mxu0 0.0
    %3621 = vmatpush1.msra.mxu0 0.0
    %3622 = vmatprep.subr.mxu0 0.0
    %3623 = vmatpush1.msra.mxu0 0.0
    %3624 = vmatprep.subr.mxu0 0.0
    %3625 = vmatpush1.msra.mxu0 0.0
    %3626 = vmatprep.subr.mxu0 0.0
    %3627 = vmatpush1.msra.mxu0 0.0
    %3628 = vmatprep.subr.mxu0 0.0
    %3629 = vmatpush1.msra.mxu0 0.0
    %3630 = vmatprep.subr.mxu0 0.0
    %3631 = vmatpush1.msra.mxu0 0.0
    %3632 = vmatprep.subr.mxu0 0.0
    %3633 = vmatpush1.msra.mxu0 0.0
    %3634 = vmatprep.subr.mxu0 0.0
    %3635 = vmatpush1.msra.mxu0 0.0
    %3636 = vmatprep.subr.mxu0 0.0
    %3637 = vmatpush1.msra.mxu0 0.0
    %3638 = vmatprep.subr.mxu0 0.0
    %3639 = vmatpush1.msra.mxu0 0.0
    %3640 = vmatprep.subr.mxu0 0.0
    %3641 = vmatpush1.msra.mxu0 0.0
    %3642 = vmatprep.mubr.f32.mxu0 0.0
    %3643 = vmatmul.mubr.f32.gmra.mrb[0].mxu0 %v3573
    %v3644 = vpop.f32.mrb[0].mxu0
    %v3645 = vadd.f32 %v3564, %v3644
    %v3646 = vpop.f32.mrb[0].mxu0
    %3647 = vmatprep.mubr.f32.mxu0 0.0
    %3648 = vmatmul.mubr.f32.gmra.mrb[0].mxu0 %v3576
    %v3649 = vpop.f32.mrb[0].mxu0
    %v3650 = vadd.f32 %v3569, %v3649
    %v3651 = vpop.f32.mrb[0].mxu0
    %3652 = vdwg.mxu0
    %3653 = vrot.lane.b32.xlu0 %v2816, 112
    %v3654 = vpop.permute.xlu0 %3653
    %3655 = vrot.lane.b32.xlu0 %v2816, 80
    %v3656 = vpop.permute.xlu0 %3655
    %v3657 = vsel %vm2831, %v3654, 0
    %v3659 = vsel %vm2831, %v3656, 0
    %3661 = vmatprep.subr.mxu0 0.0
    %3662 = vmatpush1.xpose.msra.mxu0 %v3659
    %3663 = vmatprep.subr.mxu0 0.0
    %3664 = vmatpush1.xpose.msra.mxu0 0.0
    %3665 = vmatprep.subr.mxu0 0.0
    %3666 = vmatpush1.xpose.msra.mxu0 0.0
    %3667 = vmatprep.subr.mxu0 0.0
    %3668 = vmatpush1.xpose.msra.mxu0 0.0
    %3669 = vmatprep.subr.mxu0 0.0
    %3670 = vmatpush1.xpose.msra.mxu0 0.0
    %3671 = vmatprep.subr.mxu0 0.0
    %3672 = vmatpush1.xpose.msra.mxu0 0.0
    %3673 = vmatprep.subr.mxu0 0.0
    %3674 = vmatpush1.xpose.msra.mxu0 0.0
    %3675 = vmatprep.subr.mxu0 0.0
    %3676 = vmatpush1.xpose.msra.mxu0 0.0
    %3677 = vmatprep.subr.mxu0 0.0
    %3678 = vmatpush1.xpose.msra.mxu0 0.0
    %3679 = vmatprep.subr.mxu0 0.0
    %3680 = vmatpush1.xpose.msra.mxu0 0.0
    %3681 = vmatprep.subr.mxu0 0.0
    %3682 = vmatpush1.xpose.msra.mxu0 0.0
    %3683 = vmatprep.subr.mxu0 0.0
    %3684 = vmatpush1.xpose.msra.mxu0 0.0
    %3685 = vmatprep.subr.mxu0 0.0
    %3686 = vmatpush1.xpose.msra.mxu0 0.0
    %3687 = vmatprep.subr.mxu0 0.0
    %3688 = vmatpush1.xpose.msra.mxu0 0.0
    %3689 = vmatprep.subr.mxu0 0.0
    %3690 = vmatpush1.xpose.msra.mxu0 0.0
    %3691 = vmatprep.subr.mxu0 0.0
    %3692 = vmatpush1.xpose.msra.mxu0 0.0
    %3693 = vmatprep.subr.mxu0 0.0
    %3694 = vmatpush1.xpose.msra.mxu0 0.0
    %3695 = vmatprep.subr.mxu0 0.0
    %3696 = vmatpush1.xpose.msra.mxu0 0.0
    %3697 = vmatprep.subr.mxu0 0.0
    %3698 = vmatpush1.xpose.msra.mxu0 0.0
    %3699 = vmatprep.subr.mxu0 0.0
    %3700 = vmatpush1.xpose.msra.mxu0 0.0
    %3701 = vmatprep.subr.mxu0 0.0
    %3702 = vmatpush1.xpose.msra.mxu0 0.0
    %3703 = vmatprep.subr.mxu0 0.0
    %3704 = vmatpush1.xpose.msra.mxu0 0.0
    %3705 = vmatprep.subr.mxu0 0.0
    %3706 = vmatpush1.xpose.msra.mxu0 0.0
    %3707 = vmatprep.subr.mxu0 0.0
    %3708 = vmatpush1.xpose.msra.mxu0 0.0
    %3709 = vmatprep.subr.mxu0 0.0
    %3710 = vmatpush1.xpose.msra.mxu0 0.0
    %3711 = vmatprep.subr.mxu0 0.0
    %3712 = vmatpush1.xpose.msra.mxu0 0.0
    %3713 = vmatprep.subr.mxu0 0.0
    %3714 = vmatpush1.xpose.msra.mxu0 0.0
    %3715 = vmatprep.subr.mxu0 0.0
    %3716 = vmatpush1.xpose.msra.mxu0 0.0
    %3717 = vmatprep.subr.mxu0 0.0
    %3718 = vmatpush1.xpose.msra.mxu0 0.0
    %3719 = vmatprep.subr.mxu0 0.0
    %3720 = vmatpush1.xpose.msra.mxu0 0.0
    %3721 = vmatprep.subr.mxu0 0.0
    %3722 = vmatpush1.xpose.msra.mxu0 0.0
    %3723 = vmatprep.subr.mxu0 0.0
    %3724 = vmatpush1.xpose.msra.mxu0 0.0
    %3725 = vmatprep.mubr.f32.mxu0 0.0
    %3726 = vmatmul.mubr.f32.gmra.mrb[0].mxu0 %v3657
    %v3727 = vpop.f32.mrb[0].mxu0
    %v3728 = vadd.f32 0.0, %v3727
    %v3729 = vpop.f32.mrb[0].mxu0
    %3730 = vdwg.mxu0
    %3731 = vrot.lane.b32.xlu0 %v2821, 112
    %v3732 = vpop.permute.xlu0 %3731
    %3733 = vrot.lane.b32.xlu0 %v2821, 80
    %v3734 = vpop.permute.xlu0 %3733
    %v3735 = vsel %vm2831, %v3732, 0
    %v3737 = vsel %vm2831, %v3734, 0
    %3739 = vmatprep.subr.mxu0 0.0
    %3740 = vmatpush1.xpose.msra.mxu0 %v3737
    %3741 = vmatprep.subr.mxu0 0.0
    %3742 = vmatpush1.xpose.msra.mxu0 0.0
    %3743 = vmatprep.subr.mxu0 0.0
    %3744 = vmatpush1.xpose.msra.mxu0 0.0
    %3745 = vmatprep.subr.mxu0 0.0
    %3746 = vmatpush1.xpose.msra.mxu0 0.0
    %3747 = vmatprep.subr.mxu0 0.0
    %3748 = vmatpush1.xpose.msra.mxu0 0.0
    %3749 = vmatprep.subr.mxu0 0.0
    %3750 = vmatpush1.xpose.msra.mxu0 0.0
    %3751 = vmatprep.subr.mxu0 0.0
    %3752 = vmatpush1.xpose.msra.mxu0 0.0
    %3753 = vmatprep.subr.mxu0 0.0
    %3754 = vmatpush1.xpose.msra.mxu0 0.0
    %3755 = vmatprep.subr.mxu0 0.0
    %3756 = vmatpush1.xpose.msra.mxu0 0.0
    %3757 = vmatprep.subr.mxu0 0.0
    %3758 = vmatpush1.xpose.msra.mxu0 0.0
    %3759 = vmatprep.subr.mxu0 0.0
    %3760 = vmatpush1.xpose.msra.mxu0 0.0
    %3761 = vmatprep.subr.mxu0 0.0
    %3762 = vmatpush1.xpose.msra.mxu0 0.0
    %3763 = vmatprep.subr.mxu0 0.0
    %3764 = vmatpush1.xpose.msra.mxu0 0.0
    %3765 = vmatprep.subr.mxu0 0.0
    %3766 = vmatpush1.xpose.msra.mxu0 0.0
    %3767 = vmatprep.subr.mxu0 0.0
    %3768 = vmatpush1.xpose.msra.mxu0 0.0
    %3769 = vmatprep.subr.mxu0 0.0
    %3770 = vmatpush1.xpose.msra.mxu0 0.0
    %3771 = vmatprep.subr.mxu0 0.0
    %3772 = vmatpush1.xpose.msra.mxu0 0.0
    %3773 = vmatprep.subr.mxu0 0.0
    %3774 = vmatpush1.xpose.msra.mxu0 0.0
    %3775 = vmatprep.subr.mxu0 0.0
    %3776 = vmatpush1.xpose.msra.mxu0 0.0
    %3777 = vmatprep.subr.mxu0 0.0
    %3778 = vmatpush1.xpose.msra.mxu0 0.0
    %3779 = vmatprep.subr.mxu0 0.0
    %3780 = vmatpush1.xpose.msra.mxu0 0.0
    %3781 = vmatprep.subr.mxu0 0.0
    %3782 = vmatpush1.xpose.msra.mxu0 0.0
    %3783 = vmatprep.subr.mxu0 0.0
    %3784 = vmatpush1.xpose.msra.mxu0 0.0
    %3785 = vmatprep.subr.mxu0 0.0
    %3786 = vmatpush1.xpose.msra.mxu0 0.0
    %3787 = vmatprep.subr.mxu0 0.0
    %3788 = vmatpush1.xpose.msra.mxu0 0.0
    %3789 = vmatprep.subr.mxu0 0.0
    %3790 = vmatpush1.xpose.msra.mxu0 0.0
    %3791 = vmatprep.subr.mxu0 0.0
    %3792 = vmatpush1.xpose.msra.mxu0 0.0
    %3793 = vmatprep.subr.mxu0 0.0
    %3794 = vmatpush1.xpose.msra.mxu0 0.0
    %3795 = vmatprep.subr.mxu0 0.0
    %3796 = vmatpush1.xpose.msra.mxu0 0.0
    %3797 = vmatprep.subr.mxu0 0.0
    %3798 = vmatpush1.xpose.msra.mxu0 0.0
    %3799 = vmatprep.subr.mxu0 0.0
    %3800 = vmatpush1.xpose.msra.mxu0 0.0
    %3801 = vmatprep.subr.mxu0 0.0
    %3802 = vmatpush1.xpose.msra.mxu0 0.0
    %3803 = vmatprep.mubr.f32.mxu0 0.0
    %3804 = vmatmul.mubr.f32.gmra.mrb[0].mxu0 %v3735
    %v3805 = vpop.f32.mrb[0].mxu0
    %v3806 = vadd.f32 0.0, %v3805
    %v3807 = vpop.f32.mrb[0].mxu0
    %3808 = vdwg.mxu0
    %v3809 = vmul.f32 %v3728, 0.35355338
    %v3810 = vmul.f32 %v3806, 0.35355338
    %v3811 = vsel %vm2831, %v3809, -inf
    %3812 = vmax.xlane.f32.xlu0 %v3811
    %v3813 = vpop.xlane.xlu0 %3812
    %v3814 = vsel %vm2831, %v3810, -inf
    %3815 = vmax.xlane.f32.xlu0 %v3814
    %v3816 = vpop.xlane.xlu0 %3815
    %v3817 = vsub.f32 %v3809, %v3813
    %v3818 = vsub.f32 %v3810, %v3816
    %v3819 = vmul.f32 %v3817, 1.442695
    %v3820 = vpow.pop %v3819
    %v3821 = vmul.f32 %v3818, 1.442695
    %v3822 = vpow.pop %v3821
    %v3823 = vsel %vm2831, %v3820, 0.0
    %3824 = vadd.xlane.f32.xlu0 %v3823
    %v3825 = vpop.xlane.xlu0 %3824
    %v3826 = vsel %vm2831, %v3822, 0.0
    %3827 = vadd.xlane.f32.xlu0 %v3826
    %v3828 = vpop.xlane.xlu0 %3827
    %v3829 = vrcp.pop %v3825
    %v3830 = vrcp.pop %v3828
    %v3831 = vmul.f32 %v3820, %v3829
    %v3832 = vmul.f32 %v3822, %v3830
    %3833 = vrot.lane.b32.xlu0 %v2816, 48
    %v3834 = vpop.permute.xlu0 %3833
    %v3837 = vsel %vm2831, %v3831, 0
    %3839 = vmatprep.subr.mxu0 0.0
    %3840 = vmatpush1.msra.mxu0 %v3834
    %3841 = vmatprep.subr.mxu0 0.0
    %3842 = vmatpush1.msra.mxu0 0.0
    %3843 = vmatprep.subr.mxu0 0.0
    %3844 = vmatpush1.msra.mxu0 0.0
    %3845 = vmatprep.subr.mxu0 0.0
    %3846 = vmatpush1.msra.mxu0 0.0
    %3847 = vmatprep.subr.mxu0 0.0
    %3848 = vmatpush1.msra.mxu0 0.0
    %3849 = vmatprep.subr.mxu0 0.0
    %3850 = vmatpush1.msra.mxu0 0.0
    %3851 = vmatprep.subr.mxu0 0.0
    %3852 = vmatpush1.msra.mxu0 0.0
    %3853 = vmatprep.subr.mxu0 0.0
    %3854 = vmatpush1.msra.mxu0 0.0
    %3855 = vmatprep.subr.mxu0 0.0
    %3856 = vmatpush1.msra.mxu0 0.0
    %3857 = vmatprep.subr.mxu0 0.0
    %3858 = vmatpush1.msra.mxu0 0.0
    %3859 = vmatprep.subr.mxu0 0.0
    %3860 = vmatpush1.msra.mxu0 0.0
    %3861 = vmatprep.subr.mxu0 0.0
    %3862 = vmatpush1.msra.mxu0 0.0
    %3863 = vmatprep.subr.mxu0 0.0
    %3864 = vmatpush1.msra.mxu0 0.0
    %3865 = vmatprep.subr.mxu0 0.0
    %3866 = vmatpush1.msra.mxu0 0.0
    %3867 = vmatprep.subr.mxu0 0.0
    %3868 = vmatpush1.msra.mxu0 0.0
    %3869 = vmatprep.subr.mxu0 0.0
    %3870 = vmatpush1.msra.mxu0 0.0
    %3871 = vmatprep.subr.mxu0 0.0
    %3872 = vmatpush1.msra.mxu0 0.0
    %3873 = vmatprep.subr.mxu0 0.0
    %3874 = vmatpush1.msra.mxu0 0.0
    %3875 = vmatprep.subr.mxu0 0.0
    %3876 = vmatpush1.msra.mxu0 0.0
    %3877 = vmatprep.subr.mxu0 0.0
    %3878 = vmatpush1.msra.mxu0 0.0
    %3879 = vmatprep.subr.mxu0 0.0
    %3880 = vmatpush1.msra.mxu0 0.0
    %3881 = vmatprep.subr.mxu0 0.0
    %3882 = vmatpush1.msra.mxu0 0.0
    %3883 = vmatprep.subr.mxu0 0.0
    %3884 = vmatpush1.msra.mxu0 0.0
    %3885 = vmatprep.subr.mxu0 0.0
    %3886 = vmatpush1.msra.mxu0 0.0
    %3887 = vmatprep.subr.mxu0 0.0
    %3888 = vmatpush1.msra.mxu0 0.0
    %3889 = vmatprep.subr.mxu0 0.0
    %3890 = vmatpush1.msra.mxu0 0.0
    %3891 = vmatprep.subr.mxu0 0.0
    %3892 = vmatpush1.msra.mxu0 0.0
    %3893 = vmatprep.subr.mxu0 0.0
    %3894 = vmatpush1.msra.mxu0 0.0
    %3895 = vmatprep.subr.mxu0 0.0
    %3896 = vmatpush1.msra.mxu0 0.0
    %3897 = vmatprep.subr.mxu0 0.0
    %3898 = vmatpush1.msra.mxu0 0.0
    %3899 = vmatprep.subr.mxu0 0.0
    %3900 = vmatpush1.msra.mxu0 0.0
    %3901 = vmatprep.subr.mxu0 0.0
    %3902 = vmatpush1.msra.mxu0 0.0
    %3903 = vmatprep.mubr.f32.mxu0 0.0
    %3904 = vmatmul.mubr.f32.gmra.mrb[0].mxu0 %v3837
    %v3905 = vpop.f32.mrb[0].mxu0
    %v3906 = vadd.f32 0.0, %v3905
    %v3907 = vpop.f32.mrb[0].mxu0
    %3908 = vdwg.mxu0
    %3909 = vrot.lane.b32.xlu0 %v2821, 48
    %v3910 = vpop.permute.xlu0 %3909
    %v3913 = vsel %vm2831, %v3832, 0
    %3915 = vmatprep.subr.mxu0 0.0
    %3916 = vmatpush1.msra.mxu0 %v3910
    %3917 = vmatprep.subr.mxu0 0.0
    %3918 = vmatpush1.msra.mxu0 0.0
    %3919 = vmatprep.subr.mxu0 0.0
    %3920 = vmatpush1.msra.mxu0 0.0
    %3921 = vmatprep.subr.mxu0 0.0
    %3922 = vmatpush1.msra.mxu0 0.0
    %3923 = vmatprep.subr.mxu0 0.0
    %3924 = vmatpush1.msra.mxu0 0.0
    %3925 = vmatprep.subr.mxu0 0.0
    %3926 = vmatpush1.msra.mxu0 0.0
    %3927 = vmatprep.subr.mxu0 0.0
    %3928 = vmatpush1.msra.mxu0 0.0
    %3929 = vmatprep.subr.mxu0 0.0
    %3930 = vmatpush1.msra.mxu0 0.0
    %3931 = vmatprep.subr.mxu0 0.0
    %3932 = vmatpush1.msra.mxu0 0.0
    %3933 = vmatprep.subr.mxu0 0.0
    %3934 = vmatpush1.msra.mxu0 0.0
    %3935 = vmatprep.subr.mxu0 0.0
    %3936 = vmatpush1.msra.mxu0 0.0
    %3937 = vmatprep.subr.mxu0 0.0
    %3938 = vmatpush1.msra.mxu0 0.0
    %3939 = vmatprep.subr.mxu0 0.0
    %3940 = vmatpush1.msra.mxu0 0.0
    %3941 = vmatprep.subr.mxu0 0.0
    %3942 = vmatpush1.msra.mxu0 0.0
    %3943 = vmatprep.subr.mxu0 0.0
    %3944 = vmatpush1.msra.mxu0 0.0
    %3945 = vmatprep.subr.mxu0 0.0
    %3946 = vmatpush1.msra.mxu0 0.0
    %3947 = vmatprep.subr.mxu0 0.0
    %3948 = vmatpush1.msra.mxu0 0.0
    %3949 = vmatprep.subr.mxu0 0.0
    %3950 = vmatpush1.msra.mxu0 0.0
    %3951 = vmatprep.subr.mxu0 0.0
    %3952 = vmatpush1.msra.mxu0 0.0
    %3953 = vmatprep.subr.mxu0 0.0
    %3954 = vmatpush1.msra.mxu0 0.0
    %3955 = vmatprep.subr.mxu0 0.0
    %3956 = vmatpush1.msra.mxu0 0.0
    %3957 = vmatprep.subr.mxu0 0.0
    %3958 = vmatpush1.msra.mxu0 0.0
    %3959 = vmatprep.subr.mxu0 0.0
    %3960 = vmatpush1.msra.mxu0 0.0
    %3961 = vmatprep.subr.mxu0 0.0
    %3962 = vmatpush1.msra.mxu0 0.0
    %3963 = vmatprep.subr.mxu0 0.0
    %3964 = vmatpush1.msra.mxu0 0.0
    %3965 = vmatprep.subr.mxu0 0.0
    %3966 = vmatpush1.msra.mxu0 0.0
    %3967 = vmatprep.subr.mxu0 0.0
    %3968 = vmatpush1.msra.mxu0 0.0
    %3969 = vmatprep.subr.mxu0 0.0
    %3970 = vmatpush1.msra.mxu0 0.0
    %3971 = vmatprep.subr.mxu0 0.0
    %3972 = vmatpush1.msra.mxu0 0.0
    %3973 = vmatprep.subr.mxu0 0.0
    %3974 = vmatpush1.msra.mxu0 0.0
    %3975 = vmatprep.subr.mxu0 0.0
    %3976 = vmatpush1.msra.mxu0 0.0
    %3977 = vmatprep.subr.mxu0 0.0
    %3978 = vmatpush1.msra.mxu0 0.0
    %3979 = vmatprep.mubr.f32.mxu0 0.0
    %3980 = vmatmul.mubr.f32.gmra.mrb[0].mxu0 %v3913
    %v3981 = vpop.f32.mrb[0].mxu0
    %v3982 = vadd.f32 0.0, %v3981
    %v3983 = vpop.f32.mrb[0].mxu0
    %3984 = vdwg.mxu0
    %v3986 = vsel %vm2831, %v3906, 0
    %v3989 = vsel %vm2831, %v3982, 0
    %3991 = vmatprep.subr.mxu0 0.0
    %3992 = vmatpush1.msra.mxu0 %v2826
    %3993 = vmatprep.subr.mxu0 0.0
    %3994 = vmatpush1.msra.mxu0 0.0
    %3995 = vmatprep.subr.mxu0 0.0
    %3996 = vmatpush1.msra.mxu0 0.0
    %3997 = vmatprep.subr.mxu0 0.0
    %3998 = vmatpush1.msra.mxu0 0.0
    %3999 = vmatprep.subr.mxu0 0.0
    %4000 = vmatpush1.msra.mxu0 0.0
    %4001 = vmatprep.subr.mxu0 0.0
    %4002 = vmatpush1.msra.mxu0 0.0
    %4003 = vmatprep.subr.mxu0 0.0
    %4004 = vmatpush1.msra.mxu0 0.0
    %4005 = vmatprep.subr.mxu0 0.0
    %4006 = vmatpush1.msra.mxu0 0.0
    %4007 = vmatprep.subr.mxu0 0.0
    %4008 = vmatpush1.msra.mxu0 0.0
    %4009 = vmatprep.subr.mxu0 0.0
    %4010 = vmatpush1.msra.mxu0 0.0
    %4011 = vmatprep.subr.mxu0 0.0
    %4012 = vmatpush1.msra.mxu0 0.0
    %4013 = vmatprep.subr.mxu0 0.0
    %4014 = vmatpush1.msra.mxu0 0.0
    %4015 = vmatprep.subr.mxu0 0.0
    %4016 = vmatpush1.msra.mxu0 0.0
    %4017 = vmatprep.subr.mxu0 0.0
    %4018 = vmatpush1.msra.mxu0 0.0
    %4019 = vmatprep.subr.mxu0 0.0
    %4020 = vmatpush1.msra.mxu0 0.0
    %4021 = vmatprep.subr.mxu0 0.0
    %4022 = vmatpush1.msra.mxu0 0.0
    %4023 = vmatprep.subr.mxu0 0.0
    %4024 = vmatpush1.msra.mxu0 0.0
    %4025 = vmatprep.subr.mxu0 0.0
    %4026 = vmatpush1.msra.mxu0 0.0
    %4027 = vmatprep.subr.mxu0 0.0
    %4028 = vmatpush1.msra.mxu0 0.0
    %4029 = vmatprep.subr.mxu0 0.0
    %4030 = vmatpush1.msra.mxu0 0.0
    %4031 = vmatprep.subr.mxu0 0.0
    %4032 = vmatpush1.msra.mxu0 0.0
    %4033 = vmatprep.subr.mxu0 0.0
    %4034 = vmatpush1.msra.mxu0 0.0
    %4035 = vmatprep.subr.mxu0 0.0
    %4036 = vmatpush1.msra.mxu0 0.0
    %4037 = vmatprep.subr.mxu0 0.0
    %4038 = vmatpush1.msra.mxu0 0.0
    %4039 = vmatprep.subr.mxu0 0.0
    %4040 = vmatpush1.msra.mxu0 0.0
    %4041 = vmatprep.subr.mxu0 0.0
    %4042 = vmatpush1.msra.mxu0 0.0
    %4043 = vmatprep.subr.mxu0 0.0
    %4044 = vmatpush1.msra.mxu0 0.0
    %4045 = vmatprep.subr.mxu0 0.0
    %4046 = vmatpush1.msra.mxu0 0.0
    %4047 = vmatprep.subr.mxu0 0.0
    %4048 = vmatpush1.msra.mxu0 0.0
    %4049 = vmatprep.subr.mxu0 0.0
    %4050 = vmatpush1.msra.mxu0 0.0
    %4051 = vmatprep.subr.mxu0 0.0
    %4052 = vmatpush1.msra.mxu0 0.0
    %4053 = vmatprep.subr.mxu0 0.0
    %4054 = vmatpush1.msra.mxu0 0.0
    %4055 = vmatprep.mubr.f32.mxu0 0.0
    %4056 = vmatmul.mubr.f32.gmra.mrb[0].mxu0 %v3986
    %v4057 = vpop.f32.mrb[0].mxu0
    %v4058 = vadd.f32 0.0, %v4057
    %v4059 = vpop.f32.mrb[0].mxu0
    %4060 = vmatprep.mubr.f32.mxu0 0.0
    %4061 = vmatmul.mubr.f32.gmra.mrb[0].mxu0 %v3989
    %v4062 = vpop.f32.mrb[0].mxu0
    %v4063 = vadd.f32 0.0, %v4062
    %v4064 = vpop.f32.mrb[0].mxu0
    %4065 = vdwg.mxu0
    %v4066 = vadd.f32 %v3645, %v4058
    %v4067 = vadd.f32 %v3650, %v4063
    %4068 = vrot.lane.b32.xlu0 %v2816, 104
    %v4069 = vpop.permute.xlu0 %4068
    %4070 = vrot.lane.b32.xlu0 %v2816, 72
    %v4071 = vpop.permute.xlu0 %4070
    %v4072 = vsel %vm2831, %v4069, 0
    %v4074 = vsel %vm2831, %v4071, 0
    %4076 = vmatprep.subr.mxu0 0.0
    %4077 = vmatpush1.xpose.msra.mxu0 %v4074
    %4078 = vmatprep.subr.mxu0 0.0
    %4079 = vmatpush1.xpose.msra.mxu0 0.0
    %4080 = vmatprep.subr.mxu0 0.0
    %4081 = vmatpush1.xpose.msra.mxu0 0.0
    %4082 = vmatprep.subr.mxu0 0.0
    %4083 = vmatpush1.xpose.msra.mxu0 0.0
    %4084 = vmatprep.subr.mxu0 0.0
    %4085 = vmatpush1.xpose.msra.mxu0 0.0
    %4086 = vmatprep.subr.mxu0 0.0
    %4087 = vmatpush1.xpose.msra.mxu0 0.0
    %4088 = vmatprep.subr.mxu0 0.0
    %4089 = vmatpush1.xpose.msra.mxu0 0.0
    %4090 = vmatprep.subr.mxu0 0.0
    %4091 = vmatpush1.xpose.msra.mxu0 0.0
    %4092 = vmatprep.subr.mxu0 0.0
    %4093 = vmatpush1.xpose.msra.mxu0 0.0
    %4094 = vmatprep.subr.mxu0 0.0
    %4095 = vmatpush1.xpose.msra.mxu0 0.0
    %4096 = vmatprep.subr.mxu0 0.0
    %4097 = vmatpush1.xpose.msra.mxu0 0.0
    %4098 = vmatprep.subr.mxu0 0.0
    %4099 = vmatpush1.xpose.msra.mxu0 0.0
    %4100 = vmatprep.subr.mxu0 0.0
    %4101 = vmatpush1.xpose.msra.mxu0 0.0
    %4102 = vmatprep.subr.mxu0 0.0
    %4103 = vmatpush1.xpose.msra.mxu0 0.0
    %4104 = vmatprep.subr.mxu0 0.0
    %4105 = vmatpush1.xpose.msra.mxu0 0.0
    %4106 = vmatprep.subr.mxu0 0.0
    %4107 = vmatpush1.xpose.msra.mxu0 0.0
    %4108 = vmatprep.subr.mxu0 0.0
    %4109 = vmatpush1.xpose.msra.mxu0 0.0
    %4110 = vmatprep.subr.mxu0 0.0
    %4111 = vmatpush1.xpose.msra.mxu0 0.0
    %4112 = vmatprep.subr.mxu0 0.0
    %4113 = vmatpush1.xpose.msra.mxu0 0.0
    %4114 = vmatprep.subr.mxu0 0.0
    %4115 = vmatpush1.xpose.msra.mxu0 0.0
    %4116 = vmatprep.subr.mxu0 0.0
    %4117 = vmatpush1.xpose.msra.mxu0 0.0
    %4118 = vmatprep.subr.mxu0 0.0
    %4119 = vmatpush1.xpose.msra.mxu0 0.0
    %4120 = vmatprep.subr.mxu0 0.0
    %4121 = vmatpush1.xpose.msra.mxu0 0.0
    %4122 = vmatprep.subr.mxu0 0.0
    %4123 = vmatpush1.xpose.msra.mxu0 0.0
    %4124 = vmatprep.subr.mxu0 0.0
    %4125 = vmatpush1.xpose.msra.mxu0 0.0
    %4126 = vmatprep.subr.mxu0 0.0
    %4127 = vmatpush1.xpose.msra.mxu0 0.0
    %4128 = vmatprep.subr.mxu0 0.0
    %4129 = vmatpush1.xpose.msra.mxu0 0.0
    %4130 = vmatprep.subr.mxu0 0.0
    %4131 = vmatpush1.xpose.msra.mxu0 0.0
    %4132 = vmatprep.subr.mxu0 0.0
    %4133 = vmatpush1.xpose.msra.mxu0 0.0
    %4134 = vmatprep.subr.mxu0 0.0
    %4135 = vmatpush1.xpose.msra.mxu0 0.0
    %4136 = vmatprep.subr.mxu0 0.0
    %4137 = vmatpush1.xpose.msra.mxu0 0.0
    %4138 = vmatprep.subr.mxu0 0.0
    %4139 = vmatpush1.xpose.msra.mxu0 0.0
    %4140 = vmatprep.mubr.f32.mxu0 0.0
    %4141 = vmatmul.mubr.f32.gmra.mrb[0].mxu0 %v4072
    %v4142 = vpop.f32.mrb[0].mxu0
    %v4143 = vadd.f32 0.0, %v4142
    %v4144 = vpop.f32.mrb[0].mxu0
    %4145 = vdwg.mxu0
    %4146 = vrot.lane.b32.xlu0 %v2821, 104
    %v4147 = vpop.permute.xlu0 %4146
    %4148 = vrot.lane.b32.xlu0 %v2821, 72
    %v4149 = vpop.permute.xlu0 %4148
    %v4150 = vsel %vm2831, %v4147, 0
    %v4152 = vsel %vm2831, %v4149, 0
    %4154 = vmatprep.subr.mxu0 0.0
    %4155 = vmatpush1.xpose.msra.mxu0 %v4152
    %4156 = vmatprep.subr.mxu0 0.0
    %4157 = vmatpush1.xpose.msra.mxu0 0.0
    %4158 = vmatprep.subr.mxu0 0.0
    %4159 = vmatpush1.xpose.msra.mxu0 0.0
    %4160 = vmatprep.subr.mxu0 0.0
    %4161 = vmatpush1.xpose.msra.mxu0 0.0
    %4162 = vmatprep.subr.mxu0 0.0
    %4163 = vmatpush1.xpose.msra.mxu0 0.0
    %4164 = vmatprep.subr.mxu0 0.0
    %4165 = vmatpush1.xpose.msra.mxu0 0.0
    %4166 = vmatprep.subr.mxu0 0.0
    %4167 = vmatpush1.xpose.msra.mxu0 0.0
    %4168 = vmatprep.subr.mxu0 0.0
    %4169 = vmatpush1.xpose.msra.mxu0 0.0
    %4170 = vmatprep.subr.mxu0 0.0
    %4171 = vmatpush1.xpose.msra.mxu0 0.0
    %4172 = vmatprep.subr.mxu0 0.0
    %4173 = vmatpush1.xpose.msra.mxu0 0.0
    %4174 = vmatprep.subr.mxu0 0.0
    %4175 = vmatpush1.xpose.msra.mxu0 0.0
    %4176 = vmatprep.subr.mxu0 0.0
    %4177 = vmatpush1.xpose.msra.mxu0 0.0
    %4178 = vmatprep.subr.mxu0 0.0
    %4179 = vmatpush1.xpose.msra.mxu0 0.0
    %4180 = vmatprep.subr.mxu0 0.0
    %4181 = vmatpush1.xpose.msra.mxu0 0.0
    %4182 = vmatprep.subr.mxu0 0.0
    %4183 = vmatpush1.xpose.msra.mxu0 0.0
    %4184 = vmatprep.subr.mxu0 0.0
    %4185 = vmatpush1.xpose.msra.mxu0 0.0
    %4186 = vmatprep.subr.mxu0 0.0
    %4187 = vmatpush1.xpose.msra.mxu0 0.0
    %4188 = vmatprep.subr.mxu0 0.0
    %4189 = vmatpush1.xpose.msra.mxu0 0.0
    %4190 = vmatprep.subr.mxu0 0.0
    %4191 = vmatpush1.xpose.msra.mxu0 0.0
    %4192 = vmatprep.subr.mxu0 0.0
    %4193 = vmatpush1.xpose.msra.mxu0 0.0
    %4194 = vmatprep.subr.mxu0 0.0
    %4195 = vmatpush1.xpose.msra.mxu0 0.0
    %4196 = vmatprep.subr.mxu0 0.0
    %4197 = vmatpush1.xpose.msra.mxu0 0.0
    %4198 = vmatprep.subr.mxu0 0.0
    %4199 = vmatpush1.xpose.msra.mxu0 0.0
    %4200 = vmatprep.subr.mxu0 0.0
    %4201 = vmatpush1.xpose.msra.mxu0 0.0
    %4202 = vmatprep.subr.mxu0 0.0
    %4203 = vmatpush1.xpose.msra.mxu0 0.0
    %4204 = vmatprep.subr.mxu0 0.0
    %4205 = vmatpush1.xpose.msra.mxu0 0.0
    %4206 = vmatprep.subr.mxu0 0.0
    %4207 = vmatpush1.xpose.msra.mxu0 0.0
    %4208 = vmatprep.subr.mxu0 0.0
    %4209 = vmatpush1.xpose.msra.mxu0 0.0
    %4210 = vmatprep.subr.mxu0 0.0
    %4211 = vmatpush1.xpose.msra.mxu0 0.0
    %4212 = vmatprep.subr.mxu0 0.0
    %4213 = vmatpush1.xpose.msra.mxu0 0.0
    %4214 = vmatprep.subr.mxu0 0.0
    %4215 = vmatpush1.xpose.msra.mxu0 0.0
    %4216 = vmatprep.subr.mxu0 0.0
    %4217 = vmatpush1.xpose.msra.mxu0 0.0
    %4218 = vmatprep.mubr.f32.mxu0 0.0
    %4219 = vmatmul.mubr.f32.gmra.mrb[0].mxu0 %v4150
    %v4220 = vpop.f32.mrb[0].mxu0
    %v4221 = vadd.f32 0.0, %v4220
    %v4222 = vpop.f32.mrb[0].mxu0
    %4223 = vdwg.mxu0
    %v4224 = vmul.f32 %v4143, 0.35355338
    %v4225 = vmul.f32 %v4221, 0.35355338
    %v4226 = vsel %vm2831, %v4224, -inf
    %4227 = vmax.xlane.f32.xlu0 %v4226
    %v4228 = vpop.xlane.xlu0 %4227
    %v4229 = vsel %vm2831, %v4225, -inf
    %4230 = vmax.xlane.f32.xlu0 %v4229
    %v4231 = vpop.xlane.xlu0 %4230
    %v4232 = vsub.f32 %v4224, %v4228
    %v4233 = vsub.f32 %v4225, %v4231
    %v4234 = vmul.f32 %v4232, 1.442695
    %v4235 = vpow.pop %v4234
    %v4236 = vmul.f32 %v4233, 1.442695
    %v4237 = vpow.pop %v4236
    %v4238 = vsel %vm2831, %v4235, 0.0
    %4239 = vadd.xlane.f32.xlu0 %v4238
    %v4240 = vpop.xlane.xlu0 %4239
    %v4241 = vsel %vm2831, %v4237, 0.0
    %4242 = vadd.xlane.f32.xlu0 %v4241
    %v4243 = vpop.xlane.xlu0 %4242
    %v4244 = vrcp.pop %v4240
    %v4245 = vrcp.pop %v4243
    %v4246 = vmul.f32 %v4235, %v4244
    %v4247 = vmul.f32 %v4237, %v4245
    %4248 = vrot.lane.b32.xlu0 %v2816, 40
    %v4249 = vpop.permute.xlu0 %4248
    %v4252 = vsel %vm2831, %v4246, 0
    %4254 = vmatprep.subr.mxu0 0.0
    %4255 = vmatpush1.msra.mxu0 %v4249
    %4256 = vmatprep.subr.mxu0 0.0
    %4257 = vmatpush1.msra.mxu0 0.0
    %4258 = vmatprep.subr.mxu0 0.0
    %4259 = vmatpush1.msra.mxu0 0.0
    %4260 = vmatprep.subr.mxu0 0.0
    %4261 = vmatpush1.msra.mxu0 0.0
    %4262 = vmatprep.subr.mxu0 0.0
    %4263 = vmatpush1.msra.mxu0 0.0
    %4264 = vmatprep.subr.mxu0 0.0
    %4265 = vmatpush1.msra.mxu0 0.0
    %4266 = vmatprep.subr.mxu0 0.0
    %4267 = vmatpush1.msra.mxu0 0.0
    %4268 = vmatprep.subr.mxu0 0.0
    %4269 = vmatpush1.msra.mxu0 0.0
    %4270 = vmatprep.subr.mxu0 0.0
    %4271 = vmatpush1.msra.mxu0 0.0
    %4272 = vmatprep.subr.mxu0 0.0
    %4273 = vmatpush1.msra.mxu0 0.0
    %4274 = vmatprep.subr.mxu0 0.0
    %4275 = vmatpush1.msra.mxu0 0.0
    %4276 = vmatprep.subr.mxu0 0.0
    %4277 = vmatpush1.msra.mxu0 0.0
    %4278 = vmatprep.subr.mxu0 0.0
    %4279 = vmatpush1.msra.mxu0 0.0
    %4280 = vmatprep.subr.mxu0 0.0
    %4281 = vmatpush1.msra.mxu0 0.0
    %4282 = vmatprep.subr.mxu0 0.0
    %4283 = vmatpush1.msra.mxu0 0.0
    %4284 = vmatprep.subr.mxu0 0.0
    %4285 = vmatpush1.msra.mxu0 0.0
    %4286 = vmatprep.subr.mxu0 0.0
    %4287 = vmatpush1.msra.mxu0 0.0
    %4288 = vmatprep.subr.mxu0 0.0
    %4289 = vmatpush1.msra.mxu0 0.0
    %4290 = vmatprep.subr.mxu0 0.0
    %4291 = vmatpush1.msra.mxu0 0.0
    %4292 = vmatprep.subr.mxu0 0.0
    %4293 = vmatpush1.msra.mxu0 0.0
    %4294 = vmatprep.subr.mxu0 0.0
    %4295 = vmatpush1.msra.mxu0 0.0
    %4296 = vmatprep.subr.mxu0 0.0
    %4297 = vmatpush1.msra.mxu0 0.0
    %4298 = vmatprep.subr.mxu0 0.0
    %4299 = vmatpush1.msra.mxu0 0.0
    %4300 = vmatprep.subr.mxu0 0.0
    %4301 = vmatpush1.msra.mxu0 0.0
    %4302 = vmatprep.subr.mxu0 0.0
    %4303 = vmatpush1.msra.mxu0 0.0
    %4304 = vmatprep.subr.mxu0 0.0
    %4305 = vmatpush1.msra.mxu0 0.0
    %4306 = vmatprep.subr.mxu0 0.0
    %4307 = vmatpush1.msra.mxu0 0.0
    %4308 = vmatprep.subr.mxu0 0.0
    %4309 = vmatpush1.msra.mxu0 0.0
    %4310 = vmatprep.subr.mxu0 0.0
    %4311 = vmatpush1.msra.mxu0 0.0
    %4312 = vmatprep.subr.mxu0 0.0
    %4313 = vmatpush1.msra.mxu0 0.0
    %4314 = vmatprep.subr.mxu0 0.0
    %4315 = vmatpush1.msra.mxu0 0.0
    %4316 = vmatprep.subr.mxu0 0.0
    %4317 = vmatpush1.msra.mxu0 0.0
    %4318 = vmatprep.mubr.f32.mxu0 0.0
    %4319 = vmatmul.mubr.f32.gmra.mrb[0].mxu0 %v4252
    %v4320 = vpop.f32.mrb[0].mxu0
    %v4321 = vadd.f32 0.0, %v4320
    %v4322 = vpop.f32.mrb[0].mxu0
    %4323 = vdwg.mxu0
    %4324 = vrot.lane.b32.xlu0 %v2821, 40
    %v4325 = vpop.permute.xlu0 %4324
    %v4328 = vsel %vm2831, %v4247, 0
    %4330 = vmatprep.subr.mxu0 0.0
    %4331 = vmatpush1.msra.mxu0 %v4325
    %4332 = vmatprep.subr.mxu0 0.0
    %4333 = vmatpush1.msra.mxu0 0.0
    %4334 = vmatprep.subr.mxu0 0.0
    %4335 = vmatpush1.msra.mxu0 0.0
    %4336 = vmatprep.subr.mxu0 0.0
    %4337 = vmatpush1.msra.mxu0 0.0
    %4338 = vmatprep.subr.mxu0 0.0
    %4339 = vmatpush1.msra.mxu0 0.0
    %4340 = vmatprep.subr.mxu0 0.0
    %4341 = vmatpush1.msra.mxu0 0.0
    %4342 = vmatprep.subr.mxu0 0.0
    %4343 = vmatpush1.msra.mxu0 0.0
    %4344 = vmatprep.subr.mxu0 0.0
    %4345 = vmatpush1.msra.mxu0 0.0
    %4346 = vmatprep.subr.mxu0 0.0
    %4347 = vmatpush1.msra.mxu0 0.0
    %4348 = vmatprep.subr.mxu0 0.0
    %4349 = vmatpush1.msra.mxu0 0.0
    %4350 = vmatprep.subr.mxu0 0.0
    %4351 = vmatpush1.msra.mxu0 0.0
    %4352 = vmatprep.subr.mxu0 0.0
    %4353 = vmatpush1.msra.mxu0 0.0
    %4354 = vmatprep.subr.mxu0 0.0
    %4355 = vmatpush1.msra.mxu0 0.0
    %4356 = vmatprep.subr.mxu0 0.0
    %4357 = vmatpush1.msra.mxu0 0.0
    %4358 = vmatprep.subr.mxu0 0.0
    %4359 = vmatpush1.msra.mxu0 0.0
    %4360 = vmatprep.subr.mxu0 0.0
    %4361 = vmatpush1.msra.mxu0 0.0
    %4362 = vmatprep.subr.mxu0 0.0
    %4363 = vmatpush1.msra.mxu0 0.0
    %4364 = vmatprep.subr.mxu0 0.0
    %4365 = vmatpush1.msra.mxu0 0.0
    %4366 = vmatprep.subr.mxu0 0.0
    %4367 = vmatpush1.msra.mxu0 0.0
    %4368 = vmatprep.subr.mxu0 0.0
    %4369 = vmatpush1.msra.mxu0 0.0
    %4370 = vmatprep.subr.mxu0 0.0
    %4371 = vmatpush1.msra.mxu0 0.0
    %4372 = vmatprep.subr.mxu0 0.0
    %4373 = vmatpush1.msra.mxu0 0.0
    %4374 = vmatprep.subr.mxu0 0.0
    %4375 = vmatpush1.msra.mxu0 0.0
    %4376 = vmatprep.subr.mxu0 0.0
    %4377 = vmatpush1.msra.mxu0 0.0
    %4378 = vmatprep.subr.mxu0 0.0
    %4379 = vmatpush1.msra.mxu0 0.0
    %4380 = vmatprep.subr.mxu0 0.0
    %4381 = vmatpush1.msra.mxu0 0.0
    %4382 = vmatprep.subr.mxu0 0.0
    %4383 = vmatpush1.msra.mxu0 0.0
    %4384 = vmatprep.subr.mxu0 0.0
    %4385 = vmatpush1.msra.mxu0 0.0
    %4386 = vmatprep.subr.mxu0 0.0
    %4387 = vmatpush1.msra.mxu0 0.0
    %4388 = vmatprep.subr.mxu0 0.0
    %4389 = vmatpush1.msra.mxu0 0.0
    %4390 = vmatprep.subr.mxu0 0.0
    %4391 = vmatpush1.msra.mxu0 0.0
    %4392 = vmatprep.subr.mxu0 0.0
    %4393 = vmatpush1.msra.mxu0 0.0
    %4394 = vmatprep.mubr.f32.mxu0 0.0
    %4395 = vmatmul.mubr.f32.gmra.mrb[0].mxu0 %v4328
    %v4396 = vpop.f32.mrb[0].mxu0
    %v4397 = vadd.f32 0.0, %v4396
    %v4398 = vpop.f32.mrb[0].mxu0
    %4399 = vdwg.mxu0
    %v4401 = vsel %vm2831, %v4321, 0
    %v4404 = vsel %vm2831, %v4397, 0
    %4406 = vmatprep.subr.mxu0 0.0
    %4407 = vmatpush1.msra.mxu0 %v2827
    %4408 = vmatprep.subr.mxu0 0.0
    %4409 = vmatpush1.msra.mxu0 0.0
    %4410 = vmatprep.subr.mxu0 0.0
    %4411 = vmatpush1.msra.mxu0 0.0
    %4412 = vmatprep.subr.mxu0 0.0
    %4413 = vmatpush1.msra.mxu0 0.0
    %4414 = vmatprep.subr.mxu0 0.0
    %4415 = vmatpush1.msra.mxu0 0.0
    %4416 = vmatprep.subr.mxu0 0.0
    %4417 = vmatpush1.msra.mxu0 0.0
    %4418 = vmatprep.subr.mxu0 0.0
    %4419 = vmatpush1.msra.mxu0 0.0
    %4420 = vmatprep.subr.mxu0 0.0
    %4421 = vmatpush1.msra.mxu0 0.0
    %4422 = vmatprep.subr.mxu0 0.0
    %4423 = vmatpush1.msra.mxu0 0.0
    %4424 = vmatprep.subr.mxu0 0.0
    %4425 = vmatpush1.msra.mxu0 0.0
    %4426 = vmatprep.subr.mxu0 0.0
    %4427 = vmatpush1.msra.mxu0 0.0
    %4428 = vmatprep.subr.mxu0 0.0
    %4429 = vmatpush1.msra.mxu0 0.0
    %4430 = vmatprep.subr.mxu0 0.0
    %4431 = vmatpush1.msra.mxu0 0.0
    %4432 = vmatprep.subr.mxu0 0.0
    %4433 = vmatpush1.msra.mxu0 0.0
    %4434 = vmatprep.subr.mxu0 0.0
    %4435 = vmatpush1.msra.mxu0 0.0
    %4436 = vmatprep.subr.mxu0 0.0
    %4437 = vmatpush1.msra.mxu0 0.0
    %4438 = vmatprep.subr.mxu0 0.0
    %4439 = vmatpush1.msra.mxu0 0.0
    %4440 = vmatprep.subr.mxu0 0.0
    %4441 = vmatpush1.msra.mxu0 0.0
    %4442 = vmatprep.subr.mxu0 0.0
    %4443 = vmatpush1.msra.mxu0 0.0
    %4444 = vmatprep.subr.mxu0 0.0
    %4445 = vmatpush1.msra.mxu0 0.0
    %4446 = vmatprep.subr.mxu0 0.0
    %4447 = vmatpush1.msra.mxu0 0.0
    %4448 = vmatprep.subr.mxu0 0.0
    %4449 = vmatpush1.msra.mxu0 0.0
    %4450 = vmatprep.subr.mxu0 0.0
    %4451 = vmatpush1.msra.mxu0 0.0
    %4452 = vmatprep.subr.mxu0 0.0
    %4453 = vmatpush1.msra.mxu0 0.0
    %4454 = vmatprep.subr.mxu0 0.0
    %4455 = vmatpush1.msra.mxu0 0.0
    %4456 = vmatprep.subr.mxu0 0.0
    %4457 = vmatpush1.msra.mxu0 0.0
    %4458 = vmatprep.subr.mxu0 0.0
    %4459 = vmatpush1.msra.mxu0 0.0
    %4460 = vmatprep.subr.mxu0 0.0
    %4461 = vmatpush1.msra.mxu0 0.0
    %4462 = vmatprep.subr.mxu0 0.0
    %4463 = vmatpush1.msra.mxu0 0.0
    %4464 = vmatprep.subr.mxu0 0.0
    %4465 = vmatpush1.msra.mxu0 0.0
    %4466 = vmatprep.subr.mxu0 0.0
    %4467 = vmatpush1.msra.mxu0 0.0
    %4468 = vmatprep.subr.mxu0 0.0
    %4469 = vmatpush1.msra.mxu0 0.0
    %4470 = vmatprep.mubr.f32.mxu0 0.0
    %4471 = vmatmul.mubr.f32.gmra.mrb[0].mxu0 %v4401
    %v4472 = vpop.f32.mrb[0].mxu0
    %v4473 = vadd.f32 0.0, %v4472
    %v4474 = vpop.f32.mrb[0].mxu0
    %4475 = vmatprep.mubr.f32.mxu0 0.0
    %4476 = vmatmul.mubr.f32.gmra.mrb[0].mxu0 %v4404
    %v4477 = vpop.f32.mrb[0].mxu0
    %v4478 = vadd.f32 0.0, %v4477
    %v4479 = vpop.f32.mrb[0].mxu0
    %4480 = vdwg.mxu0
    %v4481 = vadd.f32 %v4066, %v4473
    %v4482 = vadd.f32 %v4067, %v4478
    %v4483 = vld [vmem:[%s12] sm:$0x1]
    %v4485 = vlaneseq
    %v4486 = vshrl.u32 %v4485, 7
    %v4487 = vsub.s32 0, %v4486
    %v4488 = vrot.slane %v4483, %v4487
    %v4490 = vadd.f32 %v4481, %v4488
    %v4491 = vadd.f32 %v4482, %v4488
    %v4492 = vadd.f32 %v2730, %v4490
    %v4493 = vadd.f32 %v2731, %v4491
    %v4494 = vld [vmem:[%s13] sm:$0x1]
    %v4495 = vld [vmem:[%s14] sm:$0x1]
    %v4496 = vsel %vm117, %v4492, 0.0
    %4497 = vadd.xlane.f32.xlu0 %v4496
    %v4498 = vpop.xlane.xlu0 %4497
    %v4499 = vsel %vm117, %v4493, 0.0
    %4500 = vadd.xlane.f32.xlu0 %v4499
    %v4501 = vpop.xlane.xlu0 %4500
    %v4502 = vmul.f32 %v4498, %v2695
    %v4503 = vmul.f32 %v4501, %v2695
    %v4504 = vsub.f32 %v4492, %v4502
    %v4505 = vsub.f32 %v4493, %v4503
    %v4506 = vmul.f32 %v4504, %v4504
    %v4507 = vmul.f32 %v4505, %v4505
    %v4508 = vsel %vm117, %v4506, 0.0
    %4509 = vadd.xlane.f32.xlu0 %v4508
    %v4510 = vpop.xlane.xlu0 %4509
    %v4511 = vsel %vm117, %v4507, 0.0
    %4512 = vadd.xlane.f32.xlu0 %v4511
    %v4513 = vpop.xlane.xlu0 %4512
    %v4514 = vmul.f32 %v4510, %v2695
    %v4515 = vmul.f32 %v4513, %v2695
    %v4516 = vadd.f32 %v4514, 1e-05
    %v4517 = vadd.f32 %v4515, 1e-05
    %v4518 = vrsqrt.pop %v4516
    %v4519 = vrsqrt.pop %v4517
    %v4520 = vmul.f32 %v4504, %v4518
    %v4521 = vmul.f32 %v4505, %v4519
    %v4523 = vlaneseq
    %v4524 = vshrl.u32 %v4523, 7
    %v4525 = vsub.s32 0, %v4524
    %v4526 = vrot.slane %v4494, %v4525
    %v4528 = vmul.f32 %v4520, %v4526
    %v4529 = vmul.f32 %v4521, %v4526
    %v4531 = vlaneseq
    %v4532 = vshrl.u32 %v4531, 7
    %v4533 = vsub.s32 0, %v4532
    %v4534 = vrot.slane %v4495, %v4533
    %v4536 = vadd.f32 %v4528, %v4534
    %v4537 = vadd.f32 %v4529, %v4534
    %v4538 = vld [vmem:[%s15] sm:$0xff]
    %v4539 = vld [vmem:[%s15 + $0x8] sm:$0xff]
    %v4540 = vld [vmem:[%s15 + $0x10] sm:$0xff]
    %v4541 = vld [vmem:[%s15 + $0x18] sm:$0xff]
    %v4542 = vld [vmem:[%s16] sm:$0x1]
    %v4544 = vlaneseq
    %v4545 = vshrl.u32 %v4544, 7
    %v4546 = vsub.s32 0, %v4545
    %v4547 = vrot.slane %v4542, %v4546
    %v4550 = vsel %vm117, %v4536, 0
    %v4553 = vsel %vm117, %v4537, 0
    %4555 = vmatprep.subr.mxu0 0.0
    %4556 = vmatpush1.msra.mxu0 %v4538
    %4557 = vmatprep.subr.mxu0 0.0
    %4558 = vmatpush1.msra.mxu0 %v4539
    %4559 = vmatprep.subr.mxu0 0.0
    %4560 = vmatpush1.msra.mxu0 %v4540
    %4561 = vmatprep.subr.mxu0 0.0
    %4562 = vmatpush1.msra.mxu0 %v4541
    %4563 = vmatprep.subr.mxu0 0.0
    %4564 = vmatpush1.msra.mxu0 0.0
    %4565 = vmatprep.subr.mxu0 0.0
    %4566 = vmatpush1.msra.mxu0 0.0
    %4567 = vmatprep.subr.mxu0 0.0
    %4568 = vmatpush1.msra.mxu0 0.0
    %4569 = vmatprep.subr.mxu0 0.0
    %4570 = vmatpush1.msra.mxu0 0.0
    %4571 = vmatprep.subr.mxu0 0.0
    %4572 = vmatpush1.msra.mxu0 0.0
    %4573 = vmatprep.subr.mxu0 0.0
    %4574 = vmatpush1.msra.mxu0 0.0
    %4575 = vmatprep.subr.mxu0 0.0
    %4576 = vmatpush1.msra.mxu0 0.0
    %4577 = vmatprep.subr.mxu0 0.0
    %4578 = vmatpush1.msra.mxu0 0.0
    %4579 = vmatprep.subr.mxu0 0.0
    %4580 = vmatpush1.msra.mxu0 0.0
    %4581 = vmatprep.subr.mxu0 0.0
    %4582 = vmatpush1.msra.mxu0 0.0
    %4583 = vmatprep.subr.mxu0 0.0
    %4584 = vmatpush1.msra.mxu0 0.0
    %4585 = vmatprep.subr.mxu0 0.0
    %4586 = vmatpush1.msra.mxu0 0.0
    %4587 = vmatprep.subr.mxu0 0.0
    %4588 = vmatpush1.msra.mxu0 0.0
    %4589 = vmatprep.subr.mxu0 0.0
    %4590 = vmatpush1.msra.mxu0 0.0
    %4591 = vmatprep.subr.mxu0 0.0
    %4592 = vmatpush1.msra.mxu0 0.0
    %4593 = vmatprep.subr.mxu0 0.0
    %4594 = vmatpush1.msra.mxu0 0.0
    %4595 = vmatprep.subr.mxu0 0.0
    %4596 = vmatpush1.msra.mxu0 0.0
    %4597 = vmatprep.subr.mxu0 0.0
    %4598 = vmatpush1.msra.mxu0 0.0
    %4599 = vmatprep.subr.mxu0 0.0
    %4600 = vmatpush1.msra.mxu0 0.0
    %4601 = vmatprep.subr.mxu0 0.0
    %4602 = vmatpush1.msra.mxu0 0.0
    %4603 = vmatprep.subr.mxu0 0.0
    %4604 = vmatpush1.msra.mxu0 0.0
    %4605 = vmatprep.subr.mxu0 0.0
    %4606 = vmatpush1.msra.mxu0 0.0
    %4607 = vmatprep.subr.mxu0 0.0
    %4608 = vmatpush1.msra.mxu0 0.0
    %4609 = vmatprep.subr.mxu0 0.0
    %4610 = vmatpush1.msra.mxu0 0.0
    %4611 = vmatprep.subr.mxu0 0.0
    %4612 = vmatpush1.msra.mxu0 0.0
    %4613 = vmatprep.subr.mxu0 0.0
    %4614 = vmatpush1.msra.mxu0 0.0
    %4615 = vmatprep.subr.mxu0 0.0
    %4616 = vmatpush1.msra.mxu0 0.0
    %4617 = vmatprep.subr.mxu0 0.0
    %4618 = vmatpush1.msra.mxu0 0.0
    %4619 = vmatprep.mubr.f32.mxu0 0.0
    %4620 = vmatmul.mubr.f32.gmra.mrb[0].mxu0 %v4550
    %v4621 = vpop.f32.mrb[0].mxu0
    %v4622 = vadd.f32 %v4547, %v4621
    %v4623 = vpop.f32.mrb[0].mxu0
    %4624 = vmatprep.mubr.f32.mxu0 0.0
    %4625 = vmatmul.mubr.f32.gmra.mrb[0].mxu0 %v4553
    %v4626 = vpop.f32.mrb[0].mxu0
    %v4627 = vadd.f32 %v4547, %v4626
    %v4628 = vpop.f32.mrb[0].mxu0
    %4629 = vdwg.mxu0
    %v4630 = vmax.f32 %v4622, 0.0
    %v4631 = vmax.f32 %v4627, 0.0
    %v4632 = vld [vmem:[%s17] sm:$0xff]
    %v4633 = vld [vmem:[%s17 + $0x8] sm:$0xff]
    %v4634 = vld [vmem:[%s17 + $0x10] sm:$0xff]
    %v4635 = vld [vmem:[%s17 + $0x18] sm:$0xff]
    %v4636 = vld [vmem:[%s17 + $0x20] sm:$0xff]
    %v4637 = vld [vmem:[%s17 + $0x28] sm:$0xff]
    %v4638 = vld [vmem:[%s17 + $0x30] sm:$0xff]
    %v4639 = vld [vmem:[%s17 + $0x38] sm:$0xff]
    %v4640 = vld [vmem:[%s17 + $0x40] sm:$0xff]
    %v4641 = vld [vmem:[%s17 + $0x48] sm:$0xff]
    %v4642 = vld [vmem:[%s17 + $0x50] sm:$0xff]
    %v4643 = vld [vmem:[%s17 + $0x58] sm:$0xff]
    %v4644 = vld [vmem:[%s17 + $0x60] sm:$0xff]
    %v4645 = vld [vmem:[%s17 + $0x68] sm:$0xff]
    %v4646 = vld [vmem:[%s17 + $0x70] sm:$0xff]
    %v4647 = vld [vmem:[%s17 + $0x78] sm:$0xff]
    %v4648 = vld [vmem:[%s18] sm:$0x1]
    %v4650 = vlaneseq
    %v4651 = vshrl.u32 %v4650, 7
    %v4652 = vsub.s32 0, %v4651
    %v4653 = vrot.slane %v4648, %v4652
    %4655 = vmatprep.subr.mxu0 0.0
    %4656 = vmatpush1.msra.mxu0 %v4632
    %4657 = vmatprep.subr.mxu0 0.0
    %4658 = vmatpush1.msra.mxu0 %v4633
    %4659 = vmatprep.subr.mxu0 0.0
    %4660 = vmatpush1.msra.mxu0 %v4634
    %4661 = vmatprep.subr.mxu0 0.0
    %4662 = vmatpush1.msra.mxu0 %v4635
    %4663 = vmatprep.subr.mxu0 0.0
    %4664 = vmatpush1.msra.mxu0 %v4636
    %4665 = vmatprep.subr.mxu0 0.0
    %4666 = vmatpush1.msra.mxu0 %v4637
    %4667 = vmatprep.subr.mxu0 0.0
    %4668 = vmatpush1.msra.mxu0 %v4638
    %4669 = vmatprep.subr.mxu0 0.0
    %4670 = vmatpush1.msra.mxu0 %v4639
    %4671 = vmatprep.subr.mxu0 0.0
    %4672 = vmatpush1.msra.mxu0 %v4640
    %4673 = vmatprep.subr.mxu0 0.0
    %4674 = vmatpush1.msra.mxu0 %v4641
    %4675 = vmatprep.subr.mxu0 0.0
    %4676 = vmatpush1.msra.mxu0 %v4642
    %4677 = vmatprep.subr.mxu0 0.0
    %4678 = vmatpush1.msra.mxu0 %v4643
    %4679 = vmatprep.subr.mxu0 0.0
    %4680 = vmatpush1.msra.mxu0 %v4644
    %4681 = vmatprep.subr.mxu0 0.0
    %4682 = vmatpush1.msra.mxu0 %v4645
    %4683 = vmatprep.subr.mxu0 0.0
    %4684 = vmatpush1.msra.mxu0 %v4646
    %4685 = vmatprep.subr.mxu0 0.0
    %4686 = vmatpush1.msra.mxu0 %v4647
    %4687 = vmatprep.subr.mxu0 0.0
    %4688 = vmatpush1.msra.mxu0 0.0
    %4689 = vmatprep.subr.mxu0 0.0
    %4690 = vmatpush1.msra.mxu0 0.0
    %4691 = vmatprep.subr.mxu0 0.0
    %4692 = vmatpush1.msra.mxu0 0.0
    %4693 = vmatprep.subr.mxu0 0.0
    %4694 = vmatpush1.msra.mxu0 0.0
    %4695 = vmatprep.subr.mxu0 0.0
    %4696 = vmatpush1.msra.mxu0 0.0
    %4697 = vmatprep.subr.mxu0 0.0
    %4698 = vmatpush1.msra.mxu0 0.0
    %4699 = vmatprep.subr.mxu0 0.0
    %4700 = vmatpush1.msra.mxu0 0.0
    %4701 = vmatprep.subr.mxu0 0.0
    %4702 = vmatpush1.msra.mxu0 0.0
    %4703 = vmatprep.subr.mxu0 0.0
    %4704 = vmatpush1.msra.mxu0 0.0
    %4705 = vmatprep.subr.mxu0 0.0
    %4706 = vmatpush1.msra.mxu0 0.0
    %4707 = vmatprep.subr.mxu0 0.0
    %4708 = vmatpush1.msra.mxu0 0.0
    %4709 = vmatprep.subr.mxu0 0.0
    %4710 = vmatpush1.msra.mxu0 0.0
    %4711 = vmatprep.subr.mxu0 0.0
    %4712 = vmatpush1.msra.mxu0 0.0
    %4713 = vmatprep.subr.mxu0 0.0
    %4714 = vmatpush1.msra.mxu0 0.0
    %4715 = vmatprep.subr.mxu0 0.0
    %4716 = vmatpush1.msra.mxu0 0.0
    %4717 = vmatprep.subr.mxu0 0.0
    %4718 = vmatpush1.msra.mxu0 0.0
    %4719 = vmatprep.mubr.f32.mxu0 0.0
    %4720 = vmatmul.mubr.f32.gmra.mrb[0].mxu0 %v4630
    %v4721 = vpop.f32.mrb[0].mxu0
    %v4722 = vadd.f32 %v4653, %v4721
    %v4723 = vpop.f32.mrb[0].mxu0
    %4724 = vmatprep.mubr.f32.mxu0 0.0
    %4725 = vmatmul.mubr.f32.gmra.mrb[0].mxu0 %v4631
    %v4726 = vpop.f32.mrb[0].mxu0
    %v4727 = vadd.f32 %v4653, %v4726
    %v4728 = vpop.f32.mrb[0].mxu0
    %4729 = vdwg.mxu0
    %v4730 = vadd.f32 %v4536, %v4722
    %v4731 = vadd.f32 %v4537, %v4727
    %4732 = vst.msk [vmem:[#allocation9] sm:$0xff] %vm117, %v4730
    %4733 = vst.msk [vmem:[#allocation9 + $0x8] sm:$0xff] %vm117, %v4731
    // Predicated region
    $region90: #{tpu_custom_call.1} parent=1 // pred_check
      _
    $region91: #{tpu_custom_call.1} parent=1 // pred_check_branch
      %4735 = sbr.rel (0) target = $region93
    $region92: #{tpu_custom_call.1} parent=1 // pred_region
      %s4737 = ssub.s32 256, 256
      %4738 = vsyncadd [#allocation5], %s4737
      %s4739 = sshll.u32 [#allocation9], 4
      %s4740 = int_to_ptr.vmem [resolvable:$true] %s4739
      %4745 = dma.vmem_to_hbm [thread:$0]  %s4740, 256, %s19, [#allocation5], 128, 128, 8
    $region93: #{tpu_custom_call.1} parent=1 // pred_fallthru
      _
    // Predicated region
    $region94: #{tpu_custom_call.1} parent=1 // pred_check
      _
    $region95: #{tpu_custom_call.1} parent=1 // pred_check_branch
      %4747 = sbr.rel (0) target = $region97
    $region96: #{tpu_custom_call.1} parent=1 // pred_region
      %4748 = dma.done [#allocation5], 256
    $region97: #{tpu_custom_call.1} parent=1 // pred_fallthru
      _
    %4749 = vsyncpa [#allocation4], 1
    %4750 = vsyncpa [#allocation7], 1
    %4751 = vsyncpa [#allocation5], 1

</llo_original>
